<compile_context>
chip_gen: v7x
topology: tpu7x:2x2x1
jax: 0.10.0
libtpu: 0.0.40
codegen_flags: <defaults>
</compile_context>

<pallas_src>
import math

import jax
import jax.numpy as jnp
import numpy as np
from jax.experimental import pallas as pl
from jax.experimental.pallas import tpu as pltpu


# ----------------------------------------------------------------- hw query

def _vmem_capacity_bytes():
    try:
        return int(pltpu.get_tpu_info().vmem_capacity_bytes)
    except Exception:
        return 64 << 20  # conservative (v7x-sized) fallback


# ----------------------------------------------------------------- in-kernel helpers
# These operate on loaded VALUES only (never strided ref indexing).

def _pool_value(x, rh, rw):
    """Non-overlapping max-pool of an (h, w, c) value by window (rh, rw).

    H is reduced first (pure per-vreg VPU max over a leading-dim split), then W
    (cross-sublane) on the already rh-x-smaller value."""
    h, w, c = x.shape
    if rh > 1:
        x = x.reshape(h // rh, rh, w, c).max(axis=1)
        h = h // rh
    if rw > 1:
        x = x.reshape(h, w // rw, rw, c).max(axis=2)
    return x


def _upsample_value(x, sh, sw):
    """Nearest-neighbour upsample of an (h, w, c) value to (h*sh, w*sw, c)."""
    h, w, c = x.shape
    if sw > 1:
        x = jnp.broadcast_to(x[:, :, None, :], (h, w, sw, c)).reshape(h, w * sw, c)
        w = w * sw
    if sh > 1:
        x = jnp.broadcast_to(x[:, None, :, :], (h, sh, w, c)).reshape(h * sh, w, c)
    return x


# ----------------------------------------------------------------- fused kernel

def _make_fused_kernel(level_cfg, refine_level, n_avg):
    """One kernel computing every BFP output for one (batch, refine-row) block.

    level_cfg[i] = (kind, rh, rw):
      kind == "fine"   : feats[i] is finer;  (rh, rw) = pooling ratio to refine size
      kind == "refine" : the refine level itself
      kind == "coarse" : feats[i] is coarser;(rh, rw) = upsample ratio to refine size
    The refine level is NOT part of the average (matches the reference module)."""
    L = len(level_cfg)
    inv = 1.0 / float(n_avg)

    def kernel(*refs):
        in_refs = refs[:L]
        out_refs = refs[L:]

        # refine = (sum of pooled finer + upsampled coarser levels) / (L - 1)
        acc = None
        for i, (kind, rh, rw) in enumerate(level_cfg):
            if kind == "refine":
                continue
            v = in_refs[i][...].astype(jnp.float32)
            v = _pool_value(v, rh, rw) if kind == "fine" else _upsample_value(v, rh, rw)
            acc = v if acc is None else acc + v
        refine = acc * inv

        # out[i] = feats[i] + resize(refine); one dense store per level.
        for i, (kind, rh, rw) in enumerate(level_cfg):
            if kind == "refine":
                res = refine
            elif kind == "fine":
                res = _upsample_value(refine, rh, rw)
            else:
                res = _pool_value(refine, rh, rw)
            out = in_refs[i][...].astype(jnp.float32) + res
            out_refs[i][...] = out.astype(out_refs[i].dtype)

    return kernel


# ----------------------------------------------------------------- blocking helpers

def _pick_h_block(total_rows, row_multiple, bytes_per_row, n_batch, budget):
    """Largest divisor of total_rows that is a multiple of row_multiple whose
    double-buffered footprint (2 * rows * bytes_per_row) fits the VMEM budget.
    When the batch axis alone cannot give >= 2 parallel grid blocks (v7x has two
    TensorCores), prefer at least 2 blocks along H."""
    divisors = [d for d in range(1, total_rows + 1) if total_rows % d == 0]
    valid = [d for d in divisors if d % row_multiple == 0]
    if not valid:
        return total_rows
    if n_batch < 2:
        capped = [d for d in valid if d <= total_rows // 2]
        if capped:
            valid = capped
    fitting = [d for d in valid if 2.0 * d * bytes_per_row <= budget]
    return max(fitting) if fitting else min(valid)


def _compiler_params(est_block_bytes):
    cap = _vmem_capacity_bytes()
    kwargs = dict(dimension_semantics=("parallel", "parallel"))
    if est_block_bytes > (10 << 20):
        # Generation-aware cap: never request more than 3/4 of physical VMEM
        # (v7x only has 64 MiB per TensorCore) and never more than 64 MiB total.
        limit_cap = min((cap * 3) // 4, 64 << 20)
        kwargs["vmem_limit_bytes"] = int(min(max(2.2 * est_block_bytes, 32 << 20),
                                             limit_cap))
    return pltpu.CompilerParams(**kwargs)


# ----------------------------------------------------------------- fused pallas_call

def _bfp_fused_nhwc(feats, refine_level):
    """All L BFP outputs from the L NHWC feature maps in ONE pallas_call.

    `refine` is never written to HBM; every feats[i] is read exactly once and
    every out[i] is written exactly once (minimum possible HBM traffic)."""
    L = len(feats)
    N, Hu, Wu, C = feats[refine_level].shape
    isz = jnp.dtype(feats[refine_level].dtype).itemsize

    level_cfg = []
    req = 1                    # RB must be a multiple of every coarse H ratio
    per_row = Wu * C * 4.0     # f32 refine accumulator per refine row
    for i, f in enumerate(feats):
        _, H, W, _ = f.shape
        if i < refine_level:
            rh, rw = H // Hu, W // Wu
            level_cfg.append(("fine", rh, rw))
            per_row += 2.0 * rh * W * C * isz          # in + out
        elif i > refine_level:
            sh, sw = Hu // H, Wu // W
            level_cfg.append(("coarse", sh, sw))
            req = req * sh // math.gcd(req, sh)
            per_row += 2.0 * W * C * isz / sh
        else:
            level_cfg.append(("refine", 1, 1))
            per_row += 2.0 * Wu * C * isz

    budget = _vmem_capacity_bytes() // 4
    RB = _pick_h_block(Hu, req, per_row, n_batch=N, budget=budget)

    idx = lambda n, g: (n, g, 0, 0)
    in_specs, out_specs, out_shapes = [], [], []
    for i, f in enumerate(feats):
        _, H, W, _ = f.shape
        kind, rh, rw = level_cfg[i]
        if kind == "fine":
            hb = RB * rh
        elif kind == "coarse":
            hb = RB // rh
        else:
            hb = RB
        spec = pl.BlockSpec((None, hb, W, C), idx)     # leading N dim squeezed
        in_specs.append(spec)
        out_specs.append(spec)
        out_shapes.append(jax.ShapeDtypeStruct(f.shape, f.dtype))

    kernel = _make_fused_kernel(tuple(level_cfg), refine_level, L - 1)
    outs = pl.pallas_call(
        kernel,
        out_shape=tuple(out_shapes),
        grid=(N, Hu // RB),
        in_specs=in_specs,
        out_specs=tuple(out_specs),
        compiler_params=_compiler_params(2.0 * RB * per_row),
    )(*feats)
    return list(outs)


# ----------------------------------------------------------------- public module

class BFPPallas:
    """Pallas/TPU implementation of BFP.forward (refine_type=None => no parameters)."""

    def __init__(self, in_channels=256, num_levels=5, refine_level=2,
                 refine_type=None, channels_last=False):
        assert refine_type in [None]
        assert 0 <= refine_level < num_levels
        self.in_channels = in_channels
        self.num_levels = num_levels
        self.refine_level = refine_level
        self.refine_type = None
        # channels_last=True lets an NHWC-native surrounding graph skip the
        # boundary layout copies entirely (the largest HBM-traffic lever).
        self.channels_last = channels_last

    def __call__(self, feats):
        assert len(feats) == self.num_levels
        if self.channels_last:
            nhwc = list(feats)
        else:
            # TODO(synk): NCHW-native kernel variant (W on the lane axis) not
            # implemented; PyTorch-layout inputs pay two boundary transposes.
            # Keep the surrounding graph NHWC (channels_last=True) to avoid them.
            nhwc = [jnp.transpose(f, (0, 2, 3, 1)) for f in feats]   # NCHW -> NHWC

        Hu, Wu = nhwc[self.refine_level].shape[1:3]
        for i, f in enumerate(nhwc):
            H, W = f.shape[1:3]
            if i < self.refine_level:
                assert H % Hu == 0 and W % Wu == 0, "integer pooling ratio required"
            elif i > self.refine_level:
                assert Hu % H == 0 and Wu % W == 0, "integer upsample ratio required"
        # TODO(synk): non-integer-ratio adaptive_max_pool2d / nearest-resize windows
        # are not implemented (standard FPN pyramids always have integer ratios).

        outs = _bfp_fused_nhwc(nhwc, self.refine_level)
        if self.channels_last:
            return outs
        return [jnp.transpose(o, (0, 3, 1, 2)) for o in outs]        # NHWC -> NCHW


# ----------------------------------------------------------------- pure-JAX reference

def _bfp_reference(feats_nchw, refine_level):
    Hu, Wu = feats_nchw[refine_level].shape[-2:]
    uniform = []
    for i, f in enumerate(feats_nchw):
        N, C, H, W = f.shape
        if i < refine_level:
            rh, rw = H // Hu, W // Wu
            uniform.append(f.reshape(N, C, Hu, rh, Wu, rw).max(axis=(3, 5)))
        elif i > refine_level:
            sh, sw = Hu // H, Wu // W
            uniform.append(jnp.repeat(jnp.repeat(f, sh, axis=2), sw, axis=3))
    refine = sum(uniform) / len(uniform)
    outs = []
    for i, f in enumerate(feats_nchw):
        N, C, H, W = f.shape
        if i < refine_level:
            sh, sw = H // Hu, W // Wu
            res = jnp.repeat(jnp.repeat(refine, sh, axis=2), sw, axis=3)
        elif i > refine_level:
            rh, rw = Hu // H, Wu // W
            res = refine.reshape(N, C, H, rh, W, rw).max(axis=(3, 5))
        else:
            res = refine
        outs.append(f + res)
    return outs


# ----------------------------------------------------------------- main

if __name__ == "__main__":
    key = jax.random.PRNGKey(0)
    N, C = 2, 128                                    # lane-dense channels
    num_levels, refine_level = 5, 2
    sizes = [32, 16, 8, 4, 2]                        # typical FPN pyramid

    keys = jax.random.split(key, num_levels)
    feats = [jax.random.normal(k, (N, C, s, s), dtype=jnp.float32)
             for k, s in zip(keys, sizes)]

    bfp = BFPPallas(in_channels=C, num_levels=num_levels, refine_level=refine_level)
    outs = jax.block_until_ready(bfp(feats))

    refs = _bfp_reference(feats, refine_level)
    for o, r in zip(outs, refs):
        assert o.shape == r.shape and o.dtype == r.dtype
        np.testing.assert_allclose(np.asarray(o), np.asarray(r), rtol=1e-5, atol=1e-5)

    print("KERNEL_OK")
</pallas_src>

<mosaic_0001>
module attributes {stable_mosaic.version = 11 : i64} {
  func.func @kernel(%arg0: i32, %arg1: i32, %arg2: memref<1x32x32x128xf32, #tpu.memory_space<vmem>>, %arg3: memref<1x16x16x128xf32, #tpu.memory_space<vmem>>, %arg4: memref<1x8x8x128xf32, #tpu.memory_space<vmem>>, %arg5: memref<1x4x4x128xf32, #tpu.memory_space<vmem>>, %arg6: memref<1x2x2x128xf32, #tpu.memory_space<vmem>>, %arg7: memref<1x32x32x128xf32, #tpu.memory_space<vmem>>, %arg8: memref<1x16x16x128xf32, #tpu.memory_space<vmem>>, %arg9: memref<1x8x8x128xf32, #tpu.memory_space<vmem>>, %arg10: memref<1x4x4x128xf32, #tpu.memory_space<vmem>>, %arg11: memref<1x2x2x128xf32, #tpu.memory_space<vmem>>) attributes {dimension_semantics = [#tpu.dimension_semantics<parallel>, #tpu.dimension_semantics<parallel>], iteration_bounds = array<i64: 2, 1>, scalar_prefetch = 0 : i64, scratch_operands = 0 : i64, tpu.core_type = #tpu.core_type<tc>, window_params = [{transform_indices = @transform_0, window_bounds = array<i64: 1, 32, 32, 128>}, {transform_indices = @transform_1, window_bounds = array<i64: 1, 16, 16, 128>}, {transform_indices = @transform_2, window_bounds = array<i64: 1, 8, 8, 128>}, {transform_indices = @transform_3, window_bounds = array<i64: 1, 4, 4, 128>}, {transform_indices = @transform_4, window_bounds = array<i64: 1, 2, 2, 128>}, {transform_indices = @transform_5, window_bounds = array<i64: 1, 32, 32, 128>}, {transform_indices = @transform_6, window_bounds = array<i64: 1, 16, 16, 128>}, {transform_indices = @transform_7, window_bounds = array<i64: 1, 8, 8, 128>}, {transform_indices = @transform_8, window_bounds = array<i64: 1, 4, 4, 128>}, {transform_indices = @transform_9, window_bounds = array<i64: 1, 2, 2, 128>}]} {
    %c0 = arith.constant 0 : index
    %c0_0 = arith.constant 0 : index
    %c0_1 = arith.constant 0 : index
    %c0_2 = arith.constant 0 : index
    %0 = vector.load %arg2[%c0, %c0_0, %c0_1, %c0_2] : memref<1x32x32x128xf32, #tpu.memory_space<vmem>>, vector<1x32x32x128xf32>
    %1 = vector.shape_cast %0 : vector<1x32x32x128xf32> to vector<32x32x128xf32>
    %2 = vector.shape_cast %1 : vector<32x32x128xf32> to vector<8x4x32x128xf32>
    %cst = arith.constant dense<0xFF800000> : vector<8x32x128xf32>
    %3 = vector.multi_reduction <maximumf>, %2, %cst [1] : vector<8x4x32x128xf32> to vector<8x32x128xf32>
    %4 = vector.shape_cast %3 : vector<8x32x128xf32> to vector<8x8x4x128xf32>
    %cst_3 = arith.constant dense<0xFF800000> : vector<8x8x128xf32>
    %5 = vector.multi_reduction <maximumf>, %4, %cst_3 [2] : vector<8x8x4x128xf32> to vector<8x8x128xf32>
    %c0_4 = arith.constant 0 : index
    %c0_5 = arith.constant 0 : index
    %c0_6 = arith.constant 0 : index
    %c0_7 = arith.constant 0 : index
    %6 = vector.load %arg3[%c0_4, %c0_5, %c0_6, %c0_7] : memref<1x16x16x128xf32, #tpu.memory_space<vmem>>, vector<1x16x16x128xf32>
    %7 = vector.shape_cast %6 : vector<1x16x16x128xf32> to vector<16x16x128xf32>
    %8 = vector.shape_cast %7 : vector<16x16x128xf32> to vector<8x2x16x128xf32>
    %cst_8 = arith.constant dense<0xFF800000> : vector<8x16x128xf32>
    %9 = vector.multi_reduction <maximumf>, %8, %cst_8 [1] : vector<8x2x16x128xf32> to vector<8x16x128xf32>
    %10 = vector.shape_cast %9 : vector<8x16x128xf32> to vector<8x8x2x128xf32>
    %cst_9 = arith.constant dense<0xFF800000> : vector<8x8x128xf32>
    %11 = vector.multi_reduction <maximumf>, %10, %cst_9 [2] : vector<8x8x2x128xf32> to vector<8x8x128xf32>
    %12 = arith.addf %5, %11 : vector<8x8x128xf32>
    %c0_10 = arith.constant 0 : index
    %c0_11 = arith.constant 0 : index
    %c0_12 = arith.constant 0 : index
    %c0_13 = arith.constant 0 : index
    %13 = vector.load %arg5[%c0_10, %c0_11, %c0_12, %c0_13] : memref<1x4x4x128xf32, #tpu.memory_space<vmem>>, vector<1x4x4x128xf32>
    %14 = vector.shape_cast %13 : vector<1x4x4x128xf32> to vector<4x4x128xf32>
    %15 = vector.shape_cast %14 : vector<4x4x128xf32> to vector<4x4x1x128xf32>
    %16 = vector.shape_cast %15 : vector<4x4x1x128xf32> to vector<4x4x1x128xf32>
    %17 = vector.broadcast %16 : vector<4x4x1x128xf32> to vector<4x4x2x128xf32>
    %18 = vector.shape_cast %17 : vector<4x4x2x128xf32> to vector<4x8x128xf32>
    %19 = vector.shape_cast %18 : vector<4x8x128xf32> to vector<4x1x8x128xf32>
    %20 = vector.shape_cast %19 : vector<4x1x8x128xf32> to vector<4x1x8x128xf32>
    %21 = vector.broadcast %20 : vector<4x1x8x128xf32> to vector<4x2x8x128xf32>
    %22 = vector.shape_cast %21 : vector<4x2x8x128xf32> to vector<8x8x128xf32>
    %23 = arith.addf %12, %22 : vector<8x8x128xf32>
    %c0_14 = arith.constant 0 : index
    %c0_15 = arith.constant 0 : index
    %c0_16 = arith.constant 0 : index
    %c0_17 = arith.constant 0 : index
    %24 = vector.load %arg6[%c0_14, %c0_15, %c0_16, %c0_17] : memref<1x2x2x128xf32, #tpu.memory_space<vmem>>, vector<1x2x2x128xf32>
    %25 = vector.shape_cast %24 : vector<1x2x2x128xf32> to vector<2x2x128xf32>
    %26 = vector.shape_cast %25 : vector<2x2x128xf32> to vector<2x2x1x128xf32>
    %27 = vector.shape_cast %26 : vector<2x2x1x128xf32> to vector<2x2x1x128xf32>
    %28 = vector.broadcast %27 : vector<2x2x1x128xf32> to vector<2x2x4x128xf32>
    %29 = vector.shape_cast %28 : vector<2x2x4x128xf32> to vector<2x8x128xf32>
    %30 = vector.shape_cast %29 : vector<2x8x128xf32> to vector<2x1x8x128xf32>
    %31 = vector.shape_cast %30 : vector<2x1x8x128xf32> to vector<2x1x8x128xf32>
    %32 = vector.broadcast %31 : vector<2x1x8x128xf32> to vector<2x4x8x128xf32>
    %33 = vector.shape_cast %32 : vector<2x4x8x128xf32> to vector<8x8x128xf32>
    %34 = arith.addf %23, %33 : vector<8x8x128xf32>
    %cst_18 = arith.constant 2.500000e-01 : f32
    %35 = vector.broadcast %cst_18 : f32 to vector<8x8x128xf32>
    %36 = arith.mulf %34, %35 : vector<8x8x128xf32>
    %37 = vector.shape_cast %36 : vector<8x8x128xf32> to vector<8x8x1x128xf32>
    %38 = vector.shape_cast %37 : vector<8x8x1x128xf32> to vector<8x8x1x128xf32>
    %39 = vector.broadcast %38 : vector<8x8x1x128xf32> to vector<8x8x4x128xf32>
    %40 = vector.shape_cast %39 : vector<8x8x4x128xf32> to vector<8x32x128xf32>
    %41 = vector.shape_cast %40 : vector<8x32x128xf32> to vector<8x1x32x128xf32>
    %42 = vector.shape_cast %41 : vector<8x1x32x128xf32> to vector<8x1x32x128xf32>
    %43 = vector.broadcast %42 : vector<8x1x32x128xf32> to vector<8x4x32x128xf32>
    %44 = vector.shape_cast %43 : vector<8x4x32x128xf32> to vector<32x32x128xf32>
    %c0_19 = arith.constant 0 : index
    %c0_20 = arith.constant 0 : index
    %c0_21 = arith.constant 0 : index
    %c0_22 = arith.constant 0 : index
    %45 = vector.load %arg2[%c0_19, %c0_20, %c0_21, %c0_22] : memref<1x32x32x128xf32, #tpu.memory_space<vmem>>, vector<1x32x32x128xf32>
    %46 = vector.shape_cast %45 : vector<1x32x32x128xf32> to vector<32x32x128xf32>
    %47 = arith.addf %46, %44 : vector<32x32x128xf32>
    %c0_23 = arith.constant 0 : index
    %c0_24 = arith.constant 0 : index
    %c0_25 = arith.constant 0 : index
    %c0_26 = arith.constant 0 : index
    %48 = vector.load %arg7[%c0_23, %c0_24, %c0_25, %c0_26] : memref<1x32x32x128xf32, #tpu.memory_space<vmem>>, vector<1x32x32x128xf32>
    %49 = vector.shape_cast %48 : vector<1x32x32x128xf32> to vector<32x32x128xf32>
    %50 = vector.shape_cast %47 : vector<32x32x128xf32> to vector<1x32x32x128xf32>
    tpu.vector_store %arg7[%c0_23, %c0_24, %c0_25, %c0_26], %50 {strides = array<i32>} : memref<1x32x32x128xf32, #tpu.memory_space<vmem>>, vector<1x32x32x128xf32>,
    %51 = vector.shape_cast %36 : vector<8x8x128xf32> to vector<8x8x1x128xf32>
    %52 = vector.shape_cast %51 : vector<8x8x1x128xf32> to vector<8x8x1x128xf32>
    %53 = vector.broadcast %52 : vector<8x8x1x128xf32> to vector<8x8x2x128xf32>
    %54 = vector.shape_cast %53 : vector<8x8x2x128xf32> to vector<8x16x128xf32>
    %55 = vector.shape_cast %54 : vector<8x16x128xf32> to vector<8x1x16x128xf32>
    %56 = vector.shape_cast %55 : vector<8x1x16x128xf32> to vector<8x1x16x128xf32>
    %57 = vector.broadcast %56 : vector<8x1x16x128xf32> to vector<8x2x16x128xf32>
    %58 = vector.shape_cast %57 : vector<8x2x16x128xf32> to vector<16x16x128xf32>
    %c0_27 = arith.constant 0 : index
    %c0_28 = arith.constant 0 : index
    %c0_29 = arith.constant 0 : index
    %c0_30 = arith.constant 0 : index
    %59 = vector.load %arg3[%c0_27, %c0_28, %c0_29, %c0_30] : memref<1x16x16x128xf32, #tpu.memory_space<vmem>>, vector<1x16x16x128xf32>
    %60 = vector.shape_cast %59 : vector<1x16x16x128xf32> to vector<16x16x128xf32>
    %61 = arith.addf %60, %58 : vector<16x16x128xf32>
    %c0_31 = arith.constant 0 : index
    %c0_32 = arith.constant 0 : index
    %c0_33 = arith.constant 0 : index
    %c0_34 = arith.constant 0 : index
    %62 = vector.load %arg8[%c0_31, %c0_32, %c0_33, %c0_34] : memref<1x16x16x128xf32, #tpu.memory_space<vmem>>, vector<1x16x16x128xf32>
    %63 = vector.shape_cast %62 : vector<1x16x16x128xf32> to vector<16x16x128xf32>
    %64 = vector.shape_cast %61 : vector<16x16x128xf32> to vector<1x16x16x128xf32>
    tpu.vector_store %arg8[%c0_31, %c0_32, %c0_33, %c0_34], %64 {strides = array<i32>} : memref<1x16x16x128xf32, #tpu.memory_space<vmem>>, vector<1x16x16x128xf32>,
    %c0_35 = arith.constant 0 : index
    %c0_36 = arith.constant 0 : index
    %c0_37 = arith.constant 0 : index
    %c0_38 = arith.constant 0 : index
    %65 = vector.load %arg4[%c0_35, %c0_36, %c0_37, %c0_38] : memref<1x8x8x128xf32, #tpu.memory_space<vmem>>, vector<1x8x8x128xf32>
    %66 = vector.shape_cast %65 : vector<1x8x8x128xf32> to vector<8x8x128xf32>
    %67 = arith.addf %66, %36 : vector<8x8x128xf32>
    %c0_39 = arith.constant 0 : index
    %c0_40 = arith.constant 0 : index
    %c0_41 = arith.constant 0 : index
    %c0_42 = arith.constant 0 : index
    %68 = vector.load %arg9[%c0_39, %c0_40, %c0_41, %c0_42] : memref<1x8x8x128xf32, #tpu.memory_space<vmem>>, vector<1x8x8x128xf32>
    %69 = vector.shape_cast %68 : vector<1x8x8x128xf32> to vector<8x8x128xf32>
    %70 = vector.shape_cast %67 : vector<8x8x128xf32> to vector<1x8x8x128xf32>
    tpu.vector_store %arg9[%c0_39, %c0_40, %c0_41, %c0_42], %70 {strides = array<i32>} : memref<1x8x8x128xf32, #tpu.memory_space<vmem>>, vector<1x8x8x128xf32>,
    %71 = vector.shape_cast %36 : vector<8x8x128xf32> to vector<4x2x8x128xf32>
    %cst_43 = arith.constant dense<0xFF800000> : vector<4x8x128xf32>
    %72 = vector.multi_reduction <maximumf>, %71, %cst_43 [1] : vector<4x2x8x128xf32> to vector<4x8x128xf32>
    %73 = vector.shape_cast %72 : vector<4x8x128xf32> to vector<4x4x2x128xf32>
    %cst_44 = arith.constant dense<0xFF800000> : vector<4x4x128xf32>
    %74 = vector.multi_reduction <maximumf>, %73, %cst_44 [2] : vector<4x4x2x128xf32> to vector<4x4x128xf32>
    %c0_45 = arith.constant 0 : index
    %c0_46 = arith.constant 0 : index
    %c0_47 = arith.constant 0 : index
    %c0_48 = arith.constant 0 : index
    %75 = vector.load %arg5[%c0_45, %c0_46, %c0_47, %c0_48] : memref<1x4x4x128xf32, #tpu.memory_space<vmem>>, vector<1x4x4x128xf32>
    %76 = vector.shape_cast %75 : vector<1x4x4x128xf32> to vector<4x4x128xf32>
    %77 = arith.addf %76, %74 : vector<4x4x128xf32>
    %c0_49 = arith.constant 0 : index
    %c0_50 = arith.constant 0 : index
    %c0_51 = arith.constant 0 : index
    %c0_52 = arith.constant 0 : index
    %78 = vector.load %arg10[%c0_49, %c0_50, %c0_51, %c0_52] : memref<1x4x4x128xf32, #tpu.memory_space<vmem>>, vector<1x4x4x128xf32>
    %79 = vector.shape_cast %78 : vector<1x4x4x128xf32> to vector<4x4x128xf32>
    %80 = vector.shape_cast %77 : vector<4x4x128xf32> to vector<1x4x4x128xf32>
    tpu.vector_store %arg10[%c0_49, %c0_50, %c0_51, %c0_52], %80 {strides = array<i32>} : memref<1x4x4x128xf32, #tpu.memory_space<vmem>>, vector<1x4x4x128xf32>,
    %81 = vector.shape_cast %36 : vector<8x8x128xf32> to vector<2x4x8x128xf32>
    %cst_53 = arith.constant dense<0xFF800000> : vector<2x8x128xf32>
    %82 = vector.multi_reduction <maximumf>, %81, %cst_53 [1] : vector<2x4x8x128xf32> to vector<2x8x128xf32>
    %83 = vector.shape_cast %82 : vector<2x8x128xf32> to vector<2x2x4x128xf32>
    %cst_54 = arith.constant dense<0xFF800000> : vector<2x2x128xf32>
    %84 = vector.multi_reduction <maximumf>, %83, %cst_54 [2] : vector<2x2x4x128xf32> to vector<2x2x128xf32>
    %c0_55 = arith.constant 0 : index
    %c0_56 = arith.constant 0 : index
    %c0_57 = arith.constant 0 : index
    %c0_58 = arith.constant 0 : index
    %85 = vector.load %arg6[%c0_55, %c0_56, %c0_57, %c0_58] : memref<1x2x2x128xf32, #tpu.memory_space<vmem>>, vector<1x2x2x128xf32>
    %86 = vector.shape_cast %85 : vector<1x2x2x128xf32> to vector<2x2x128xf32>
    %87 = arith.addf %86, %84 : vector<2x2x128xf32>
    %c0_59 = arith.constant 0 : index
    %c0_60 = arith.constant 0 : index
    %c0_61 = arith.constant 0 : index
    %c0_62 = arith.constant 0 : index
    %88 = vector.load %arg11[%c0_59, %c0_60, %c0_61, %c0_62] : memref<1x2x2x128xf32, #tpu.memory_space<vmem>>, vector<1x2x2x128xf32>
    %89 = vector.shape_cast %88 : vector<1x2x2x128xf32> to vector<2x2x128xf32>
    %90 = vector.shape_cast %87 : vector<2x2x128xf32> to vector<1x2x2x128xf32>
    tpu.vector_store %arg11[%c0_59, %c0_60, %c0_61, %c0_62], %90 {strides = array<i32>} : memref<1x2x2x128xf32, #tpu.memory_space<vmem>>, vector<1x2x2x128xf32>,
    return
  }
  func.func @transform_0(%arg0: i32, %arg1: i32) -> (i32, i32, i32, i32) {
    %c0_i32 = arith.constant 0 : i32
    %c0_i32_0 = arith.constant 0 : i32
    %c0_i32_1 = arith.constant 0 : i32
    return %arg0, %arg1, %c0_i32, %c0_i32_0 : i32, i32, i32, i32
  }
  func.func @transform_1(%arg0: i32, %arg1: i32) -> (i32, i32, i32, i32) {
    %c0_i32 = arith.constant 0 : i32
    %c0_i32_0 = arith.constant 0 : i32
    %c0_i32_1 = arith.constant 0 : i32
    return %arg0, %arg1, %c0_i32, %c0_i32_0 : i32, i32, i32, i32
  }
  func.func @transform_2(%arg0: i32, %arg1: i32) -> (i32, i32, i32, i32) {
    %c0_i32 = arith.constant 0 : i32
    %c0_i32_0 = arith.constant 0 : i32
    %c0_i32_1 = arith.constant 0 : i32
    return %arg0, %arg1, %c0_i32, %c0_i32_0 : i32, i32, i32, i32
  }
  func.func @transform_3(%arg0: i32, %arg1: i32) -> (i32, i32, i32, i32) {
    %c0_i32 = arith.constant 0 : i32
    %c0_i32_0 = arith.constant 0 : i32
    %c0_i32_1 = arith.constant 0 : i32
    return %arg0, %arg1, %c0_i32, %c0_i32_0 : i32, i32, i32, i32
  }
  func.func @transform_4(%arg0: i32, %arg1: i32) -> (i32, i32, i32, i32) {
    %c0_i32 = arith.constant 0 : i32
    %c0_i32_0 = arith.constant 0 : i32
    %c0_i32_1 = arith.constant 0 : i32
    return %arg0, %arg1, %c0_i32, %c0_i32_0 : i32, i32, i32, i32
  }
  func.func @transform_5(%arg0: i32, %arg1: i32) -> (i32, i32, i32, i32) {
    %c0_i32 = arith.constant 0 : i32
    %c0_i32_0 = arith.constant 0 : i32
    %c0_i32_1 = arith.constant 0 : i32
    return %arg0, %arg1, %c0_i32, %c0_i32_0 : i32, i32, i32, i32
  }
  func.func @transform_6(%arg0: i32, %arg1: i32) -> (i32, i32, i32, i32) {
    %c0_i32 = arith.constant 0 : i32
    %c0_i32_0 = arith.constant 0 : i32
    %c0_i32_1 = arith.constant 0 : i32
    return %arg0, %arg1, %c0_i32, %c0_i32_0 : i32, i32, i32, i32
  }
  func.func @transform_7(%arg0: i32, %arg1: i32) -> (i32, i32, i32, i32) {
    %c0_i32 = arith.constant 0 : i32
    %c0_i32_0 = arith.constant 0 : i32
    %c0_i32_1 = arith.constant 0 : i32
    return %arg0, %arg1, %c0_i32, %c0_i32_0 : i32, i32, i32, i32
  }
  func.func @transform_8(%arg0: i32, %arg1: i32) -> (i32, i32, i32, i32) {
    %c0_i32 = arith.constant 0 : i32
    %c0_i32_0 = arith.constant 0 : i32
    %c0_i32_1 = arith.constant 0 : i32
    return %arg0, %arg1, %c0_i32, %c0_i32_0 : i32, i32, i32, i32
  }
  func.func @transform_9(%arg0: i32, %arg1: i32) -> (i32, i32, i32, i32) {
    %c0_i32 = arith.constant 0 : i32
    %c0_i32_0 = arith.constant 0 : i32
    %c0_i32_1 = arith.constant 0 : i32
    return %arg0, %arg1, %c0_i32, %c0_i32_0 : i32, i32, i32, i32
  }
}

</mosaic_0001>

<llo_original>
// kernel: tpu_custom_call.1
$region0: #{tpu_custom_call.1}
  #allocation0 [shape = 'u32[]', space=smem, size = 0x4, offset = 0x4, fixed_abs, tag = 'smem constant byte address 0x4 - core index']
  #allocation1 [shape = 'u32[144,128]{1,0:T(1,128)}', space=vmem, size = 0x12000, scoped, tag = 'internal scratch']
  %s0 = inlined_call_operand.hbm [shape: f32[2,32,32,128], index: 0, kind: input, shape index: {}]
  %s1 = inlined_call_operand.hbm [shape: f32[2,16,16,128], index: 1, kind: input, shape index: {}]
  %s2 = inlined_call_operand.hbm [shape: f32[2,8,8,128], index: 2, kind: input, shape index: {}]
  %s3 = inlined_call_operand.hbm [shape: f32[2,4,4,128], index: 3, kind: input, shape index: {}]
  %s4 = inlined_call_operand.vmem [shape: f32[2,2,2,128], index: 4, kind: input, shape index: {}]
  %s5 = inlined_call_operand.hbm [shape: f32[2,32,32,128], index: 5, kind: output, shape index: {0}]
  %s6 = inlined_call_operand.hbm [shape: f32[2,16,16,128], index: 6, kind: output, shape index: {1}]
  %s7 = inlined_call_operand.hbm [shape: f32[2,8,8,128], index: 7, kind: output, shape index: {2}]
  %s8 = inlined_call_operand.hbm [shape: f32[2,4,4,128], index: 8, kind: output, shape index: {3}]
  %s9 = inlined_call_operand.hbm [shape: f32[2,2,2,128], index: 9, kind: output, shape index: {4}]
  %10 = xla_tuple %s5, %s6, %s7, %s8, %s9
  %s11 = sld [smem:[#allocation0]]
  $region101: #{tpu_custom_call.1} parent=0
    _
  %s13 = ssub.s32 1, %s11
  %s14 = scalar_select 0, %s13, %s11
  $region1: #{tpu_custom_call.1} parent=0
    #allocation2 [shape = 'u8[1048576]{0}', space=vmem, size = 0x100000, scoped, tag = 'input window, operand 0']
    #allocation3 [shape = 's32[2]{0}', space=sflag, size = 0x8, scoped, tag = 'scoped memory for tpu_custom_call.1']
    #allocation4 [shape = 's32[2]{0}', space=sflag, size = 0x8, scoped, tag = 'scoped memory for tpu_custom_call.1']
    #allocation5 [shape = 'u8[262144]{0}', space=vmem, size = 0x40000, scoped, tag = 'input window, operand 1']
    #allocation6 [shape = 's32[2]{0}', space=sflag, size = 0x8, scoped, tag = 'scoped memory for tpu_custom_call.1']
    #allocation7 [shape = 'u8[65536]{0}', space=vmem, size = 0x10000, scoped, tag = 'input window, operand 2']
    #allocation8 [shape = 'u8[16384]{0}', space=vmem, size = 0x4000, scoped, tag = 'input window, operand 3']
    #allocation9 [shape = 's32[2]{0}', space=sflag, size = 0x8, scoped, tag = 'scoped memory for tpu_custom_call.1']
    #allocation10 [shape = 'u8[1048576]{0}', space=vmem, size = 0x100000, scoped, tag = 'output window, operand 0']
    #allocation11 [shape = 'u8[262144]{0}', space=vmem, size = 0x40000, scoped, tag = 'output window, operand 1']
    #allocation12 [shape = 's32[2]{0}', space=sflag, size = 0x8, scoped, tag = 'scoped memory for tpu_custom_call.1']
    #allocation13 [shape = 'u8[65536]{0}', space=vmem, size = 0x10000, scoped, tag = 'output window, operand 2']
    #allocation14 [shape = 'u8[16384]{0}', space=vmem, size = 0x4000, scoped, tag = 'output window, operand 3']
    #allocation15 [shape = 's32[2]{0}', space=sflag, size = 0x8, scoped, tag = 'scoped memory for tpu_custom_call.1']
    #allocation16 [shape = 'u8[4096]{0}', space=vmem, size = 0x1000, scoped, tag = 'output window, operand 4']
    %15 = vsyncpa [#allocation3], 0
    %s16 = scalar_lea.sflag [#allocation3], 1
    %17 = vsyncpa %s16, 0
    %18 = vsyncpa [#allocation6], 0
    %s19 = scalar_lea.sflag [#allocation6], 1
    %20 = vsyncpa %s19, 0
    %21 = vsyncpa [#allocation9], 0
    %s22 = scalar_lea.sflag [#allocation9], 1
    %23 = vsyncpa %s22, 0
    %24 = vsyncpa [#allocation4], 0
    %s25 = scalar_lea.sflag [#allocation4], 1
    %26 = vsyncpa %s25, 0
    %27 = vsyncpa [#allocation12], 0
    %s28 = scalar_lea.sflag [#allocation12], 1
    %29 = vsyncpa %s28, 0
    %30 = vsyncpa [#allocation15], 0
    %s31 = scalar_lea.sflag [#allocation15], 1
    %32 = vsyncpa %s31, 0
    loop: start=0, step=1, limit=4
    $region2: #{tpu_custom_call.1} parent=1 // loop_pre_header
      _
    $region3: #{tpu_custom_call.1} parent=1 // loop_header
      %s34 = sphi 0, %s38
      %p35 = scmp.ge.s32.totalorder %s34, 4
      %s41 = sphi 0, %s53
      %s42 = sphi 0, %s49
      %s43 = sphi 0, %s41
      %s44 = sphi 0, %s42
      %s45 = sphi 0, %s43
      %s46 = sphi 0, %s44
      %s58 = sphi 0, %s60
      %s61 = sphi 0, %s58
      %s62 = sphi 0, %s61
      %s78 = sphi 0, %s62
      %s86 = sphi 0, %s88
      %s89 = sphi 0, %s86
      %s90 = sphi 0, %s89
      %s106 = sphi 0, %s90
      %s114 = sphi 0, %s116
      %s117 = sphi 0, %s114
      %s118 = sphi 0, %s117
      %s134 = sphi 0, %s118
      %s142 = sphi 0, %s144
      %s145 = sphi 0, %s142
      %s146 = sphi 0, %s145
      %s162 = sphi 0, %s146
      %s170 = sphi 0, %s172
      %s173 = sphi 0, %s170
      %s174 = sphi 0, %s173
      %s190 = sphi 0, %s174
      %s198 = sphi 0, %s200
      %s201 = sphi 0, %s198
      %s202 = sphi 0, %s201
      %s218 = sphi 0, %s202
      %s226 = sphi 0, %s228
      %s229 = sphi 0, %s226
      %s230 = sphi 0, %s229
      %s246 = sphi 0, %s230
      %s254 = sphi 0, %s256
      %s257 = sphi 0, %s254
      %s258 = sphi 0, %s257
      %s274 = sphi 0, %s258
      %s282 = sphi 0, %s284
      %s285 = sphi 0, %s282
      %s286 = sphi 0, %s285
      %s302 = sphi 0, %s286
      %s310 = sphi 0, %s312
      %s313 = sphi 0, %s310
      %s314 = sphi 0, %s313
      %s330 = sphi 0, %s314
    $region4: #{tpu_custom_call.1} parent=1 // loop_header_branch
      %37 = sbr.rel (%p35) target = $region8
    $region5: #{tpu_custom_call.1} parent=1 // loop_body
      %s39 = ssub.s32 %s34, 1
      %s40 = ssub.s32 %s34, 2
      %s47 = sadd.s32 1, %s42
      %p48 = scmp.ge.s32.totalorder %s47, 1
      %s49 = scalar_select %p48, 0, %s47
      %s50 = sadd.s32 1, %s41
      %s51 = scalar_select %p48, %s50, %s41
      %p52 = scmp.ge.s32.totalorder %s51, 2
      %s53 = scalar_select %p52, 0, %s51
      %s54 = ssub.s32 %s41, %s53
      %s55 = ssub.s32 %s42, %s49
      %s56 = sor.u32 %s54, %s55
      %p57 = scmp.eq.s32.totalorder %s56, 0
      %s59 = sadd.s32 %s58, 1
      %s60 = scalar_select %p57, %s58, %s59
      %p63 = pneg %p57
      %p64 = scmp.eq.s32.totalorder %s34, 1
      %p65 = por %p63, %p64
      %p66 = scmp.ne.s32.totalorder %s58, %s61
      %p67 = scmp.eq.s32.totalorder %s34, 0
      %p68 = por %p66, %p67
      %p69 = scmp.ne.s32.totalorder %s58, %s61
      %p70 = scmp.eq.s32.totalorder %s39, 1
      %p71 = por %p69, %p70
      %p72 = scmp.ne.s32.totalorder %s61, %s62
      %p73 = scmp.eq.s32.totalorder %s39, 0
      %p74 = por %p72, %p73
      %p75 = scmp.ne.s32.totalorder %s61, %s62
      %p76 = scmp.eq.s32.totalorder %s40, 1
      %p77 = por %p75, %p76
      %p79 = scmp.ne.s32.totalorder %s62, %s78
      %p80 = scmp.eq.s32.totalorder %s40, 0
      %p81 = por %p79, %p80
      %s82 = ssub.s32 %s41, %s53
      %s83 = ssub.s32 %s42, %s49
      %s84 = sor.u32 %s82, %s83
      %p85 = scmp.eq.s32.totalorder %s84, 0
      %s87 = sadd.s32 %s86, 1
      %s88 = scalar_select %p85, %s86, %s87
      %p91 = pneg %p85
      %p92 = scmp.eq.s32.totalorder %s34, 1
      %p93 = por %p91, %p92
      %p94 = scmp.ne.s32.totalorder %s86, %s89
      %p95 = scmp.eq.s32.totalorder %s34, 0
      %p96 = por %p94, %p95
      %p97 = scmp.ne.s32.totalorder %s86, %s89
      %p98 = scmp.eq.s32.totalorder %s39, 1
      %p99 = por %p97, %p98
      %p100 = scmp.ne.s32.totalorder %s89, %s90
      %p101 = scmp.eq.s32.totalorder %s39, 0
      %p102 = por %p100, %p101
      %p103 = scmp.ne.s32.totalorder %s89, %s90
      %p104 = scmp.eq.s32.totalorder %s40, 1
      %p105 = por %p103, %p104
      %p107 = scmp.ne.s32.totalorder %s90, %s106
      %p108 = scmp.eq.s32.totalorder %s40, 0
      %p109 = por %p107, %p108
      %s110 = ssub.s32 %s41, %s53
      %s111 = ssub.s32 %s42, %s49
      %s112 = sor.u32 %s110, %s111
      %p113 = scmp.eq.s32.totalorder %s112, 0
      %s115 = sadd.s32 %s114, 1
      %s116 = scalar_select %p113, %s114, %s115
      %p119 = pneg %p113
      %p120 = scmp.eq.s32.totalorder %s34, 1
      %p121 = por %p119, %p120
      %p122 = scmp.ne.s32.totalorder %s114, %s117
      %p123 = scmp.eq.s32.totalorder %s34, 0
      %p124 = por %p122, %p123
      %p125 = scmp.ne.s32.totalorder %s114, %s117
      %p126 = scmp.eq.s32.totalorder %s39, 1
      %p127 = por %p125, %p126
      %p128 = scmp.ne.s32.totalorder %s117, %s118
      %p129 = scmp.eq.s32.totalorder %s39, 0
      %p130 = por %p128, %p129
      %p131 = scmp.ne.s32.totalorder %s117, %s118
      %p132 = scmp.eq.s32.totalorder %s40, 1
      %p133 = por %p131, %p132
      %p135 = scmp.ne.s32.totalorder %s118, %s134
      %p136 = scmp.eq.s32.totalorder %s40, 0
      %p137 = por %p135, %p136
      %s138 = ssub.s32 %s41, %s53
      %s139 = ssub.s32 %s42, %s49
      %s140 = sor.u32 %s138, %s139
      %p141 = scmp.eq.s32.totalorder %s140, 0
      %s143 = sadd.s32 %s142, 1
      %s144 = scalar_select %p141, %s142, %s143
      %p147 = pneg %p141
      %p148 = scmp.eq.s32.totalorder %s34, 1
      %p149 = por %p147, %p148
      %p150 = scmp.ne.s32.totalorder %s142, %s145
      %p151 = scmp.eq.s32.totalorder %s34, 0
      %p152 = por %p150, %p151
      %p153 = scmp.ne.s32.totalorder %s142, %s145
      %p154 = scmp.eq.s32.totalorder %s39, 1
      %p155 = por %p153, %p154
      %p156 = scmp.ne.s32.totalorder %s145, %s146
      %p157 = scmp.eq.s32.totalorder %s39, 0
      %p158 = por %p156, %p157
      %p159 = scmp.ne.s32.totalorder %s145, %s146
      %p160 = scmp.eq.s32.totalorder %s40, 1
      %p161 = por %p159, %p160
      %p163 = scmp.ne.s32.totalorder %s146, %s162
      %p164 = scmp.eq.s32.totalorder %s40, 0
      %p165 = por %p163, %p164
      %s166 = ssub.s32 %s41, %s53
      %s167 = ssub.s32 %s42, %s49
      %s168 = sor.u32 %s166, %s167
      %p169 = scmp.eq.s32.totalorder %s168, 0
      %s171 = sadd.s32 %s170, 1
      %s172 = scalar_select %p169, %s170, %s171
      %p175 = pneg %p169
      %p176 = scmp.eq.s32.totalorder %s34, 1
      %p177 = por %p175, %p176
      %p178 = scmp.ne.s32.totalorder %s170, %s173
      %p179 = scmp.eq.s32.totalorder %s34, 0
      %p180 = por %p178, %p179
      %p181 = scmp.ne.s32.totalorder %s170, %s173
      %p182 = scmp.eq.s32.totalorder %s39, 1
      %p183 = por %p181, %p182
      %p184 = scmp.ne.s32.totalorder %s173, %s174
      %p185 = scmp.eq.s32.totalorder %s39, 0
      %p186 = por %p184, %p185
      %p187 = scmp.ne.s32.totalorder %s173, %s174
      %p188 = scmp.eq.s32.totalorder %s40, 1
      %p189 = por %p187, %p188
      %p191 = scmp.ne.s32.totalorder %s174, %s190
      %p192 = scmp.eq.s32.totalorder %s40, 0
      %p193 = por %p191, %p192
      %s194 = ssub.s32 %s41, %s53
      %s195 = ssub.s32 %s42, %s49
      %s196 = sor.u32 %s194, %s195
      %p197 = scmp.eq.s32.totalorder %s196, 0
      %s199 = sadd.s32 %s198, 1
      %s200 = scalar_select %p197, %s198, %s199
      %p203 = pneg %p197
      %p204 = scmp.eq.s32.totalorder %s34, 1
      %p205 = por %p203, %p204
      %p206 = scmp.ne.s32.totalorder %s198, %s201
      %p207 = scmp.eq.s32.totalorder %s34, 0
      %p208 = por %p206, %p207
      %p209 = scmp.ne.s32.totalorder %s198, %s201
      %p210 = scmp.eq.s32.totalorder %s39, 1
      %p211 = por %p209, %p210
      %p212 = scmp.ne.s32.totalorder %s201, %s202
      %p213 = scmp.eq.s32.totalorder %s39, 0
      %p214 = por %p212, %p213
      %p215 = scmp.ne.s32.totalorder %s201, %s202
      %p216 = scmp.eq.s32.totalorder %s40, 1
      %p217 = por %p215, %p216
      %p219 = scmp.ne.s32.totalorder %s202, %s218
      %p220 = scmp.eq.s32.totalorder %s40, 0
      %p221 = por %p219, %p220
      %s222 = ssub.s32 %s41, %s53
      %s223 = ssub.s32 %s42, %s49
      %s224 = sor.u32 %s222, %s223
      %p225 = scmp.eq.s32.totalorder %s224, 0
      %s227 = sadd.s32 %s226, 1
      %s228 = scalar_select %p225, %s226, %s227
      %p231 = pneg %p225
      %p232 = scmp.eq.s32.totalorder %s34, 1
      %p233 = por %p231, %p232
      %p234 = scmp.ne.s32.totalorder %s226, %s229
      %p235 = scmp.eq.s32.totalorder %s34, 0
      %p236 = por %p234, %p235
      %p237 = scmp.ne.s32.totalorder %s226, %s229
      %p238 = scmp.eq.s32.totalorder %s39, 1
      %p239 = por %p237, %p238
      %p240 = scmp.ne.s32.totalorder %s229, %s230
      %p241 = scmp.eq.s32.totalorder %s39, 0
      %p242 = por %p240, %p241
      %p243 = scmp.ne.s32.totalorder %s229, %s230
      %p244 = scmp.eq.s32.totalorder %s40, 1
      %p245 = por %p243, %p244
      %p247 = scmp.ne.s32.totalorder %s230, %s246
      %p248 = scmp.eq.s32.totalorder %s40, 0
      %p249 = por %p247, %p248
      %s250 = ssub.s32 %s41, %s53
      %s251 = ssub.s32 %s42, %s49
      %s252 = sor.u32 %s250, %s251
      %p253 = scmp.eq.s32.totalorder %s252, 0
      %s255 = sadd.s32 %s254, 1
      %s256 = scalar_select %p253, %s254, %s255
      %p259 = pneg %p253
      %p260 = scmp.eq.s32.totalorder %s34, 1
      %p261 = por %p259, %p260
      %p262 = scmp.ne.s32.totalorder %s254, %s257
      %p263 = scmp.eq.s32.totalorder %s34, 0
      %p264 = por %p262, %p263
      %p265 = scmp.ne.s32.totalorder %s254, %s257
      %p266 = scmp.eq.s32.totalorder %s39, 1
      %p267 = por %p265, %p266
      %p268 = scmp.ne.s32.totalorder %s257, %s258
      %p269 = scmp.eq.s32.totalorder %s39, 0
      %p270 = por %p268, %p269
      %p271 = scmp.ne.s32.totalorder %s257, %s258
      %p272 = scmp.eq.s32.totalorder %s40, 1
      %p273 = por %p271, %p272
      %p275 = scmp.ne.s32.totalorder %s258, %s274
      %p276 = scmp.eq.s32.totalorder %s40, 0
      %p277 = por %p275, %p276
      %s278 = ssub.s32 %s41, %s53
      %s279 = ssub.s32 %s42, %s49
      %s280 = sor.u32 %s278, %s279
      %p281 = scmp.eq.s32.totalorder %s280, 0
      %s283 = sadd.s32 %s282, 1
      %s284 = scalar_select %p281, %s282, %s283
      %p287 = pneg %p281
      %p288 = scmp.eq.s32.totalorder %s34, 1
      %p289 = por %p287, %p288
      %p290 = scmp.ne.s32.totalorder %s282, %s285
      %p291 = scmp.eq.s32.totalorder %s34, 0
      %p292 = por %p290, %p291
      %p293 = scmp.ne.s32.totalorder %s282, %s285
      %p294 = scmp.eq.s32.totalorder %s39, 1
      %p295 = por %p293, %p294
      %p296 = scmp.ne.s32.totalorder %s285, %s286
      %p297 = scmp.eq.s32.totalorder %s39, 0
      %p298 = por %p296, %p297
      %p299 = scmp.ne.s32.totalorder %s285, %s286
      %p300 = scmp.eq.s32.totalorder %s40, 1
      %p301 = por %p299, %p300
      %p303 = scmp.ne.s32.totalorder %s286, %s302
      %p304 = scmp.eq.s32.totalorder %s40, 0
      %p305 = por %p303, %p304
      %s306 = ssub.s32 %s41, %s53
      %s307 = ssub.s32 %s42, %s49
      %s308 = sor.u32 %s306, %s307
      %p309 = scmp.eq.s32.totalorder %s308, 0
      %s311 = sadd.s32 %s310, 1
      %s312 = scalar_select %p309, %s310, %s311
      %p315 = pneg %p309
      %p316 = scmp.eq.s32.totalorder %s34, 1
      %p317 = por %p315, %p316
      %p318 = scmp.ne.s32.totalorder %s310, %s313
      %p319 = scmp.eq.s32.totalorder %s34, 0
      %p320 = por %p318, %p319
      %p321 = scmp.ne.s32.totalorder %s310, %s313
      %p322 = scmp.eq.s32.totalorder %s39, 1
      %p323 = por %p321, %p322
      %p324 = scmp.ne.s32.totalorder %s313, %s314
      %p325 = scmp.eq.s32.totalorder %s39, 0
      %p326 = por %p324, %p325
      %p327 = scmp.ne.s32.totalorder %s313, %s314
      %p328 = scmp.eq.s32.totalorder %s40, 1
      %p329 = por %p327, %p328
      %p331 = scmp.ne.s32.totalorder %s314, %s330
      %p332 = scmp.eq.s32.totalorder %s40, 0
      %p333 = por %p331, %p332
      %p334 = scmp.le.s32.totalorder 1, %s34
      %p335 = scmp.lt.s32.totalorder %s34, 3
      %p336 = pnand %p334, %p335
      %p337 = pneg %p336
      // Predicated region
      $region9: #{tpu_custom_call.1} parent=5 // pred_check
        _
      $region10: #{tpu_custom_call.1} parent=5 // pred_check_branch
        %339 = sbr.rel (%p336) target = $region12
      $region11: #{tpu_custom_call.1} parent=5 // pred_region
        %s340 = ssub.s32 %s34, 1
      $region12: #{tpu_custom_call.1} parent=5 // pred_fallthru
        _
      %p341 = scmp.lt.s32.totalorder %s34, 2
      // Predicated region
      $region13: #{tpu_custom_call.1} parent=5 // pred_check
        %p342 = pneg %p341
      $region14: #{tpu_custom_call.1} parent=5 // pred_check_branch
        %344 = sbr.rel (%p342) target = $region16
      $region15: #{tpu_custom_call.1} parent=5 // pred_region
        // Predicated region
        $region17: #{tpu_custom_call.1} parent=15 // pred_check
          %p345 = pneg %p68
        $region18: #{tpu_custom_call.1} parent=15 // pred_check_branch
          %347 = sbr.rel (%p345) target = $region20
        $region19: #{tpu_custom_call.1} parent=15 // pred_region
          %s348 = sand.u32 %s58, 1
          %s349 = scalar_lea.sflag [#allocation3], %s348
          %s350 = sand.u32 %s58, 1
          %s351 = smul.addr %s350, 1024
          %s352 = scalar_lea.vmem [#allocation2], %s351
          %s353 = smul.u32 32, %s42
          %s355 = ssub.s32 16384, 16384
          %356 = vsyncadd %s349, %s355
          %s357 = smul.addr %s353, 4
          %s358 = smul.addr %s41, 128
          %s359 = sadd.s32 %s357, %s358
          %s360 = smul.addr %s359, 128
          %s361 = scalar_lea.hbm %s0, %s360
          %s362 = sshll.u32 %s352, 4
          %s363 = int_to_ptr.vmem [resolvable:$true] %s362
          %368 = dma.hbm_to_vmem [thread:$0]  %s361, 16384, %s363, %s349, 128, 128, 8
        $region20: #{tpu_custom_call.1} parent=15 // pred_fallthru
          _
        // Predicated region
        $region21: #{tpu_custom_call.1} parent=15 // pred_check
          %p369 = pneg %p96
        $region22: #{tpu_custom_call.1} parent=15 // pred_check_branch
          %371 = sbr.rel (%p369) target = $region24
        $region23: #{tpu_custom_call.1} parent=15 // pred_region
          %s372 = sand.u32 %s34, 1
          %s373 = scalar_lea.sflag [#allocation6], %s372
          %s374 = sand.u32 %s86, 1
          %s375 = smul.addr %s374, 256
          %s376 = scalar_lea.vmem [#allocation5], %s375
          %s377 = smul.u32 16, %s42
          %s379 = ssub.s32 4096, 4096
          %380 = vsyncadd %s373, %s379
          %s381 = smul.addr %s377, 2
          %s382 = smul.addr %s41, 32
          %s383 = sadd.s32 %s381, %s382
          %s384 = smul.addr %s383, 128
          %s385 = scalar_lea.hbm %s1, %s384
          %s386 = sshll.u32 %s376, 4
          %s387 = int_to_ptr.vmem [resolvable:$true] %s386
          %392 = dma.hbm_to_vmem [thread:$0]  %s385, 4096, %s387, %s373, 128, 128, 8
        $region24: #{tpu_custom_call.1} parent=15 // pred_fallthru
          _
        // Predicated region
        $region25: #{tpu_custom_call.1} parent=15 // pred_check
          %p393 = pneg %p124
        $region26: #{tpu_custom_call.1} parent=15 // pred_check_branch
          %395 = sbr.rel (%p393) target = $region28
        $region27: #{tpu_custom_call.1} parent=15 // pred_region
          %s396 = sand.u32 %s34, 1
          %s397 = scalar_lea.sflag [#allocation6], %s396
          %s398 = sand.u32 %s114, 1
          %s399 = smul.addr %s398, 64
          %s400 = scalar_lea.vmem [#allocation7], %s399
          %s401 = smul.u32 8, %s42
          %s403 = ssub.s32 1024, 1024
          %404 = vsyncadd %s397, %s403
          %s405 = smul.addr %s41, 8
          %s406 = sadd.s32 %s401, %s405
          %s407 = smul.addr %s406, 128
          %s408 = scalar_lea.hbm %s2, %s407
          %s409 = sshll.u32 %s400, 4
          %s410 = int_to_ptr.vmem [resolvable:$true] %s409
          %415 = dma.hbm_to_vmem [thread:$0]  %s408, 1024, %s410, %s397, 128, 128, 8
        $region28: #{tpu_custom_call.1} parent=15 // pred_fallthru
          _
        // Predicated region
        $region29: #{tpu_custom_call.1} parent=15 // pred_check
          %p416 = pneg %p152
        $region30: #{tpu_custom_call.1} parent=15 // pred_check_branch
          %418 = sbr.rel (%p416) target = $region32
        $region31: #{tpu_custom_call.1} parent=15 // pred_region
          %s419 = sand.u32 %s142, 1
          %s420 = scalar_lea.sflag [#allocation9], %s419
          %s421 = sand.u32 %s142, 1
          %s422 = smul.addr %s421, 16
          %s423 = scalar_lea.vmem [#allocation8], %s422
          %s424 = smul.u32 4, %s42
          %s426 = ssub.s32 256, 256
          %427 = vsyncadd %s420, %s426
          %s428 = smul.addr %s41, 4
          %s429 = sadd.s32 %s424, %s428
          %s430 = smul.addr %s429, 64
          %s431 = scalar_lea.hbm %s3, %s430
          %s432 = sshll.u32 %s423, 4
          %s433 = int_to_ptr.vmem [resolvable:$true] %s432
          %438 = dma.hbm_to_vmem [thread:$0]  %s431, 256, %s433, %s420, 64, 64, 4
        $region32: #{tpu_custom_call.1} parent=15 // pred_fallthru
          _
        // Predicated region
        $region33: #{tpu_custom_call.1} parent=15 // pred_check
          %p439 = pneg %p180
        $region34: #{tpu_custom_call.1} parent=15 // pred_check_branch
          %441 = sbr.rel (%p439) target = $region36
        $region35: #{tpu_custom_call.1} parent=15 // pred_region
          %s442 = smul.u32 2, %s42
          %p443 = scmp.lt.s32.totalorder %s41, 1
          %s444 = scalar_select %p443, %s41, 1
          %p445 = scmp.lt.s32.totalorder %s442, 1
          %s446 = scalar_select %p445, %s442, 1
          %s447 = smul.addr %s444, 2
          %s448 = sadd.s32 %s446, %s447
          %s449 = smul.addr %s448, 2
          %s450 = scalar_lea.vmem %s4, %s449
          %s451 = smul.u32 2, %s42
        $region36: #{tpu_custom_call.1} parent=15 // pred_fallthru
          _
      $region16: #{tpu_custom_call.1} parent=5 // pred_fallthru
        _
      %p452 = scmp.le.s32.totalorder 1, %s34
      %p453 = scmp.lt.s32.totalorder %s34, 3
      %p454 = pnand %p452, %p453
      %p455 = pneg %p454
      // Predicated region
      $region37: #{tpu_custom_call.1} parent=5 // pred_check
        _
      $region38: #{tpu_custom_call.1} parent=5 // pred_check_branch
        %457 = sbr.rel (%p454) target = $region40
      $region39: #{tpu_custom_call.1} parent=5 // pred_region
        %s458 = ssub.s32 %s34, 1
        %s459 = sand.u32 %s61, 1
        %s460 = scalar_lea.sflag [#allocation3], %s459
        %s461 = sand.u32 %s61, 1
        %s462 = smul.addr %s461, 1024
        %s463 = scalar_lea.vmem [#allocation2], %s462
        // Predicated region
        $region41: #{tpu_custom_call.1} parent=39 // pred_check
          %p464 = pneg %p74
        $region42: #{tpu_custom_call.1} parent=39 // pred_check_branch
          %466 = sbr.rel (%p464) target = $region44
        $region43: #{tpu_custom_call.1} parent=39 // pred_region
          %467 = dma.done %s460, 16384
        $region44: #{tpu_custom_call.1} parent=39 // pred_fallthru
          _
        %s468 = sand.u32 %s39, 1
        %s469 = scalar_lea.sflag [#allocation6], %s468
        %s470 = sand.u32 %s89, 1
        %s471 = smul.addr %s470, 256
        %s472 = scalar_lea.vmem [#allocation5], %s471
        // Predicated region
        $region45: #{tpu_custom_call.1} parent=39 // pred_check
          %p473 = pneg %p102
        $region46: #{tpu_custom_call.1} parent=39 // pred_check_branch
          %475 = sbr.rel (%p473) target = $region48
        $region47: #{tpu_custom_call.1} parent=39 // pred_region
          %476 = dma.done %s469, 4096
        $region48: #{tpu_custom_call.1} parent=39 // pred_fallthru
          _
        %s477 = sand.u32 %s39, 1
        %s478 = scalar_lea.sflag [#allocation6], %s477
        %s479 = sand.u32 %s117, 1
        %s480 = smul.addr %s479, 64
        %s481 = scalar_lea.vmem [#allocation7], %s480
        // Predicated region
        $region49: #{tpu_custom_call.1} parent=39 // pred_check
          %p482 = pneg %p130
        $region50: #{tpu_custom_call.1} parent=39 // pred_check_branch
          %484 = sbr.rel (%p482) target = $region52
        $region51: #{tpu_custom_call.1} parent=39 // pred_region
          %485 = dma.done %s478, 1024
        $region52: #{tpu_custom_call.1} parent=39 // pred_fallthru
          _
        %s486 = sand.u32 %s145, 1
        %s487 = scalar_lea.sflag [#allocation9], %s486
        %s488 = sand.u32 %s145, 1
        %s489 = smul.addr %s488, 16
        %s490 = scalar_lea.vmem [#allocation8], %s489
        // Predicated region
        $region53: #{tpu_custom_call.1} parent=39 // pred_check
          %p491 = pneg %p158
        $region54: #{tpu_custom_call.1} parent=39 // pred_check_branch
          %493 = sbr.rel (%p491) target = $region56
        $region55: #{tpu_custom_call.1} parent=39 // pred_region
          %494 = dma.done %s487, 256
        $region56: #{tpu_custom_call.1} parent=39 // pred_fallthru
          _
        %s495 = sand.u32 %s61, 1
        %s496 = scalar_lea.sflag [#allocation3], %s495
        %s497 = sand.u32 %s61, 1
        %s498 = smul.addr %s497, 1024
        %s499 = scalar_lea.vmem [#allocation2], %s498
        %p500 = pneg %p74
        %p501 = pneg %p71
        %s502 = sand.u32 %s39, 1
        %s503 = scalar_lea.sflag [#allocation6], %s502
        %s504 = sand.u32 %s89, 1
        %s505 = smul.addr %s504, 256
        %s506 = scalar_lea.vmem [#allocation5], %s505
        %p507 = pneg %p102
        %p508 = pneg %p99
        %s509 = sand.u32 %s39, 1
        %s510 = scalar_lea.sflag [#allocation6], %s509
        %s511 = sand.u32 %s117, 1
        %s512 = smul.addr %s511, 64
        %s513 = scalar_lea.vmem [#allocation7], %s512
        %p514 = pneg %p130
        %p515 = pneg %p127
        %s516 = sand.u32 %s145, 1
        %s517 = scalar_lea.sflag [#allocation9], %s516
        %s518 = sand.u32 %s145, 1
        %s519 = smul.addr %s518, 16
        %s520 = scalar_lea.vmem [#allocation8], %s519
        %p521 = pneg %p158
        %p522 = pneg %p155
        %s523 = smul.u32 2, %s44
        %p524 = scmp.lt.s32.totalorder %s43, 1
        %s525 = scalar_select %p524, %s43, 1
        %p526 = scmp.lt.s32.totalorder %s523, 1
        %s527 = scalar_select %p526, %s523, 1
        %s528 = smul.addr %s525, 2
        %s529 = sadd.s32 %s527, %s528
        %s530 = smul.addr %s529, 2
        %s531 = scalar_lea.vmem %s4, %s530
        %p532 = pneg %p186
        %p533 = pneg %p183
        %p534 = pneg %p214
        %p535 = pneg %p211
        %s536 = sand.u32 %s201, 1
        %s537 = scalar_lea.sflag [#allocation4], %s536
        %s538 = sand.u32 %s201, 1
        %s539 = smul.addr %s538, 1024
        %s540 = scalar_lea.vmem [#allocation10], %s539
        %p541 = pneg %p242
        %p542 = pneg %p239
        %s543 = sand.u32 %s39, 1
        %s544 = scalar_lea.sflag [#allocation12], %s543
        %s545 = sand.u32 %s229, 1
        %s546 = smul.addr %s545, 256
        %s547 = scalar_lea.vmem [#allocation11], %s546
        %p548 = pneg %p270
        %p549 = pneg %p267
        %s550 = sand.u32 %s39, 1
        %s551 = scalar_lea.sflag [#allocation12], %s550
        %s552 = sand.u32 %s257, 1
        %s553 = smul.addr %s552, 64
        %s554 = scalar_lea.vmem [#allocation13], %s553
        %p555 = pneg %p298
        %p556 = pneg %p295
        %s557 = sand.u32 %s39, 1
        %s558 = scalar_lea.sflag [#allocation15], %s557
        %s559 = sand.u32 %s285, 1
        %s560 = smul.addr %s559, 16
        %s561 = scalar_lea.vmem [#allocation14], %s560
        %p562 = pneg %p326
        %p563 = pneg %p323
        %s564 = sand.u32 %s39, 1
        %s565 = scalar_lea.sflag [#allocation15], %s564
        %s566 = sand.u32 %s313, 1
        %s567 = smul.addr %s566, 4
        %s568 = scalar_lea.vmem [#allocation16], %s567
        %s569 = smul.u32 32, %s44
        %s570 = smul.u32 16, %s44
        %s571 = smul.u32 8, %s44
        %s572 = smul.u32 4, %s44
        %s573 = smul.u32 2, %s44
        %p574 = scmp.lt.s32.totalorder %s43, 1
        %s575 = scalar_select %p574, %s43, 1
        %p576 = scmp.lt.s32.totalorder %s573, 1
        %s577 = scalar_select %p576, %s573, 1
        %s578 = smul.addr %s575, 2
        %s579 = sadd.s32 %s577, %s578
        %s580 = smul.addr %s579, 2
        %s581 = scalar_lea.vmem %s4, %s580
        %s582 = smul.u32 2, %s44
        %s583 = smul.u32 32, %s44
        %s584 = smul.u32 16, %s44
        %s585 = smul.u32 8, %s44
        %s586 = smul.u32 4, %s44
        %s587 = smul.u32 2, %s44
        %v588 = vld [vmem:[%s463] sm:$0xff]
        %v589 = vld [vmem:[%s463 + $0x8] sm:$0xff]
        %v590 = vld [vmem:[%s463 + $0x10] sm:$0xff]
        %v591 = vld [vmem:[%s463 + $0x18] sm:$0xff]
        %v592 = vld [vmem:[%s463 + $0x20] sm:$0xff]
        %v593 = vld [vmem:[%s463 + $0x28] sm:$0xff]
        %v594 = vld [vmem:[%s463 + $0x30] sm:$0xff]
        %v595 = vld [vmem:[%s463 + $0x38] sm:$0xff]
        %v596 = vld [vmem:[%s463 + $0x40] sm:$0xff]
        %v597 = vld [vmem:[%s463 + $0x48] sm:$0xff]
        %v598 = vld [vmem:[%s463 + $0x50] sm:$0xff]
        %v599 = vld [vmem:[%s463 + $0x58] sm:$0xff]
        %v600 = vld [vmem:[%s463 + $0x60] sm:$0xff]
        %v601 = vld [vmem:[%s463 + $0x68] sm:$0xff]
        %v602 = vld [vmem:[%s463 + $0x70] sm:$0xff]
        %v603 = vld [vmem:[%s463 + $0x78] sm:$0xff]
        %v604 = vld [vmem:[%s463 + $0x80] sm:$0xff]
        %v605 = vld [vmem:[%s463 + $0x88] sm:$0xff]
        %v606 = vld [vmem:[%s463 + $0x90] sm:$0xff]
        %v607 = vld [vmem:[%s463 + $0x98] sm:$0xff]
        %v608 = vld [vmem:[%s463 + $0xa0] sm:$0xff]
        %v609 = vld [vmem:[%s463 + $0xa8] sm:$0xff]
        %v610 = vld [vmem:[%s463 + $0xb0] sm:$0xff]
        %v611 = vld [vmem:[%s463 + $0xb8] sm:$0xff]
        %v612 = vld [vmem:[%s463 + $0xc0] sm:$0xff]
        %v613 = vld [vmem:[%s463 + $0xc8] sm:$0xff]
        %v614 = vld [vmem:[%s463 + $0xd0] sm:$0xff]
        %v615 = vld [vmem:[%s463 + $0xd8] sm:$0xff]
        %v616 = vld [vmem:[%s463 + $0xe0] sm:$0xff]
        %v617 = vld [vmem:[%s463 + $0xe8] sm:$0xff]
        %v618 = vld [vmem:[%s463 + $0xf0] sm:$0xff]
        %v619 = vld [vmem:[%s463 + $0xf8] sm:$0xff]
        %v620 = vld [vmem:[%s463 + $0x100] sm:$0xff]
        %v621 = vld [vmem:[%s463 + $0x108] sm:$0xff]
        %v622 = vld [vmem:[%s463 + $0x110] sm:$0xff]
        %v623 = vld [vmem:[%s463 + $0x118] sm:$0xff]
        %v624 = vld [vmem:[%s463 + $0x120] sm:$0xff]
        %v625 = vld [vmem:[%s463 + $0x128] sm:$0xff]
        %v626 = vld [vmem:[%s463 + $0x130] sm:$0xff]
        %v627 = vld [vmem:[%s463 + $0x138] sm:$0xff]
        %v628 = vld [vmem:[%s463 + $0x140] sm:$0xff]
        %v629 = vld [vmem:[%s463 + $0x148] sm:$0xff]
        %v630 = vld [vmem:[%s463 + $0x150] sm:$0xff]
        %v631 = vld [vmem:[%s463 + $0x158] sm:$0xff]
        %v632 = vld [vmem:[%s463 + $0x160] sm:$0xff]
        %v633 = vld [vmem:[%s463 + $0x168] sm:$0xff]
        %v634 = vld [vmem:[%s463 + $0x170] sm:$0xff]
        %v635 = vld [vmem:[%s463 + $0x178] sm:$0xff]
        %v636 = vld [vmem:[%s463 + $0x180] sm:$0xff]
        %v637 = vld [vmem:[%s463 + $0x188] sm:$0xff]
        %v638 = vld [vmem:[%s463 + $0x190] sm:$0xff]
        %v639 = vld [vmem:[%s463 + $0x198] sm:$0xff]
        %v640 = vld [vmem:[%s463 + $0x1a0] sm:$0xff]
        %v641 = vld [vmem:[%s463 + $0x1a8] sm:$0xff]
        %v642 = vld [vmem:[%s463 + $0x1b0] sm:$0xff]
        %v643 = vld [vmem:[%s463 + $0x1b8] sm:$0xff]
        %v644 = vld [vmem:[%s463 + $0x1c0] sm:$0xff]
        %v645 = vld [vmem:[%s463 + $0x1c8] sm:$0xff]
        %v646 = vld [vmem:[%s463 + $0x1d0] sm:$0xff]
        %v647 = vld [vmem:[%s463 + $0x1d8] sm:$0xff]
        %v648 = vld [vmem:[%s463 + $0x1e0] sm:$0xff]
        %v649 = vld [vmem:[%s463 + $0x1e8] sm:$0xff]
        %v650 = vld [vmem:[%s463 + $0x1f0] sm:$0xff]
        %v651 = vld [vmem:[%s463 + $0x1f8] sm:$0xff]
        %v652 = vld [vmem:[%s463 + $0x200] sm:$0xff]
        %v653 = vld [vmem:[%s463 + $0x208] sm:$0xff]
        %v654 = vld [vmem:[%s463 + $0x210] sm:$0xff]
        %v655 = vld [vmem:[%s463 + $0x218] sm:$0xff]
        %v656 = vld [vmem:[%s463 + $0x220] sm:$0xff]
        %v657 = vld [vmem:[%s463 + $0x228] sm:$0xff]
        %v658 = vld [vmem:[%s463 + $0x230] sm:$0xff]
        %v659 = vld [vmem:[%s463 + $0x238] sm:$0xff]
        %v660 = vld [vmem:[%s463 + $0x240] sm:$0xff]
        %v661 = vld [vmem:[%s463 + $0x248] sm:$0xff]
        %v662 = vld [vmem:[%s463 + $0x250] sm:$0xff]
        %v663 = vld [vmem:[%s463 + $0x258] sm:$0xff]
        %v664 = vld [vmem:[%s463 + $0x260] sm:$0xff]
        %v665 = vld [vmem:[%s463 + $0x268] sm:$0xff]
        %v666 = vld [vmem:[%s463 + $0x270] sm:$0xff]
        %v667 = vld [vmem:[%s463 + $0x278] sm:$0xff]
        %v668 = vld [vmem:[%s463 + $0x280] sm:$0xff]
        %v669 = vld [vmem:[%s463 + $0x288] sm:$0xff]
        %v670 = vld [vmem:[%s463 + $0x290] sm:$0xff]
        %v671 = vld [vmem:[%s463 + $0x298] sm:$0xff]
        %v672 = vld [vmem:[%s463 + $0x2a0] sm:$0xff]
        %v673 = vld [vmem:[%s463 + $0x2a8] sm:$0xff]
        %v674 = vld [vmem:[%s463 + $0x2b0] sm:$0xff]
        %v675 = vld [vmem:[%s463 + $0x2b8] sm:$0xff]
        %v676 = vld [vmem:[%s463 + $0x2c0] sm:$0xff]
        %v677 = vld [vmem:[%s463 + $0x2c8] sm:$0xff]
        %v678 = vld [vmem:[%s463 + $0x2d0] sm:$0xff]
        %v679 = vld [vmem:[%s463 + $0x2d8] sm:$0xff]
        %v680 = vld [vmem:[%s463 + $0x2e0] sm:$0xff]
        %v681 = vld [vmem:[%s463 + $0x2e8] sm:$0xff]
        %v682 = vld [vmem:[%s463 + $0x2f0] sm:$0xff]
        %v683 = vld [vmem:[%s463 + $0x2f8] sm:$0xff]
        %v684 = vld [vmem:[%s463 + $0x300] sm:$0xff]
        %v685 = vld [vmem:[%s463 + $0x308] sm:$0xff]
        %v686 = vld [vmem:[%s463 + $0x310] sm:$0xff]
        %v687 = vld [vmem:[%s463 + $0x318] sm:$0xff]
        %v688 = vld [vmem:[%s463 + $0x320] sm:$0xff]
        %v689 = vld [vmem:[%s463 + $0x328] sm:$0xff]
        %v690 = vld [vmem:[%s463 + $0x330] sm:$0xff]
        %v691 = vld [vmem:[%s463 + $0x338] sm:$0xff]
        %v692 = vld [vmem:[%s463 + $0x340] sm:$0xff]
        %v693 = vld [vmem:[%s463 + $0x348] sm:$0xff]
        %v694 = vld [vmem:[%s463 + $0x350] sm:$0xff]
        %v695 = vld [vmem:[%s463 + $0x358] sm:$0xff]
        %v696 = vld [vmem:[%s463 + $0x360] sm:$0xff]
        %v697 = vld [vmem:[%s463 + $0x368] sm:$0xff]
        %v698 = vld [vmem:[%s463 + $0x370] sm:$0xff]
        %v699 = vld [vmem:[%s463 + $0x378] sm:$0xff]
        %v700 = vld [vmem:[%s463 + $0x380] sm:$0xff]
        %v701 = vld [vmem:[%s463 + $0x388] sm:$0xff]
        %v702 = vld [vmem:[%s463 + $0x390] sm:$0xff]
        %v703 = vld [vmem:[%s463 + $0x398] sm:$0xff]
        %v704 = vld [vmem:[%s463 + $0x3a0] sm:$0xff]
        %v705 = vld [vmem:[%s463 + $0x3a8] sm:$0xff]
        %v706 = vld [vmem:[%s463 + $0x3b0] sm:$0xff]
        %v707 = vld [vmem:[%s463 + $0x3b8] sm:$0xff]
        %v708 = vld [vmem:[%s463 + $0x3c0] sm:$0xff]
        %v709 = vld [vmem:[%s463 + $0x3c8] sm:$0xff]
        %v710 = vld [vmem:[%s463 + $0x3d0] sm:$0xff]
        %v711 = vld [vmem:[%s463 + $0x3d8] sm:$0xff]
        %v712 = vld [vmem:[%s463 + $0x3e0] sm:$0xff]
        %v713 = vld [vmem:[%s463 + $0x3e8] sm:$0xff]
        %v714 = vld [vmem:[%s463 + $0x3f0] sm:$0xff]
        %v715 = vld [vmem:[%s463 + $0x3f8] sm:$0xff]
        %v716 = vmax.f32 %v588, %v592
        %v717 = vmax.f32 %v716, %v596
        %v718 = vmax.f32 %v717, %v600
        %v719 = vmax.f32 %v589, %v593
        %v720 = vmax.f32 %v719, %v597
        %v721 = vmax.f32 %v720, %v601
        %v722 = vmax.f32 %v590, %v594
        %v723 = vmax.f32 %v722, %v598
        %v724 = vmax.f32 %v723, %v602
        %v725 = vmax.f32 %v591, %v595
        %v726 = vmax.f32 %v725, %v599
        %v727 = vmax.f32 %v726, %v603
        %v728 = vmax.f32 %v604, %v608
        %v729 = vmax.f32 %v728, %v612
        %v730 = vmax.f32 %v729, %v616
        %v731 = vmax.f32 %v605, %v609
        %v732 = vmax.f32 %v731, %v613
        %v733 = vmax.f32 %v732, %v617
        %v734 = vmax.f32 %v606, %v610
        %v735 = vmax.f32 %v734, %v614
        %v736 = vmax.f32 %v735, %v618
        %v737 = vmax.f32 %v607, %v611
        %v738 = vmax.f32 %v737, %v615
        %v739 = vmax.f32 %v738, %v619
        %v740 = vmax.f32 %v620, %v624
        %v741 = vmax.f32 %v740, %v628
        %v742 = vmax.f32 %v741, %v632
        %v743 = vmax.f32 %v621, %v625
        %v744 = vmax.f32 %v743, %v629
        %v745 = vmax.f32 %v744, %v633
        %v746 = vmax.f32 %v622, %v626
        %v747 = vmax.f32 %v746, %v630
        %v748 = vmax.f32 %v747, %v634
        %v749 = vmax.f32 %v623, %v627
        %v750 = vmax.f32 %v749, %v631
        %v751 = vmax.f32 %v750, %v635
        %v752 = vmax.f32 %v636, %v640
        %v753 = vmax.f32 %v752, %v644
        %v754 = vmax.f32 %v753, %v648
        %v755 = vmax.f32 %v637, %v641
        %v756 = vmax.f32 %v755, %v645
        %v757 = vmax.f32 %v756, %v649
        %v758 = vmax.f32 %v638, %v642
        %v759 = vmax.f32 %v758, %v646
        %v760 = vmax.f32 %v759, %v650
        %v761 = vmax.f32 %v639, %v643
        %v762 = vmax.f32 %v761, %v647
        %v763 = vmax.f32 %v762, %v651
        %v764 = vmax.f32 %v652, %v656
        %v765 = vmax.f32 %v764, %v660
        %v766 = vmax.f32 %v765, %v664
        %v767 = vmax.f32 %v653, %v657
        %v768 = vmax.f32 %v767, %v661
        %v769 = vmax.f32 %v768, %v665
        %v770 = vmax.f32 %v654, %v658
        %v771 = vmax.f32 %v770, %v662
        %v772 = vmax.f32 %v771, %v666
        %v773 = vmax.f32 %v655, %v659
        %v774 = vmax.f32 %v773, %v663
        %v775 = vmax.f32 %v774, %v667
        %v776 = vmax.f32 %v668, %v672
        %v777 = vmax.f32 %v776, %v676
        %v778 = vmax.f32 %v777, %v680
        %v779 = vmax.f32 %v669, %v673
        %v780 = vmax.f32 %v779, %v677
        %v781 = vmax.f32 %v780, %v681
        %v782 = vmax.f32 %v670, %v674
        %v783 = vmax.f32 %v782, %v678
        %v784 = vmax.f32 %v783, %v682
        %v785 = vmax.f32 %v671, %v675
        %v786 = vmax.f32 %v785, %v679
        %v787 = vmax.f32 %v786, %v683
        %v788 = vmax.f32 %v684, %v688
        %v789 = vmax.f32 %v788, %v692
        %v790 = vmax.f32 %v789, %v696
        %v791 = vmax.f32 %v685, %v689
        %v792 = vmax.f32 %v791, %v693
        %v793 = vmax.f32 %v792, %v697
        %v794 = vmax.f32 %v686, %v690
        %v795 = vmax.f32 %v794, %v694
        %v796 = vmax.f32 %v795, %v698
        %v797 = vmax.f32 %v687, %v691
        %v798 = vmax.f32 %v797, %v695
        %v799 = vmax.f32 %v798, %v699
        %v800 = vmax.f32 %v700, %v704
        %v801 = vmax.f32 %v800, %v708
        %v802 = vmax.f32 %v801, %v712
        %v803 = vmax.f32 %v701, %v705
        %v804 = vmax.f32 %v803, %v709
        %v805 = vmax.f32 %v804, %v713
        %v806 = vmax.f32 %v702, %v706
        %v807 = vmax.f32 %v806, %v710
        %v808 = vmax.f32 %v807, %v714
        %v809 = vmax.f32 %v703, %v707
        %v810 = vmax.f32 %v809, %v711
        %v811 = vmax.f32 %v810, %v715
        %v844 = vcombine.high %v718, %v718
        %v845 = vcombine.high %v721, %v721
        %v846 = vcombine.high %v724, %v724
        %v847 = vcombine.high %v727, %v727
        %v848 = vcombine.high %v730, %v730
        %v849 = vcombine.high %v733, %v733
        %v850 = vcombine.high %v736, %v736
        %v851 = vcombine.high %v739, %v739
        %v852 = vcombine.high %v742, %v742
        %v853 = vcombine.high %v745, %v745
        %v854 = vcombine.high %v748, %v748
        %v855 = vcombine.high %v751, %v751
        %v856 = vcombine.high %v754, %v754
        %v857 = vcombine.high %v757, %v757
        %v858 = vcombine.high %v760, %v760
        %v859 = vcombine.high %v763, %v763
        %v860 = vcombine.high %v766, %v766
        %v861 = vcombine.high %v769, %v769
        %v862 = vcombine.high %v772, %v772
        %v863 = vcombine.high %v775, %v775
        %v864 = vcombine.high %v778, %v778
        %v865 = vcombine.high %v781, %v781
        %v866 = vcombine.high %v784, %v784
        %v867 = vcombine.high %v787, %v787
        %v868 = vcombine.high %v790, %v790
        %v869 = vcombine.high %v793, %v793
        %v870 = vcombine.high %v796, %v796
        %v871 = vcombine.high %v799, %v799
        %v872 = vcombine.high %v802, %v802
        %v873 = vcombine.high %v805, %v805
        %v874 = vcombine.high %v808, %v808
        %v875 = vcombine.high %v811, %v811
        %vm908 = vcmask 1043456
        %v909 = vsel %vm908, %v718, -inf
        %v910 = vrot.slane %v909, 4
        %v911 = vmax.f32 %v909, %v910
        %v912 = vrot.slane %v911, 2
        %v913 = vmax.f32 %v911, %v912
        %v914 = vrot.slane %v913, 1
        %v915 = vmax.f32 %v913, %v914
        %v916 = vsel %vm908, %v844, -inf
        %v917 = vrot.slane %v916, 4
        %v918 = vmax.f32 %v916, %v917
        %v919 = vrot.slane %v918, 2
        %v920 = vmax.f32 %v918, %v919
        %v921 = vrot.slane %v920, 1
        %v922 = vmax.f32 %v920, %v921
        %v923 = vsel %vm908, %v721, -inf
        %v924 = vrot.slane %v923, 4
        %v925 = vmax.f32 %v923, %v924
        %v926 = vrot.slane %v925, 2
        %v927 = vmax.f32 %v925, %v926
        %v928 = vrot.slane %v927, 1
        %v929 = vmax.f32 %v927, %v928
        %v930 = vsel %vm908, %v845, -inf
        %v931 = vrot.slane %v930, 4
        %v932 = vmax.f32 %v930, %v931
        %v933 = vrot.slane %v932, 2
        %v934 = vmax.f32 %v932, %v933
        %v935 = vrot.slane %v934, 1
        %v936 = vmax.f32 %v934, %v935
        %v937 = vsel %vm908, %v724, -inf
        %v938 = vrot.slane %v937, 4
        %v939 = vmax.f32 %v937, %v938
        %v940 = vrot.slane %v939, 2
        %v941 = vmax.f32 %v939, %v940
        %v942 = vrot.slane %v941, 1
        %v943 = vmax.f32 %v941, %v942
        %v944 = vsel %vm908, %v846, -inf
        %v945 = vrot.slane %v944, 4
        %v946 = vmax.f32 %v944, %v945
        %v947 = vrot.slane %v946, 2
        %v948 = vmax.f32 %v946, %v947
        %v949 = vrot.slane %v948, 1
        %v950 = vmax.f32 %v948, %v949
        %v951 = vsel %vm908, %v727, -inf
        %v952 = vrot.slane %v951, 4
        %v953 = vmax.f32 %v951, %v952
        %v954 = vrot.slane %v953, 2
        %v955 = vmax.f32 %v953, %v954
        %v956 = vrot.slane %v955, 1
        %v957 = vmax.f32 %v955, %v956
        %v958 = vsel %vm908, %v847, -inf
        %v959 = vrot.slane %v958, 4
        %v960 = vmax.f32 %v958, %v959
        %v961 = vrot.slane %v960, 2
        %v962 = vmax.f32 %v960, %v961
        %v963 = vrot.slane %v962, 1
        %v964 = vmax.f32 %v962, %v963
        %v965 = vsel %vm908, %v730, -inf
        %v966 = vrot.slane %v965, 4
        %v967 = vmax.f32 %v965, %v966
        %v968 = vrot.slane %v967, 2
        %v969 = vmax.f32 %v967, %v968
        %v970 = vrot.slane %v969, 1
        %v971 = vmax.f32 %v969, %v970
        %v972 = vsel %vm908, %v848, -inf
        %v973 = vrot.slane %v972, 4
        %v974 = vmax.f32 %v972, %v973
        %v975 = vrot.slane %v974, 2
        %v976 = vmax.f32 %v974, %v975
        %v977 = vrot.slane %v976, 1
        %v978 = vmax.f32 %v976, %v977
        %v979 = vsel %vm908, %v733, -inf
        %v980 = vrot.slane %v979, 4
        %v981 = vmax.f32 %v979, %v980
        %v982 = vrot.slane %v981, 2
        %v983 = vmax.f32 %v981, %v982
        %v984 = vrot.slane %v983, 1
        %v985 = vmax.f32 %v983, %v984
        %v986 = vsel %vm908, %v849, -inf
        %v987 = vrot.slane %v986, 4
        %v988 = vmax.f32 %v986, %v987
        %v989 = vrot.slane %v988, 2
        %v990 = vmax.f32 %v988, %v989
        %v991 = vrot.slane %v990, 1
        %v992 = vmax.f32 %v990, %v991
        %v993 = vsel %vm908, %v736, -inf
        %v994 = vrot.slane %v993, 4
        %v995 = vmax.f32 %v993, %v994
        %v996 = vrot.slane %v995, 2
        %v997 = vmax.f32 %v995, %v996
        %v998 = vrot.slane %v997, 1
        %v999 = vmax.f32 %v997, %v998
        %v1000 = vsel %vm908, %v850, -inf
        %v1001 = vrot.slane %v1000, 4
        %v1002 = vmax.f32 %v1000, %v1001
        %v1003 = vrot.slane %v1002, 2
        %v1004 = vmax.f32 %v1002, %v1003
        %v1005 = vrot.slane %v1004, 1
        %v1006 = vmax.f32 %v1004, %v1005
        %v1007 = vsel %vm908, %v739, -inf
        %v1008 = vrot.slane %v1007, 4
        %v1009 = vmax.f32 %v1007, %v1008
        %v1010 = vrot.slane %v1009, 2
        %v1011 = vmax.f32 %v1009, %v1010
        %v1012 = vrot.slane %v1011, 1
        %v1013 = vmax.f32 %v1011, %v1012
        %v1014 = vsel %vm908, %v851, -inf
        %v1015 = vrot.slane %v1014, 4
        %v1016 = vmax.f32 %v1014, %v1015
        %v1017 = vrot.slane %v1016, 2
        %v1018 = vmax.f32 %v1016, %v1017
        %v1019 = vrot.slane %v1018, 1
        %v1020 = vmax.f32 %v1018, %v1019
        %v1021 = vsel %vm908, %v742, -inf
        %v1022 = vrot.slane %v1021, 4
        %v1023 = vmax.f32 %v1021, %v1022
        %v1024 = vrot.slane %v1023, 2
        %v1025 = vmax.f32 %v1023, %v1024
        %v1026 = vrot.slane %v1025, 1
        %v1027 = vmax.f32 %v1025, %v1026
        %v1028 = vsel %vm908, %v852, -inf
        %v1029 = vrot.slane %v1028, 4
        %v1030 = vmax.f32 %v1028, %v1029
        %v1031 = vrot.slane %v1030, 2
        %v1032 = vmax.f32 %v1030, %v1031
        %v1033 = vrot.slane %v1032, 1
        %v1034 = vmax.f32 %v1032, %v1033
        %v1035 = vsel %vm908, %v745, -inf
        %v1036 = vrot.slane %v1035, 4
        %v1037 = vmax.f32 %v1035, %v1036
        %v1038 = vrot.slane %v1037, 2
        %v1039 = vmax.f32 %v1037, %v1038
        %v1040 = vrot.slane %v1039, 1
        %v1041 = vmax.f32 %v1039, %v1040
        %v1042 = vsel %vm908, %v853, -inf
        %v1043 = vrot.slane %v1042, 4
        %v1044 = vmax.f32 %v1042, %v1043
        %v1045 = vrot.slane %v1044, 2
        %v1046 = vmax.f32 %v1044, %v1045
        %v1047 = vrot.slane %v1046, 1
        %v1048 = vmax.f32 %v1046, %v1047
        %v1049 = vsel %vm908, %v748, -inf
        %v1050 = vrot.slane %v1049, 4
        %v1051 = vmax.f32 %v1049, %v1050
        %v1052 = vrot.slane %v1051, 2
        %v1053 = vmax.f32 %v1051, %v1052
        %v1054 = vrot.slane %v1053, 1
        %v1055 = vmax.f32 %v1053, %v1054
        %v1056 = vsel %vm908, %v854, -inf
        %v1057 = vrot.slane %v1056, 4
        %v1058 = vmax.f32 %v1056, %v1057
        %v1059 = vrot.slane %v1058, 2
        %v1060 = vmax.f32 %v1058, %v1059
        %v1061 = vrot.slane %v1060, 1
        %v1062 = vmax.f32 %v1060, %v1061
        %v1063 = vsel %vm908, %v751, -inf
        %v1064 = vrot.slane %v1063, 4
        %v1065 = vmax.f32 %v1063, %v1064
        %v1066 = vrot.slane %v1065, 2
        %v1067 = vmax.f32 %v1065, %v1066
        %v1068 = vrot.slane %v1067, 1
        %v1069 = vmax.f32 %v1067, %v1068
        %v1070 = vsel %vm908, %v855, -inf
        %v1071 = vrot.slane %v1070, 4
        %v1072 = vmax.f32 %v1070, %v1071
        %v1073 = vrot.slane %v1072, 2
        %v1074 = vmax.f32 %v1072, %v1073
        %v1075 = vrot.slane %v1074, 1
        %v1076 = vmax.f32 %v1074, %v1075
        %v1077 = vsel %vm908, %v754, -inf
        %v1078 = vrot.slane %v1077, 4
        %v1079 = vmax.f32 %v1077, %v1078
        %v1080 = vrot.slane %v1079, 2
        %v1081 = vmax.f32 %v1079, %v1080
        %v1082 = vrot.slane %v1081, 1
        %v1083 = vmax.f32 %v1081, %v1082
        %v1084 = vsel %vm908, %v856, -inf
        %v1085 = vrot.slane %v1084, 4
        %v1086 = vmax.f32 %v1084, %v1085
        %v1087 = vrot.slane %v1086, 2
        %v1088 = vmax.f32 %v1086, %v1087
        %v1089 = vrot.slane %v1088, 1
        %v1090 = vmax.f32 %v1088, %v1089
        %v1091 = vsel %vm908, %v757, -inf
        %v1092 = vrot.slane %v1091, 4
        %v1093 = vmax.f32 %v1091, %v1092
        %v1094 = vrot.slane %v1093, 2
        %v1095 = vmax.f32 %v1093, %v1094
        %v1096 = vrot.slane %v1095, 1
        %v1097 = vmax.f32 %v1095, %v1096
        %v1098 = vsel %vm908, %v857, -inf
        %v1099 = vrot.slane %v1098, 4
        %v1100 = vmax.f32 %v1098, %v1099
        %v1101 = vrot.slane %v1100, 2
        %v1102 = vmax.f32 %v1100, %v1101
        %v1103 = vrot.slane %v1102, 1
        %v1104 = vmax.f32 %v1102, %v1103
        %v1105 = vsel %vm908, %v760, -inf
        %v1106 = vrot.slane %v1105, 4
        %v1107 = vmax.f32 %v1105, %v1106
        %v1108 = vrot.slane %v1107, 2
        %v1109 = vmax.f32 %v1107, %v1108
        %v1110 = vrot.slane %v1109, 1
        %v1111 = vmax.f32 %v1109, %v1110
        %v1112 = vsel %vm908, %v858, -inf
        %v1113 = vrot.slane %v1112, 4
        %v1114 = vmax.f32 %v1112, %v1113
        %v1115 = vrot.slane %v1114, 2
        %v1116 = vmax.f32 %v1114, %v1115
        %v1117 = vrot.slane %v1116, 1
        %v1118 = vmax.f32 %v1116, %v1117
        %v1119 = vsel %vm908, %v763, -inf
        %v1120 = vrot.slane %v1119, 4
        %v1121 = vmax.f32 %v1119, %v1120
        %v1122 = vrot.slane %v1121, 2
        %v1123 = vmax.f32 %v1121, %v1122
        %v1124 = vrot.slane %v1123, 1
        %v1125 = vmax.f32 %v1123, %v1124
        %v1126 = vsel %vm908, %v859, -inf
        %v1127 = vrot.slane %v1126, 4
        %v1128 = vmax.f32 %v1126, %v1127
        %v1129 = vrot.slane %v1128, 2
        %v1130 = vmax.f32 %v1128, %v1129
        %v1131 = vrot.slane %v1130, 1
        %v1132 = vmax.f32 %v1130, %v1131
        %v1133 = vsel %vm908, %v766, -inf
        %v1134 = vrot.slane %v1133, 4
        %v1135 = vmax.f32 %v1133, %v1134
        %v1136 = vrot.slane %v1135, 2
        %v1137 = vmax.f32 %v1135, %v1136
        %v1138 = vrot.slane %v1137, 1
        %v1139 = vmax.f32 %v1137, %v1138
        %v1140 = vsel %vm908, %v860, -inf
        %v1141 = vrot.slane %v1140, 4
        %v1142 = vmax.f32 %v1140, %v1141
        %v1143 = vrot.slane %v1142, 2
        %v1144 = vmax.f32 %v1142, %v1143
        %v1145 = vrot.slane %v1144, 1
        %v1146 = vmax.f32 %v1144, %v1145
        %v1147 = vsel %vm908, %v769, -inf
        %v1148 = vrot.slane %v1147, 4
        %v1149 = vmax.f32 %v1147, %v1148
        %v1150 = vrot.slane %v1149, 2
        %v1151 = vmax.f32 %v1149, %v1150
        %v1152 = vrot.slane %v1151, 1
        %v1153 = vmax.f32 %v1151, %v1152
        %v1154 = vsel %vm908, %v861, -inf
        %v1155 = vrot.slane %v1154, 4
        %v1156 = vmax.f32 %v1154, %v1155
        %v1157 = vrot.slane %v1156, 2
        %v1158 = vmax.f32 %v1156, %v1157
        %v1159 = vrot.slane %v1158, 1
        %v1160 = vmax.f32 %v1158, %v1159
        %v1161 = vsel %vm908, %v772, -inf
        %v1162 = vrot.slane %v1161, 4
        %v1163 = vmax.f32 %v1161, %v1162
        %v1164 = vrot.slane %v1163, 2
        %v1165 = vmax.f32 %v1163, %v1164
        %v1166 = vrot.slane %v1165, 1
        %v1167 = vmax.f32 %v1165, %v1166
        %v1168 = vsel %vm908, %v862, -inf
        %v1169 = vrot.slane %v1168, 4
        %v1170 = vmax.f32 %v1168, %v1169
        %v1171 = vrot.slane %v1170, 2
        %v1172 = vmax.f32 %v1170, %v1171
        %v1173 = vrot.slane %v1172, 1
        %v1174 = vmax.f32 %v1172, %v1173
        %v1175 = vsel %vm908, %v775, -inf
        %v1176 = vrot.slane %v1175, 4
        %v1177 = vmax.f32 %v1175, %v1176
        %v1178 = vrot.slane %v1177, 2
        %v1179 = vmax.f32 %v1177, %v1178
        %v1180 = vrot.slane %v1179, 1
        %v1181 = vmax.f32 %v1179, %v1180
        %v1182 = vsel %vm908, %v863, -inf
        %v1183 = vrot.slane %v1182, 4
        %v1184 = vmax.f32 %v1182, %v1183
        %v1185 = vrot.slane %v1184, 2
        %v1186 = vmax.f32 %v1184, %v1185
        %v1187 = vrot.slane %v1186, 1
        %v1188 = vmax.f32 %v1186, %v1187
        %v1189 = vsel %vm908, %v778, -inf
        %v1190 = vrot.slane %v1189, 4
        %v1191 = vmax.f32 %v1189, %v1190
        %v1192 = vrot.slane %v1191, 2
        %v1193 = vmax.f32 %v1191, %v1192
        %v1194 = vrot.slane %v1193, 1
        %v1195 = vmax.f32 %v1193, %v1194
        %v1196 = vsel %vm908, %v864, -inf
        %v1197 = vrot.slane %v1196, 4
        %v1198 = vmax.f32 %v1196, %v1197
        %v1199 = vrot.slane %v1198, 2
        %v1200 = vmax.f32 %v1198, %v1199
        %v1201 = vrot.slane %v1200, 1
        %v1202 = vmax.f32 %v1200, %v1201
        %v1203 = vsel %vm908, %v781, -inf
        %v1204 = vrot.slane %v1203, 4
        %v1205 = vmax.f32 %v1203, %v1204
        %v1206 = vrot.slane %v1205, 2
        %v1207 = vmax.f32 %v1205, %v1206
        %v1208 = vrot.slane %v1207, 1
        %v1209 = vmax.f32 %v1207, %v1208
        %v1210 = vsel %vm908, %v865, -inf
        %v1211 = vrot.slane %v1210, 4
        %v1212 = vmax.f32 %v1210, %v1211
        %v1213 = vrot.slane %v1212, 2
        %v1214 = vmax.f32 %v1212, %v1213
        %v1215 = vrot.slane %v1214, 1
        %v1216 = vmax.f32 %v1214, %v1215
        %v1217 = vsel %vm908, %v784, -inf
        %v1218 = vrot.slane %v1217, 4
        %v1219 = vmax.f32 %v1217, %v1218
        %v1220 = vrot.slane %v1219, 2
        %v1221 = vmax.f32 %v1219, %v1220
        %v1222 = vrot.slane %v1221, 1
        %v1223 = vmax.f32 %v1221, %v1222
        %v1224 = vsel %vm908, %v866, -inf
        %v1225 = vrot.slane %v1224, 4
        %v1226 = vmax.f32 %v1224, %v1225
        %v1227 = vrot.slane %v1226, 2
        %v1228 = vmax.f32 %v1226, %v1227
        %v1229 = vrot.slane %v1228, 1
        %v1230 = vmax.f32 %v1228, %v1229
        %v1231 = vsel %vm908, %v787, -inf
        %v1232 = vrot.slane %v1231, 4
        %v1233 = vmax.f32 %v1231, %v1232
        %v1234 = vrot.slane %v1233, 2
        %v1235 = vmax.f32 %v1233, %v1234
        %v1236 = vrot.slane %v1235, 1
        %v1237 = vmax.f32 %v1235, %v1236
        %v1238 = vsel %vm908, %v867, -inf
        %v1239 = vrot.slane %v1238, 4
        %v1240 = vmax.f32 %v1238, %v1239
        %v1241 = vrot.slane %v1240, 2
        %v1242 = vmax.f32 %v1240, %v1241
        %v1243 = vrot.slane %v1242, 1
        %v1244 = vmax.f32 %v1242, %v1243
        %v1245 = vsel %vm908, %v790, -inf
        %v1246 = vrot.slane %v1245, 4
        %v1247 = vmax.f32 %v1245, %v1246
        %v1248 = vrot.slane %v1247, 2
        %v1249 = vmax.f32 %v1247, %v1248
        %v1250 = vrot.slane %v1249, 1
        %v1251 = vmax.f32 %v1249, %v1250
        %v1252 = vsel %vm908, %v868, -inf
        %v1253 = vrot.slane %v1252, 4
        %v1254 = vmax.f32 %v1252, %v1253
        %v1255 = vrot.slane %v1254, 2
        %v1256 = vmax.f32 %v1254, %v1255
        %v1257 = vrot.slane %v1256, 1
        %v1258 = vmax.f32 %v1256, %v1257
        %v1259 = vsel %vm908, %v793, -inf
        %v1260 = vrot.slane %v1259, 4
        %v1261 = vmax.f32 %v1259, %v1260
        %v1262 = vrot.slane %v1261, 2
        %v1263 = vmax.f32 %v1261, %v1262
        %v1264 = vrot.slane %v1263, 1
        %v1265 = vmax.f32 %v1263, %v1264
        %v1266 = vsel %vm908, %v869, -inf
        %v1267 = vrot.slane %v1266, 4
        %v1268 = vmax.f32 %v1266, %v1267
        %v1269 = vrot.slane %v1268, 2
        %v1270 = vmax.f32 %v1268, %v1269
        %v1271 = vrot.slane %v1270, 1
        %v1272 = vmax.f32 %v1270, %v1271
        %v1273 = vsel %vm908, %v796, -inf
        %v1274 = vrot.slane %v1273, 4
        %v1275 = vmax.f32 %v1273, %v1274
        %v1276 = vrot.slane %v1275, 2
        %v1277 = vmax.f32 %v1275, %v1276
        %v1278 = vrot.slane %v1277, 1
        %v1279 = vmax.f32 %v1277, %v1278
        %v1280 = vsel %vm908, %v870, -inf
        %v1281 = vrot.slane %v1280, 4
        %v1282 = vmax.f32 %v1280, %v1281
        %v1283 = vrot.slane %v1282, 2
        %v1284 = vmax.f32 %v1282, %v1283
        %v1285 = vrot.slane %v1284, 1
        %v1286 = vmax.f32 %v1284, %v1285
        %v1287 = vsel %vm908, %v799, -inf
        %v1288 = vrot.slane %v1287, 4
        %v1289 = vmax.f32 %v1287, %v1288
        %v1290 = vrot.slane %v1289, 2
        %v1291 = vmax.f32 %v1289, %v1290
        %v1292 = vrot.slane %v1291, 1
        %v1293 = vmax.f32 %v1291, %v1292
        %v1294 = vsel %vm908, %v871, -inf
        %v1295 = vrot.slane %v1294, 4
        %v1296 = vmax.f32 %v1294, %v1295
        %v1297 = vrot.slane %v1296, 2
        %v1298 = vmax.f32 %v1296, %v1297
        %v1299 = vrot.slane %v1298, 1
        %v1300 = vmax.f32 %v1298, %v1299
        %v1301 = vsel %vm908, %v802, -inf
        %v1302 = vrot.slane %v1301, 4
        %v1303 = vmax.f32 %v1301, %v1302
        %v1304 = vrot.slane %v1303, 2
        %v1305 = vmax.f32 %v1303, %v1304
        %v1306 = vrot.slane %v1305, 1
        %v1307 = vmax.f32 %v1305, %v1306
        %v1308 = vsel %vm908, %v872, -inf
        %v1309 = vrot.slane %v1308, 4
        %v1310 = vmax.f32 %v1308, %v1309
        %v1311 = vrot.slane %v1310, 2
        %v1312 = vmax.f32 %v1310, %v1311
        %v1313 = vrot.slane %v1312, 1
        %v1314 = vmax.f32 %v1312, %v1313
        %v1315 = vsel %vm908, %v805, -inf
        %v1316 = vrot.slane %v1315, 4
        %v1317 = vmax.f32 %v1315, %v1316
        %v1318 = vrot.slane %v1317, 2
        %v1319 = vmax.f32 %v1317, %v1318
        %v1320 = vrot.slane %v1319, 1
        %v1321 = vmax.f32 %v1319, %v1320
        %v1322 = vsel %vm908, %v873, -inf
        %v1323 = vrot.slane %v1322, 4
        %v1324 = vmax.f32 %v1322, %v1323
        %v1325 = vrot.slane %v1324, 2
        %v1326 = vmax.f32 %v1324, %v1325
        %v1327 = vrot.slane %v1326, 1
        %v1328 = vmax.f32 %v1326, %v1327
        %v1329 = vsel %vm908, %v808, -inf
        %v1330 = vrot.slane %v1329, 4
        %v1331 = vmax.f32 %v1329, %v1330
        %v1332 = vrot.slane %v1331, 2
        %v1333 = vmax.f32 %v1331, %v1332
        %v1334 = vrot.slane %v1333, 1
        %v1335 = vmax.f32 %v1333, %v1334
        %v1336 = vsel %vm908, %v874, -inf
        %v1337 = vrot.slane %v1336, 4
        %v1338 = vmax.f32 %v1336, %v1337
        %v1339 = vrot.slane %v1338, 2
        %v1340 = vmax.f32 %v1338, %v1339
        %v1341 = vrot.slane %v1340, 1
        %v1342 = vmax.f32 %v1340, %v1341
        %v1343 = vsel %vm908, %v811, -inf
        %v1344 = vrot.slane %v1343, 4
        %v1345 = vmax.f32 %v1343, %v1344
        %v1346 = vrot.slane %v1345, 2
        %v1347 = vmax.f32 %v1345, %v1346
        %v1348 = vrot.slane %v1347, 1
        %v1349 = vmax.f32 %v1347, %v1348
        %v1350 = vsel %vm908, %v875, -inf
        %v1351 = vrot.slane %v1350, 4
        %v1352 = vmax.f32 %v1350, %v1351
        %v1353 = vrot.slane %v1352, 2
        %v1354 = vmax.f32 %v1352, %v1353
        %v1355 = vrot.slane %v1354, 1
        %v1356 = vmax.f32 %v1354, %v1355
        %v1357 = vld [vmem:[%s472] sm:$0xff]
        %v1358 = vld [vmem:[%s472 + $0x8] sm:$0xff]
        %v1359 = vld [vmem:[%s472 + $0x10] sm:$0xff]
        %v1360 = vld [vmem:[%s472 + $0x18] sm:$0xff]
        %v1361 = vld [vmem:[%s472 + $0x20] sm:$0xff]
        %v1362 = vld [vmem:[%s472 + $0x28] sm:$0xff]
        %v1363 = vld [vmem:[%s472 + $0x30] sm:$0xff]
        %v1364 = vld [vmem:[%s472 + $0x38] sm:$0xff]
        %v1365 = vld [vmem:[%s472 + $0x40] sm:$0xff]
        %v1366 = vld [vmem:[%s472 + $0x48] sm:$0xff]
        %v1367 = vld [vmem:[%s472 + $0x50] sm:$0xff]
        %v1368 = vld [vmem:[%s472 + $0x58] sm:$0xff]
        %v1369 = vld [vmem:[%s472 + $0x60] sm:$0xff]
        %v1370 = vld [vmem:[%s472 + $0x68] sm:$0xff]
        %v1371 = vld [vmem:[%s472 + $0x70] sm:$0xff]
        %v1372 = vld [vmem:[%s472 + $0x78] sm:$0xff]
        %v1373 = vld [vmem:[%s472 + $0x80] sm:$0xff]
        %v1374 = vld [vmem:[%s472 + $0x88] sm:$0xff]
        %v1375 = vld [vmem:[%s472 + $0x90] sm:$0xff]
        %v1376 = vld [vmem:[%s472 + $0x98] sm:$0xff]
        %v1377 = vld [vmem:[%s472 + $0xa0] sm:$0xff]
        %v1378 = vld [vmem:[%s472 + $0xa8] sm:$0xff]
        %v1379 = vld [vmem:[%s472 + $0xb0] sm:$0xff]
        %v1380 = vld [vmem:[%s472 + $0xb8] sm:$0xff]
        %v1381 = vld [vmem:[%s472 + $0xc0] sm:$0xff]
        %v1382 = vld [vmem:[%s472 + $0xc8] sm:$0xff]
        %v1383 = vld [vmem:[%s472 + $0xd0] sm:$0xff]
        %v1384 = vld [vmem:[%s472 + $0xd8] sm:$0xff]
        %v1385 = vld [vmem:[%s472 + $0xe0] sm:$0xff]
        %v1386 = vld [vmem:[%s472 + $0xe8] sm:$0xff]
        %v1387 = vld [vmem:[%s472 + $0xf0] sm:$0xff]
        %v1388 = vld [vmem:[%s472 + $0xf8] sm:$0xff]
        %v1389 = vmax.f32 %v1357, %v1359
        %v1390 = vmax.f32 %v1358, %v1360
        %v1391 = vmax.f32 %v1361, %v1363
        %v1392 = vmax.f32 %v1362, %v1364
        %v1393 = vmax.f32 %v1365, %v1367
        %v1394 = vmax.f32 %v1366, %v1368
        %v1395 = vmax.f32 %v1369, %v1371
        %v1396 = vmax.f32 %v1370, %v1372
        %v1397 = vmax.f32 %v1373, %v1375
        %v1398 = vmax.f32 %v1374, %v1376
        %v1399 = vmax.f32 %v1377, %v1379
        %v1400 = vmax.f32 %v1378, %v1380
        %v1401 = vmax.f32 %v1381, %v1383
        %v1402 = vmax.f32 %v1382, %v1384
        %v1403 = vmax.f32 %v1385, %v1387
        %v1404 = vmax.f32 %v1386, %v1388
        %v1421 = vcombine.high %v1389, %v1389
        %v1423 = vunpack.c.l.s4 1983009808
        %v1424 = vunpack.c.0.s8 %v1423
        %v1425 = vlaneseq
        %v1426 = vshrl.u32 %v1425, 7
        %v1427 = vsub.s32 %v1424, %v1426
        %v1428 = vrot.slane %v1389, %v1427
        %v1430 = vunpack.c.l.s4 1983009808
        %v1431 = vunpack.c.0.s8 %v1430
        %v1432 = vlaneseq
        %v1433 = vshrl.u32 %v1432, 7
        %v1434 = vsub.s32 %v1431, %v1433
        %v1435 = vrot.slane %v1421, %v1434
        %v1436 = vcombine.high %v1428, %v1428
        %v1437 = vcombine.high %v1435, %v1435
        %v1438 = vcombine.high %v1390, %v1390
        %v1440 = vunpack.c.l.s4 1983009808
        %v1441 = vunpack.c.0.s8 %v1440
        %v1442 = vlaneseq
        %v1443 = vshrl.u32 %v1442, 7
        %v1444 = vsub.s32 %v1441, %v1443
        %v1445 = vrot.slane %v1390, %v1444
        %v1447 = vunpack.c.l.s4 1983009808
        %v1448 = vunpack.c.0.s8 %v1447
        %v1449 = vlaneseq
        %v1450 = vshrl.u32 %v1449, 7
        %v1451 = vsub.s32 %v1448, %v1450
        %v1452 = vrot.slane %v1438, %v1451
        %v1453 = vcombine.high %v1445, %v1445
        %v1454 = vcombine.high %v1452, %v1452
        %v1455 = vcombine.high %v1391, %v1391
        %v1457 = vunpack.c.l.s4 1983009808
        %v1458 = vunpack.c.0.s8 %v1457
        %v1459 = vlaneseq
        %v1460 = vshrl.u32 %v1459, 7
        %v1461 = vsub.s32 %v1458, %v1460
        %v1462 = vrot.slane %v1391, %v1461
        %v1464 = vunpack.c.l.s4 1983009808
        %v1465 = vunpack.c.0.s8 %v1464
        %v1466 = vlaneseq
        %v1467 = vshrl.u32 %v1466, 7
        %v1468 = vsub.s32 %v1465, %v1467
        %v1469 = vrot.slane %v1455, %v1468
        %v1470 = vcombine.high %v1462, %v1462
        %v1471 = vcombine.high %v1469, %v1469
        %v1472 = vcombine.high %v1392, %v1392
        %v1474 = vunpack.c.l.s4 1983009808
        %v1475 = vunpack.c.0.s8 %v1474
        %v1476 = vlaneseq
        %v1477 = vshrl.u32 %v1476, 7
        %v1478 = vsub.s32 %v1475, %v1477
        %v1479 = vrot.slane %v1392, %v1478
        %v1481 = vunpack.c.l.s4 1983009808
        %v1482 = vunpack.c.0.s8 %v1481
        %v1483 = vlaneseq
        %v1484 = vshrl.u32 %v1483, 7
        %v1485 = vsub.s32 %v1482, %v1484
        %v1486 = vrot.slane %v1472, %v1485
        %v1487 = vcombine.high %v1479, %v1479
        %v1488 = vcombine.high %v1486, %v1486
        %v1489 = vcombine.high %v1393, %v1393
        %v1491 = vunpack.c.l.s4 1983009808
        %v1492 = vunpack.c.0.s8 %v1491
        %v1493 = vlaneseq
        %v1494 = vshrl.u32 %v1493, 7
        %v1495 = vsub.s32 %v1492, %v1494
        %v1496 = vrot.slane %v1393, %v1495
        %v1498 = vunpack.c.l.s4 1983009808
        %v1499 = vunpack.c.0.s8 %v1498
        %v1500 = vlaneseq
        %v1501 = vshrl.u32 %v1500, 7
        %v1502 = vsub.s32 %v1499, %v1501
        %v1503 = vrot.slane %v1489, %v1502
        %v1504 = vcombine.high %v1496, %v1496
        %v1505 = vcombine.high %v1503, %v1503
        %v1506 = vcombine.high %v1394, %v1394
        %v1508 = vunpack.c.l.s4 1983009808
        %v1509 = vunpack.c.0.s8 %v1508
        %v1510 = vlaneseq
        %v1511 = vshrl.u32 %v1510, 7
        %v1512 = vsub.s32 %v1509, %v1511
        %v1513 = vrot.slane %v1394, %v1512
        %v1515 = vunpack.c.l.s4 1983009808
        %v1516 = vunpack.c.0.s8 %v1515
        %v1517 = vlaneseq
        %v1518 = vshrl.u32 %v1517, 7
        %v1519 = vsub.s32 %v1516, %v1518
        %v1520 = vrot.slane %v1506, %v1519
        %v1521 = vcombine.high %v1513, %v1513
        %v1522 = vcombine.high %v1520, %v1520
        %v1523 = vcombine.high %v1395, %v1395
        %v1525 = vunpack.c.l.s4 1983009808
        %v1526 = vunpack.c.0.s8 %v1525
        %v1527 = vlaneseq
        %v1528 = vshrl.u32 %v1527, 7
        %v1529 = vsub.s32 %v1526, %v1528
        %v1530 = vrot.slane %v1395, %v1529
        %v1532 = vunpack.c.l.s4 1983009808
        %v1533 = vunpack.c.0.s8 %v1532
        %v1534 = vlaneseq
        %v1535 = vshrl.u32 %v1534, 7
        %v1536 = vsub.s32 %v1533, %v1535
        %v1537 = vrot.slane %v1523, %v1536
        %v1538 = vcombine.high %v1530, %v1530
        %v1539 = vcombine.high %v1537, %v1537
        %v1540 = vcombine.high %v1396, %v1396
        %v1542 = vunpack.c.l.s4 1983009808
        %v1543 = vunpack.c.0.s8 %v1542
        %v1544 = vlaneseq
        %v1545 = vshrl.u32 %v1544, 7
        %v1546 = vsub.s32 %v1543, %v1545
        %v1547 = vrot.slane %v1396, %v1546
        %v1549 = vunpack.c.l.s4 1983009808
        %v1550 = vunpack.c.0.s8 %v1549
        %v1551 = vlaneseq
        %v1552 = vshrl.u32 %v1551, 7
        %v1553 = vsub.s32 %v1550, %v1552
        %v1554 = vrot.slane %v1540, %v1553
        %v1555 = vcombine.high %v1547, %v1547
        %v1556 = vcombine.high %v1554, %v1554
        %v1557 = vcombine.high %v1397, %v1397
        %v1559 = vunpack.c.l.s4 1983009808
        %v1560 = vunpack.c.0.s8 %v1559
        %v1561 = vlaneseq
        %v1562 = vshrl.u32 %v1561, 7
        %v1563 = vsub.s32 %v1560, %v1562
        %v1564 = vrot.slane %v1397, %v1563
        %v1566 = vunpack.c.l.s4 1983009808
        %v1567 = vunpack.c.0.s8 %v1566
        %v1568 = vlaneseq
        %v1569 = vshrl.u32 %v1568, 7
        %v1570 = vsub.s32 %v1567, %v1569
        %v1571 = vrot.slane %v1557, %v1570
        %v1572 = vcombine.high %v1564, %v1564
        %v1573 = vcombine.high %v1571, %v1571
        %v1574 = vcombine.high %v1398, %v1398
        %v1576 = vunpack.c.l.s4 1983009808
        %v1577 = vunpack.c.0.s8 %v1576
        %v1578 = vlaneseq
        %v1579 = vshrl.u32 %v1578, 7
        %v1580 = vsub.s32 %v1577, %v1579
        %v1581 = vrot.slane %v1398, %v1580
        %v1583 = vunpack.c.l.s4 1983009808
        %v1584 = vunpack.c.0.s8 %v1583
        %v1585 = vlaneseq
        %v1586 = vshrl.u32 %v1585, 7
        %v1587 = vsub.s32 %v1584, %v1586
        %v1588 = vrot.slane %v1574, %v1587
        %v1589 = vcombine.high %v1581, %v1581
        %v1590 = vcombine.high %v1588, %v1588
        %v1591 = vcombine.high %v1399, %v1399
        %v1593 = vunpack.c.l.s4 1983009808
        %v1594 = vunpack.c.0.s8 %v1593
        %v1595 = vlaneseq
        %v1596 = vshrl.u32 %v1595, 7
        %v1597 = vsub.s32 %v1594, %v1596
        %v1598 = vrot.slane %v1399, %v1597
        %v1600 = vunpack.c.l.s4 1983009808
        %v1601 = vunpack.c.0.s8 %v1600
        %v1602 = vlaneseq
        %v1603 = vshrl.u32 %v1602, 7
        %v1604 = vsub.s32 %v1601, %v1603
        %v1605 = vrot.slane %v1591, %v1604
        %v1606 = vcombine.high %v1598, %v1598
        %v1607 = vcombine.high %v1605, %v1605
        %v1608 = vcombine.high %v1400, %v1400
        %v1610 = vunpack.c.l.s4 1983009808
        %v1611 = vunpack.c.0.s8 %v1610
        %v1612 = vlaneseq
        %v1613 = vshrl.u32 %v1612, 7
        %v1614 = vsub.s32 %v1611, %v1613
        %v1615 = vrot.slane %v1400, %v1614
        %v1617 = vunpack.c.l.s4 1983009808
        %v1618 = vunpack.c.0.s8 %v1617
        %v1619 = vlaneseq
        %v1620 = vshrl.u32 %v1619, 7
        %v1621 = vsub.s32 %v1618, %v1620
        %v1622 = vrot.slane %v1608, %v1621
        %v1623 = vcombine.high %v1615, %v1615
        %v1624 = vcombine.high %v1622, %v1622
        %v1625 = vcombine.high %v1401, %v1401
        %v1627 = vunpack.c.l.s4 1983009808
        %v1628 = vunpack.c.0.s8 %v1627
        %v1629 = vlaneseq
        %v1630 = vshrl.u32 %v1629, 7
        %v1631 = vsub.s32 %v1628, %v1630
        %v1632 = vrot.slane %v1401, %v1631
        %v1634 = vunpack.c.l.s4 1983009808
        %v1635 = vunpack.c.0.s8 %v1634
        %v1636 = vlaneseq
        %v1637 = vshrl.u32 %v1636, 7
        %v1638 = vsub.s32 %v1635, %v1637
        %v1639 = vrot.slane %v1625, %v1638
        %v1640 = vcombine.high %v1632, %v1632
        %v1641 = vcombine.high %v1639, %v1639
        %v1642 = vcombine.high %v1402, %v1402
        %v1644 = vunpack.c.l.s4 1983009808
        %v1645 = vunpack.c.0.s8 %v1644
        %v1646 = vlaneseq
        %v1647 = vshrl.u32 %v1646, 7
        %v1648 = vsub.s32 %v1645, %v1647
        %v1649 = vrot.slane %v1402, %v1648
        %v1651 = vunpack.c.l.s4 1983009808
        %v1652 = vunpack.c.0.s8 %v1651
        %v1653 = vlaneseq
        %v1654 = vshrl.u32 %v1653, 7
        %v1655 = vsub.s32 %v1652, %v1654
        %v1656 = vrot.slane %v1642, %v1655
        %v1657 = vcombine.high %v1649, %v1649
        %v1658 = vcombine.high %v1656, %v1656
        %v1659 = vcombine.high %v1403, %v1403
        %v1661 = vunpack.c.l.s4 1983009808
        %v1662 = vunpack.c.0.s8 %v1661
        %v1663 = vlaneseq
        %v1664 = vshrl.u32 %v1663, 7
        %v1665 = vsub.s32 %v1662, %v1664
        %v1666 = vrot.slane %v1403, %v1665
        %v1668 = vunpack.c.l.s4 1983009808
        %v1669 = vunpack.c.0.s8 %v1668
        %v1670 = vlaneseq
        %v1671 = vshrl.u32 %v1670, 7
        %v1672 = vsub.s32 %v1669, %v1671
        %v1673 = vrot.slane %v1659, %v1672
        %v1674 = vcombine.high %v1666, %v1666
        %v1675 = vcombine.high %v1673, %v1673
        %v1676 = vcombine.high %v1404, %v1404
        %v1678 = vunpack.c.l.s4 1983009808
        %v1679 = vunpack.c.0.s8 %v1678
        %v1680 = vlaneseq
        %v1681 = vshrl.u32 %v1680, 7
        %v1682 = vsub.s32 %v1679, %v1681
        %v1683 = vrot.slane %v1404, %v1682
        %v1685 = vunpack.c.l.s4 1983009808
        %v1686 = vunpack.c.0.s8 %v1685
        %v1687 = vlaneseq
        %v1688 = vshrl.u32 %v1687, 7
        %v1689 = vsub.s32 %v1686, %v1688
        %v1690 = vrot.slane %v1676, %v1689
        %v1691 = vcombine.high %v1683, %v1683
        %v1692 = vcombine.high %v1690, %v1690
        %vm1757 = vcmask 1041408
        %v1758 = vsel %vm1757, %v1428, -inf
        %v1759 = vrot.slane %v1758, 4
        %v1760 = vmax.f32 %v1758, %v1759
        %v1761 = vrot.slane %v1760, 2
        %v1762 = vmax.f32 %v1760, %v1761
        %v1763 = vrot.slane %v1762, 1
        %v1764 = vmax.f32 %v1762, %v1763
        %v1765 = vsel %vm1757, %v1436, -inf
        %v1766 = vrot.slane %v1765, 4
        %v1767 = vmax.f32 %v1765, %v1766
        %v1768 = vrot.slane %v1767, 2
        %v1769 = vmax.f32 %v1767, %v1768
        %v1770 = vrot.slane %v1769, 1
        %v1771 = vmax.f32 %v1769, %v1770
        %v1772 = vsel %vm1757, %v1435, -inf
        %v1773 = vrot.slane %v1772, 4
        %v1774 = vmax.f32 %v1772, %v1773
        %v1775 = vrot.slane %v1774, 2
        %v1776 = vmax.f32 %v1774, %v1775
        %v1777 = vrot.slane %v1776, 1
        %v1778 = vmax.f32 %v1776, %v1777
        %v1779 = vsel %vm1757, %v1437, -inf
        %v1780 = vrot.slane %v1779, 4
        %v1781 = vmax.f32 %v1779, %v1780
        %v1782 = vrot.slane %v1781, 2
        %v1783 = vmax.f32 %v1781, %v1782
        %v1784 = vrot.slane %v1783, 1
        %v1785 = vmax.f32 %v1783, %v1784
        %v1786 = vsel %vm1757, %v1445, -inf
        %v1787 = vrot.slane %v1786, 4
        %v1788 = vmax.f32 %v1786, %v1787
        %v1789 = vrot.slane %v1788, 2
        %v1790 = vmax.f32 %v1788, %v1789
        %v1791 = vrot.slane %v1790, 1
        %v1792 = vmax.f32 %v1790, %v1791
        %v1793 = vsel %vm1757, %v1453, -inf
        %v1794 = vrot.slane %v1793, 4
        %v1795 = vmax.f32 %v1793, %v1794
        %v1796 = vrot.slane %v1795, 2
        %v1797 = vmax.f32 %v1795, %v1796
        %v1798 = vrot.slane %v1797, 1
        %v1799 = vmax.f32 %v1797, %v1798
        %v1800 = vsel %vm1757, %v1452, -inf
        %v1801 = vrot.slane %v1800, 4
        %v1802 = vmax.f32 %v1800, %v1801
        %v1803 = vrot.slane %v1802, 2
        %v1804 = vmax.f32 %v1802, %v1803
        %v1805 = vrot.slane %v1804, 1
        %v1806 = vmax.f32 %v1804, %v1805
        %v1807 = vsel %vm1757, %v1454, -inf
        %v1808 = vrot.slane %v1807, 4
        %v1809 = vmax.f32 %v1807, %v1808
        %v1810 = vrot.slane %v1809, 2
        %v1811 = vmax.f32 %v1809, %v1810
        %v1812 = vrot.slane %v1811, 1
        %v1813 = vmax.f32 %v1811, %v1812
        %v1814 = vsel %vm1757, %v1462, -inf
        %v1815 = vrot.slane %v1814, 4
        %v1816 = vmax.f32 %v1814, %v1815
        %v1817 = vrot.slane %v1816, 2
        %v1818 = vmax.f32 %v1816, %v1817
        %v1819 = vrot.slane %v1818, 1
        %v1820 = vmax.f32 %v1818, %v1819
        %v1821 = vsel %vm1757, %v1470, -inf
        %v1822 = vrot.slane %v1821, 4
        %v1823 = vmax.f32 %v1821, %v1822
        %v1824 = vrot.slane %v1823, 2
        %v1825 = vmax.f32 %v1823, %v1824
        %v1826 = vrot.slane %v1825, 1
        %v1827 = vmax.f32 %v1825, %v1826
        %v1828 = vsel %vm1757, %v1469, -inf
        %v1829 = vrot.slane %v1828, 4
        %v1830 = vmax.f32 %v1828, %v1829
        %v1831 = vrot.slane %v1830, 2
        %v1832 = vmax.f32 %v1830, %v1831
        %v1833 = vrot.slane %v1832, 1
        %v1834 = vmax.f32 %v1832, %v1833
        %v1835 = vsel %vm1757, %v1471, -inf
        %v1836 = vrot.slane %v1835, 4
        %v1837 = vmax.f32 %v1835, %v1836
        %v1838 = vrot.slane %v1837, 2
        %v1839 = vmax.f32 %v1837, %v1838
        %v1840 = vrot.slane %v1839, 1
        %v1841 = vmax.f32 %v1839, %v1840
        %v1842 = vsel %vm1757, %v1479, -inf
        %v1843 = vrot.slane %v1842, 4
        %v1844 = vmax.f32 %v1842, %v1843
        %v1845 = vrot.slane %v1844, 2
        %v1846 = vmax.f32 %v1844, %v1845
        %v1847 = vrot.slane %v1846, 1
        %v1848 = vmax.f32 %v1846, %v1847
        %v1849 = vsel %vm1757, %v1487, -inf
        %v1850 = vrot.slane %v1849, 4
        %v1851 = vmax.f32 %v1849, %v1850
        %v1852 = vrot.slane %v1851, 2
        %v1853 = vmax.f32 %v1851, %v1852
        %v1854 = vrot.slane %v1853, 1
        %v1855 = vmax.f32 %v1853, %v1854
        %v1856 = vsel %vm1757, %v1486, -inf
        %v1857 = vrot.slane %v1856, 4
        %v1858 = vmax.f32 %v1856, %v1857
        %v1859 = vrot.slane %v1858, 2
        %v1860 = vmax.f32 %v1858, %v1859
        %v1861 = vrot.slane %v1860, 1
        %v1862 = vmax.f32 %v1860, %v1861
        %v1863 = vsel %vm1757, %v1488, -inf
        %v1864 = vrot.slane %v1863, 4
        %v1865 = vmax.f32 %v1863, %v1864
        %v1866 = vrot.slane %v1865, 2
        %v1867 = vmax.f32 %v1865, %v1866
        %v1868 = vrot.slane %v1867, 1
        %v1869 = vmax.f32 %v1867, %v1868
        %v1870 = vsel %vm1757, %v1496, -inf
        %v1871 = vrot.slane %v1870, 4
        %v1872 = vmax.f32 %v1870, %v1871
        %v1873 = vrot.slane %v1872, 2
        %v1874 = vmax.f32 %v1872, %v1873
        %v1875 = vrot.slane %v1874, 1
        %v1876 = vmax.f32 %v1874, %v1875
        %v1877 = vsel %vm1757, %v1504, -inf
        %v1878 = vrot.slane %v1877, 4
        %v1879 = vmax.f32 %v1877, %v1878
        %v1880 = vrot.slane %v1879, 2
        %v1881 = vmax.f32 %v1879, %v1880
        %v1882 = vrot.slane %v1881, 1
        %v1883 = vmax.f32 %v1881, %v1882
        %v1884 = vsel %vm1757, %v1503, -inf
        %v1885 = vrot.slane %v1884, 4
        %v1886 = vmax.f32 %v1884, %v1885
        %v1887 = vrot.slane %v1886, 2
        %v1888 = vmax.f32 %v1886, %v1887
        %v1889 = vrot.slane %v1888, 1
        %v1890 = vmax.f32 %v1888, %v1889
        %v1891 = vsel %vm1757, %v1505, -inf
        %v1892 = vrot.slane %v1891, 4
        %v1893 = vmax.f32 %v1891, %v1892
        %v1894 = vrot.slane %v1893, 2
        %v1895 = vmax.f32 %v1893, %v1894
        %v1896 = vrot.slane %v1895, 1
        %v1897 = vmax.f32 %v1895, %v1896
        %v1898 = vsel %vm1757, %v1513, -inf
        %v1899 = vrot.slane %v1898, 4
        %v1900 = vmax.f32 %v1898, %v1899
        %v1901 = vrot.slane %v1900, 2
        %v1902 = vmax.f32 %v1900, %v1901
        %v1903 = vrot.slane %v1902, 1
        %v1904 = vmax.f32 %v1902, %v1903
        %v1905 = vsel %vm1757, %v1521, -inf
        %v1906 = vrot.slane %v1905, 4
        %v1907 = vmax.f32 %v1905, %v1906
        %v1908 = vrot.slane %v1907, 2
        %v1909 = vmax.f32 %v1907, %v1908
        %v1910 = vrot.slane %v1909, 1
        %v1911 = vmax.f32 %v1909, %v1910
        %v1912 = vsel %vm1757, %v1520, -inf
        %v1913 = vrot.slane %v1912, 4
        %v1914 = vmax.f32 %v1912, %v1913
        %v1915 = vrot.slane %v1914, 2
        %v1916 = vmax.f32 %v1914, %v1915
        %v1917 = vrot.slane %v1916, 1
        %v1918 = vmax.f32 %v1916, %v1917
        %v1919 = vsel %vm1757, %v1522, -inf
        %v1920 = vrot.slane %v1919, 4
        %v1921 = vmax.f32 %v1919, %v1920
        %v1922 = vrot.slane %v1921, 2
        %v1923 = vmax.f32 %v1921, %v1922
        %v1924 = vrot.slane %v1923, 1
        %v1925 = vmax.f32 %v1923, %v1924
        %v1926 = vsel %vm1757, %v1530, -inf
        %v1927 = vrot.slane %v1926, 4
        %v1928 = vmax.f32 %v1926, %v1927
        %v1929 = vrot.slane %v1928, 2
        %v1930 = vmax.f32 %v1928, %v1929
        %v1931 = vrot.slane %v1930, 1
        %v1932 = vmax.f32 %v1930, %v1931
        %v1933 = vsel %vm1757, %v1538, -inf
        %v1934 = vrot.slane %v1933, 4
        %v1935 = vmax.f32 %v1933, %v1934
        %v1936 = vrot.slane %v1935, 2
        %v1937 = vmax.f32 %v1935, %v1936
        %v1938 = vrot.slane %v1937, 1
        %v1939 = vmax.f32 %v1937, %v1938
        %v1940 = vsel %vm1757, %v1537, -inf
        %v1941 = vrot.slane %v1940, 4
        %v1942 = vmax.f32 %v1940, %v1941
        %v1943 = vrot.slane %v1942, 2
        %v1944 = vmax.f32 %v1942, %v1943
        %v1945 = vrot.slane %v1944, 1
        %v1946 = vmax.f32 %v1944, %v1945
        %v1947 = vsel %vm1757, %v1539, -inf
        %v1948 = vrot.slane %v1947, 4
        %v1949 = vmax.f32 %v1947, %v1948
        %v1950 = vrot.slane %v1949, 2
        %v1951 = vmax.f32 %v1949, %v1950
        %v1952 = vrot.slane %v1951, 1
        %v1953 = vmax.f32 %v1951, %v1952
        %v1954 = vsel %vm1757, %v1547, -inf
        %v1955 = vrot.slane %v1954, 4
        %v1956 = vmax.f32 %v1954, %v1955
        %v1957 = vrot.slane %v1956, 2
        %v1958 = vmax.f32 %v1956, %v1957
        %v1959 = vrot.slane %v1958, 1
        %v1960 = vmax.f32 %v1958, %v1959
        %v1961 = vsel %vm1757, %v1555, -inf
        %v1962 = vrot.slane %v1961, 4
        %v1963 = vmax.f32 %v1961, %v1962
        %v1964 = vrot.slane %v1963, 2
        %v1965 = vmax.f32 %v1963, %v1964
        %v1966 = vrot.slane %v1965, 1
        %v1967 = vmax.f32 %v1965, %v1966
        %v1968 = vsel %vm1757, %v1554, -inf
        %v1969 = vrot.slane %v1968, 4
        %v1970 = vmax.f32 %v1968, %v1969
        %v1971 = vrot.slane %v1970, 2
        %v1972 = vmax.f32 %v1970, %v1971
        %v1973 = vrot.slane %v1972, 1
        %v1974 = vmax.f32 %v1972, %v1973
        %v1975 = vsel %vm1757, %v1556, -inf
        %v1976 = vrot.slane %v1975, 4
        %v1977 = vmax.f32 %v1975, %v1976
        %v1978 = vrot.slane %v1977, 2
        %v1979 = vmax.f32 %v1977, %v1978
        %v1980 = vrot.slane %v1979, 1
        %v1981 = vmax.f32 %v1979, %v1980
        %v1982 = vsel %vm1757, %v1564, -inf
        %v1983 = vrot.slane %v1982, 4
        %v1984 = vmax.f32 %v1982, %v1983
        %v1985 = vrot.slane %v1984, 2
        %v1986 = vmax.f32 %v1984, %v1985
        %v1987 = vrot.slane %v1986, 1
        %v1988 = vmax.f32 %v1986, %v1987
        %v1989 = vsel %vm1757, %v1572, -inf
        %v1990 = vrot.slane %v1989, 4
        %v1991 = vmax.f32 %v1989, %v1990
        %v1992 = vrot.slane %v1991, 2
        %v1993 = vmax.f32 %v1991, %v1992
        %v1994 = vrot.slane %v1993, 1
        %v1995 = vmax.f32 %v1993, %v1994
        %v1996 = vsel %vm1757, %v1571, -inf
        %v1997 = vrot.slane %v1996, 4
        %v1998 = vmax.f32 %v1996, %v1997
        %v1999 = vrot.slane %v1998, 2
        %v2000 = vmax.f32 %v1998, %v1999
        %v2001 = vrot.slane %v2000, 1
        %v2002 = vmax.f32 %v2000, %v2001
        %v2003 = vsel %vm1757, %v1573, -inf
        %v2004 = vrot.slane %v2003, 4
        %v2005 = vmax.f32 %v2003, %v2004
        %v2006 = vrot.slane %v2005, 2
        %v2007 = vmax.f32 %v2005, %v2006
        %v2008 = vrot.slane %v2007, 1
        %v2009 = vmax.f32 %v2007, %v2008
        %v2010 = vsel %vm1757, %v1581, -inf
        %v2011 = vrot.slane %v2010, 4
        %v2012 = vmax.f32 %v2010, %v2011
        %v2013 = vrot.slane %v2012, 2
        %v2014 = vmax.f32 %v2012, %v2013
        %v2015 = vrot.slane %v2014, 1
        %v2016 = vmax.f32 %v2014, %v2015
        %v2017 = vsel %vm1757, %v1589, -inf
        %v2018 = vrot.slane %v2017, 4
        %v2019 = vmax.f32 %v2017, %v2018
        %v2020 = vrot.slane %v2019, 2
        %v2021 = vmax.f32 %v2019, %v2020
        %v2022 = vrot.slane %v2021, 1
        %v2023 = vmax.f32 %v2021, %v2022
        %v2024 = vsel %vm1757, %v1588, -inf
        %v2025 = vrot.slane %v2024, 4
        %v2026 = vmax.f32 %v2024, %v2025
        %v2027 = vrot.slane %v2026, 2
        %v2028 = vmax.f32 %v2026, %v2027
        %v2029 = vrot.slane %v2028, 1
        %v2030 = vmax.f32 %v2028, %v2029
        %v2031 = vsel %vm1757, %v1590, -inf
        %v2032 = vrot.slane %v2031, 4
        %v2033 = vmax.f32 %v2031, %v2032
        %v2034 = vrot.slane %v2033, 2
        %v2035 = vmax.f32 %v2033, %v2034
        %v2036 = vrot.slane %v2035, 1
        %v2037 = vmax.f32 %v2035, %v2036
        %v2038 = vsel %vm1757, %v1598, -inf
        %v2039 = vrot.slane %v2038, 4
        %v2040 = vmax.f32 %v2038, %v2039
        %v2041 = vrot.slane %v2040, 2
        %v2042 = vmax.f32 %v2040, %v2041
        %v2043 = vrot.slane %v2042, 1
        %v2044 = vmax.f32 %v2042, %v2043
        %v2045 = vsel %vm1757, %v1606, -inf
        %v2046 = vrot.slane %v2045, 4
        %v2047 = vmax.f32 %v2045, %v2046
        %v2048 = vrot.slane %v2047, 2
        %v2049 = vmax.f32 %v2047, %v2048
        %v2050 = vrot.slane %v2049, 1
        %v2051 = vmax.f32 %v2049, %v2050
        %v2052 = vsel %vm1757, %v1605, -inf
        %v2053 = vrot.slane %v2052, 4
        %v2054 = vmax.f32 %v2052, %v2053
        %v2055 = vrot.slane %v2054, 2
        %v2056 = vmax.f32 %v2054, %v2055
        %v2057 = vrot.slane %v2056, 1
        %v2058 = vmax.f32 %v2056, %v2057
        %v2059 = vsel %vm1757, %v1607, -inf
        %v2060 = vrot.slane %v2059, 4
        %v2061 = vmax.f32 %v2059, %v2060
        %v2062 = vrot.slane %v2061, 2
        %v2063 = vmax.f32 %v2061, %v2062
        %v2064 = vrot.slane %v2063, 1
        %v2065 = vmax.f32 %v2063, %v2064
        %v2066 = vsel %vm1757, %v1615, -inf
        %v2067 = vrot.slane %v2066, 4
        %v2068 = vmax.f32 %v2066, %v2067
        %v2069 = vrot.slane %v2068, 2
        %v2070 = vmax.f32 %v2068, %v2069
        %v2071 = vrot.slane %v2070, 1
        %v2072 = vmax.f32 %v2070, %v2071
        %v2073 = vsel %vm1757, %v1623, -inf
        %v2074 = vrot.slane %v2073, 4
        %v2075 = vmax.f32 %v2073, %v2074
        %v2076 = vrot.slane %v2075, 2
        %v2077 = vmax.f32 %v2075, %v2076
        %v2078 = vrot.slane %v2077, 1
        %v2079 = vmax.f32 %v2077, %v2078
        %v2080 = vsel %vm1757, %v1622, -inf
        %v2081 = vrot.slane %v2080, 4
        %v2082 = vmax.f32 %v2080, %v2081
        %v2083 = vrot.slane %v2082, 2
        %v2084 = vmax.f32 %v2082, %v2083
        %v2085 = vrot.slane %v2084, 1
        %v2086 = vmax.f32 %v2084, %v2085
        %v2087 = vsel %vm1757, %v1624, -inf
        %v2088 = vrot.slane %v2087, 4
        %v2089 = vmax.f32 %v2087, %v2088
        %v2090 = vrot.slane %v2089, 2
        %v2091 = vmax.f32 %v2089, %v2090
        %v2092 = vrot.slane %v2091, 1
        %v2093 = vmax.f32 %v2091, %v2092
        %v2094 = vsel %vm1757, %v1632, -inf
        %v2095 = vrot.slane %v2094, 4
        %v2096 = vmax.f32 %v2094, %v2095
        %v2097 = vrot.slane %v2096, 2
        %v2098 = vmax.f32 %v2096, %v2097
        %v2099 = vrot.slane %v2098, 1
        %v2100 = vmax.f32 %v2098, %v2099
        %v2101 = vsel %vm1757, %v1640, -inf
        %v2102 = vrot.slane %v2101, 4
        %v2103 = vmax.f32 %v2101, %v2102
        %v2104 = vrot.slane %v2103, 2
        %v2105 = vmax.f32 %v2103, %v2104
        %v2106 = vrot.slane %v2105, 1
        %v2107 = vmax.f32 %v2105, %v2106
        %v2108 = vsel %vm1757, %v1639, -inf
        %v2109 = vrot.slane %v2108, 4
        %v2110 = vmax.f32 %v2108, %v2109
        %v2111 = vrot.slane %v2110, 2
        %v2112 = vmax.f32 %v2110, %v2111
        %v2113 = vrot.slane %v2112, 1
        %v2114 = vmax.f32 %v2112, %v2113
        %v2115 = vsel %vm1757, %v1641, -inf
        %v2116 = vrot.slane %v2115, 4
        %v2117 = vmax.f32 %v2115, %v2116
        %v2118 = vrot.slane %v2117, 2
        %v2119 = vmax.f32 %v2117, %v2118
        %v2120 = vrot.slane %v2119, 1
        %v2121 = vmax.f32 %v2119, %v2120
        %v2122 = vsel %vm1757, %v1649, -inf
        %v2123 = vrot.slane %v2122, 4
        %v2124 = vmax.f32 %v2122, %v2123
        %v2125 = vrot.slane %v2124, 2
        %v2126 = vmax.f32 %v2124, %v2125
        %v2127 = vrot.slane %v2126, 1
        %v2128 = vmax.f32 %v2126, %v2127
        %v2129 = vsel %vm1757, %v1657, -inf
        %v2130 = vrot.slane %v2129, 4
        %v2131 = vmax.f32 %v2129, %v2130
        %v2132 = vrot.slane %v2131, 2
        %v2133 = vmax.f32 %v2131, %v2132
        %v2134 = vrot.slane %v2133, 1
        %v2135 = vmax.f32 %v2133, %v2134
        %v2136 = vsel %vm1757, %v1656, -inf
        %v2137 = vrot.slane %v2136, 4
        %v2138 = vmax.f32 %v2136, %v2137
        %v2139 = vrot.slane %v2138, 2
        %v2140 = vmax.f32 %v2138, %v2139
        %v2141 = vrot.slane %v2140, 1
        %v2142 = vmax.f32 %v2140, %v2141
        %v2143 = vsel %vm1757, %v1658, -inf
        %v2144 = vrot.slane %v2143, 4
        %v2145 = vmax.f32 %v2143, %v2144
        %v2146 = vrot.slane %v2145, 2
        %v2147 = vmax.f32 %v2145, %v2146
        %v2148 = vrot.slane %v2147, 1
        %v2149 = vmax.f32 %v2147, %v2148
        %v2150 = vsel %vm1757, %v1666, -inf
        %v2151 = vrot.slane %v2150, 4
        %v2152 = vmax.f32 %v2150, %v2151
        %v2153 = vrot.slane %v2152, 2
        %v2154 = vmax.f32 %v2152, %v2153
        %v2155 = vrot.slane %v2154, 1
        %v2156 = vmax.f32 %v2154, %v2155
        %v2157 = vsel %vm1757, %v1674, -inf
        %v2158 = vrot.slane %v2157, 4
        %v2159 = vmax.f32 %v2157, %v2158
        %v2160 = vrot.slane %v2159, 2
        %v2161 = vmax.f32 %v2159, %v2160
        %v2162 = vrot.slane %v2161, 1
        %v2163 = vmax.f32 %v2161, %v2162
        %v2164 = vsel %vm1757, %v1673, -inf
        %v2165 = vrot.slane %v2164, 4
        %v2166 = vmax.f32 %v2164, %v2165
        %v2167 = vrot.slane %v2166, 2
        %v2168 = vmax.f32 %v2166, %v2167
        %v2169 = vrot.slane %v2168, 1
        %v2170 = vmax.f32 %v2168, %v2169
        %v2171 = vsel %vm1757, %v1675, -inf
        %v2172 = vrot.slane %v2171, 4
        %v2173 = vmax.f32 %v2171, %v2172
        %v2174 = vrot.slane %v2173, 2
        %v2175 = vmax.f32 %v2173, %v2174
        %v2176 = vrot.slane %v2175, 1
        %v2177 = vmax.f32 %v2175, %v2176
        %v2178 = vsel %vm1757, %v1683, -inf
        %v2179 = vrot.slane %v2178, 4
        %v2180 = vmax.f32 %v2178, %v2179
        %v2181 = vrot.slane %v2180, 2
        %v2182 = vmax.f32 %v2180, %v2181
        %v2183 = vrot.slane %v2182, 1
        %v2184 = vmax.f32 %v2182, %v2183
        %v2185 = vsel %vm1757, %v1691, -inf
        %v2186 = vrot.slane %v2185, 4
        %v2187 = vmax.f32 %v2185, %v2186
        %v2188 = vrot.slane %v2187, 2
        %v2189 = vmax.f32 %v2187, %v2188
        %v2190 = vrot.slane %v2189, 1
        %v2191 = vmax.f32 %v2189, %v2190
        %v2192 = vsel %vm1757, %v1690, -inf
        %v2193 = vrot.slane %v2192, 4
        %v2194 = vmax.f32 %v2192, %v2193
        %v2195 = vrot.slane %v2194, 2
        %v2196 = vmax.f32 %v2194, %v2195
        %v2197 = vrot.slane %v2196, 1
        %v2198 = vmax.f32 %v2196, %v2197
        %v2199 = vsel %vm1757, %v1692, -inf
        %v2200 = vrot.slane %v2199, 4
        %v2201 = vmax.f32 %v2199, %v2200
        %v2202 = vrot.slane %v2201, 2
        %v2203 = vmax.f32 %v2201, %v2202
        %v2204 = vrot.slane %v2203, 1
        %v2205 = vmax.f32 %v2203, %v2204
        %v2206 = vadd.f32 %v915, %v1764
        %v2207 = vadd.f32 %v922, %v1771
        %v2208 = vadd.f32 %v929, %v1778
        %v2209 = vadd.f32 %v936, %v1785
        %v2210 = vadd.f32 %v943, %v1792
        %v2211 = vadd.f32 %v950, %v1799
        %v2212 = vadd.f32 %v957, %v1806
        %v2213 = vadd.f32 %v964, %v1813
        %v2214 = vadd.f32 %v971, %v1820
        %v2215 = vadd.f32 %v978, %v1827
        %v2216 = vadd.f32 %v985, %v1834
        %v2217 = vadd.f32 %v992, %v1841
        %v2218 = vadd.f32 %v999, %v1848
        %v2219 = vadd.f32 %v1006, %v1855
        %v2220 = vadd.f32 %v1013, %v1862
        %v2221 = vadd.f32 %v1020, %v1869
        %v2222 = vadd.f32 %v1027, %v1876
        %v2223 = vadd.f32 %v1034, %v1883
        %v2224 = vadd.f32 %v1041, %v1890
        %v2225 = vadd.f32 %v1048, %v1897
        %v2226 = vadd.f32 %v1055, %v1904
        %v2227 = vadd.f32 %v1062, %v1911
        %v2228 = vadd.f32 %v1069, %v1918
        %v2229 = vadd.f32 %v1076, %v1925
        %v2230 = vadd.f32 %v1083, %v1932
        %v2231 = vadd.f32 %v1090, %v1939
        %v2232 = vadd.f32 %v1097, %v1946
        %v2233 = vadd.f32 %v1104, %v1953
        %v2234 = vadd.f32 %v1111, %v1960
        %v2235 = vadd.f32 %v1118, %v1967
        %v2236 = vadd.f32 %v1125, %v1974
        %v2237 = vadd.f32 %v1132, %v1981
        %v2238 = vadd.f32 %v1139, %v1988
        %v2239 = vadd.f32 %v1146, %v1995
        %v2240 = vadd.f32 %v1153, %v2002
        %v2241 = vadd.f32 %v1160, %v2009
        %v2242 = vadd.f32 %v1167, %v2016
        %v2243 = vadd.f32 %v1174, %v2023
        %v2244 = vadd.f32 %v1181, %v2030
        %v2245 = vadd.f32 %v1188, %v2037
        %v2246 = vadd.f32 %v1195, %v2044
        %v2247 = vadd.f32 %v1202, %v2051
        %v2248 = vadd.f32 %v1209, %v2058
        %v2249 = vadd.f32 %v1216, %v2065
        %v2250 = vadd.f32 %v1223, %v2072
        %v2251 = vadd.f32 %v1230, %v2079
        %v2252 = vadd.f32 %v1237, %v2086
        %v2253 = vadd.f32 %v1244, %v2093
        %v2254 = vadd.f32 %v1251, %v2100
        %v2255 = vadd.f32 %v1258, %v2107
        %v2256 = vadd.f32 %v1265, %v2114
        %v2257 = vadd.f32 %v1272, %v2121
        %v2258 = vadd.f32 %v1279, %v2128
        %v2259 = vadd.f32 %v1286, %v2135
        %v2260 = vadd.f32 %v1293, %v2142
        %v2261 = vadd.f32 %v1300, %v2149
        %v2262 = vadd.f32 %v1307, %v2156
        %v2263 = vadd.f32 %v1314, %v2163
        %v2264 = vadd.f32 %v1321, %v2170
        %v2265 = vadd.f32 %v1328, %v2177
        %v2266 = vadd.f32 %v1335, %v2184
        %v2267 = vadd.f32 %v1342, %v2191
        %v2268 = vadd.f32 %v1349, %v2198
        %v2269 = vadd.f32 %v1356, %v2205
        %v2270 = vld [vmem:[%s490] sm:$0xf]
        %v2271 = vld [vmem:[%s490 + $0x4] sm:$0xf]
        %v2272 = vld [vmem:[%s490 + $0x8] sm:$0xf]
        %v2273 = vld [vmem:[%s490 + $0xc] sm:$0xf]
        %v2279 = vunpack.c.l.s4 1966171168
        %v2280 = vunpack.c.0.s8 %v2279
        %v2281 = vlaneseq
        %v2282 = vshrl.u32 %v2281, 7
        %v2283 = vsub.s32 %v2280, %v2282
        %v2284 = vrot.slane %v2270, %v2283
        %v2285 = vcombine.high %v2284, %v2284
        %v2287 = vunpack.c.l.s4 1966171168
        %v2288 = vunpack.c.0.s8 %v2287
        %v2289 = vlaneseq
        %v2290 = vshrl.u32 %v2289, 7
        %v2291 = vsub.s32 %v2288, %v2290
        %v2292 = vrot.slane %v2284, %v2291
        %v2294 = vunpack.c.l.s4 1966171168
        %v2295 = vunpack.c.0.s8 %v2294
        %v2296 = vlaneseq
        %v2297 = vshrl.u32 %v2296, 7
        %v2298 = vsub.s32 %v2295, %v2297
        %v2299 = vrot.slane %v2285, %v2298
        %v2300 = vcombine.high %v2292, %v2292
        %v2301 = vcombine.high %v2299, %v2299
        %v2303 = vunpack.c.l.s4 1966171168
        %v2304 = vunpack.c.0.s8 %v2303
        %v2305 = vlaneseq
        %v2306 = vshrl.u32 %v2305, 7
        %v2307 = vsub.s32 %v2304, %v2306
        %v2308 = vrot.slane %v2271, %v2307
        %v2309 = vcombine.high %v2308, %v2308
        %v2311 = vunpack.c.l.s4 1966171168
        %v2312 = vunpack.c.0.s8 %v2311
        %v2313 = vlaneseq
        %v2314 = vshrl.u32 %v2313, 7
        %v2315 = vsub.s32 %v2312, %v2314
        %v2316 = vrot.slane %v2308, %v2315
        %v2318 = vunpack.c.l.s4 1966171168
        %v2319 = vunpack.c.0.s8 %v2318
        %v2320 = vlaneseq
        %v2321 = vshrl.u32 %v2320, 7
        %v2322 = vsub.s32 %v2319, %v2321
        %v2323 = vrot.slane %v2309, %v2322
        %v2324 = vcombine.high %v2316, %v2316
        %v2325 = vcombine.high %v2323, %v2323
        %v2327 = vunpack.c.l.s4 1966171168
        %v2328 = vunpack.c.0.s8 %v2327
        %v2329 = vlaneseq
        %v2330 = vshrl.u32 %v2329, 7
        %v2331 = vsub.s32 %v2328, %v2330
        %v2332 = vrot.slane %v2272, %v2331
        %v2333 = vcombine.high %v2332, %v2332
        %v2335 = vunpack.c.l.s4 1966171168
        %v2336 = vunpack.c.0.s8 %v2335
        %v2337 = vlaneseq
        %v2338 = vshrl.u32 %v2337, 7
        %v2339 = vsub.s32 %v2336, %v2338
        %v2340 = vrot.slane %v2332, %v2339
        %v2342 = vunpack.c.l.s4 1966171168
        %v2343 = vunpack.c.0.s8 %v2342
        %v2344 = vlaneseq
        %v2345 = vshrl.u32 %v2344, 7
        %v2346 = vsub.s32 %v2343, %v2345
        %v2347 = vrot.slane %v2333, %v2346
        %v2348 = vcombine.high %v2340, %v2340
        %v2349 = vcombine.high %v2347, %v2347
        %v2351 = vunpack.c.l.s4 1966171168
        %v2352 = vunpack.c.0.s8 %v2351
        %v2353 = vlaneseq
        %v2354 = vshrl.u32 %v2353, 7
        %v2355 = vsub.s32 %v2352, %v2354
        %v2356 = vrot.slane %v2273, %v2355
        %v2357 = vcombine.high %v2356, %v2356
        %v2359 = vunpack.c.l.s4 1966171168
        %v2360 = vunpack.c.0.s8 %v2359
        %v2361 = vlaneseq
        %v2362 = vshrl.u32 %v2361, 7
        %v2363 = vsub.s32 %v2360, %v2362
        %v2364 = vrot.slane %v2356, %v2363
        %v2366 = vunpack.c.l.s4 1966171168
        %v2367 = vunpack.c.0.s8 %v2366
        %v2368 = vlaneseq
        %v2369 = vshrl.u32 %v2368, 7
        %v2370 = vsub.s32 %v2367, %v2369
        %v2371 = vrot.slane %v2357, %v2370
        %v2372 = vcombine.high %v2364, %v2364
        %v2373 = vcombine.high %v2371, %v2371
        %v2374 = vlaneseq
        %v2375 = vshrl.u32 %v2374, 7
        %v2376 = vsub.s32 0, %v2375
        %v2377 = vrot.slane %v2292, %v2376
        %v2378 = vlaneseq
        %v2379 = vshrl.u32 %v2378, 7
        %v2380 = vsub.s32 0, %v2379
        %v2381 = vrot.slane %v2299, %v2380
        %v2382 = vlaneseq
        %v2383 = vshrl.u32 %v2382, 7
        %v2384 = vsub.s32 0, %v2383
        %v2385 = vrot.slane %v2300, %v2384
        %v2386 = vlaneseq
        %v2387 = vshrl.u32 %v2386, 7
        %v2388 = vsub.s32 0, %v2387
        %v2389 = vrot.slane %v2301, %v2388
        %v2390 = vlaneseq
        %v2391 = vshrl.u32 %v2390, 7
        %v2392 = vsub.s32 0, %v2391
        %v2393 = vrot.slane %v2316, %v2392
        %v2394 = vlaneseq
        %v2395 = vshrl.u32 %v2394, 7
        %v2396 = vsub.s32 0, %v2395
        %v2397 = vrot.slane %v2323, %v2396
        %v2398 = vlaneseq
        %v2399 = vshrl.u32 %v2398, 7
        %v2400 = vsub.s32 0, %v2399
        %v2401 = vrot.slane %v2324, %v2400
        %v2402 = vlaneseq
        %v2403 = vshrl.u32 %v2402, 7
        %v2404 = vsub.s32 0, %v2403
        %v2405 = vrot.slane %v2325, %v2404
        %v2406 = vlaneseq
        %v2407 = vshrl.u32 %v2406, 7
        %v2408 = vsub.s32 0, %v2407
        %v2409 = vrot.slane %v2340, %v2408
        %v2410 = vlaneseq
        %v2411 = vshrl.u32 %v2410, 7
        %v2412 = vsub.s32 0, %v2411
        %v2413 = vrot.slane %v2347, %v2412
        %v2414 = vlaneseq
        %v2415 = vshrl.u32 %v2414, 7
        %v2416 = vsub.s32 0, %v2415
        %v2417 = vrot.slane %v2348, %v2416
        %v2418 = vlaneseq
        %v2419 = vshrl.u32 %v2418, 7
        %v2420 = vsub.s32 0, %v2419
        %v2421 = vrot.slane %v2349, %v2420
        %v2422 = vlaneseq
        %v2423 = vshrl.u32 %v2422, 7
        %v2424 = vsub.s32 0, %v2423
        %v2425 = vrot.slane %v2364, %v2424
        %v2426 = vlaneseq
        %v2427 = vshrl.u32 %v2426, 7
        %v2428 = vsub.s32 0, %v2427
        %v2429 = vrot.slane %v2371, %v2428
        %v2430 = vlaneseq
        %v2431 = vshrl.u32 %v2430, 7
        %v2432 = vsub.s32 0, %v2431
        %v2433 = vrot.slane %v2372, %v2432
        %v2434 = vlaneseq
        %v2435 = vshrl.u32 %v2434, 7
        %v2436 = vsub.s32 0, %v2435
        %v2437 = vrot.slane %v2373, %v2436
        %v2438 = vcombine.low %v2377, %v2381
        %v2439 = vcombine.low %v2385, %v2389
        %v2441 = vunpack.c.l.s4 1983009808
        %v2442 = vunpack.c.0.s8 %v2441
        %v2443 = vlaneseq
        %v2444 = vshrl.u32 %v2443, 7
        %v2445 = vsub.s32 %v2442, %v2444
        %v2446 = vrot.slane %v2438, %v2445
        %v2448 = vunpack.c.l.s4 1983009808
        %v2449 = vunpack.c.0.s8 %v2448
        %v2450 = vlaneseq
        %v2451 = vshrl.u32 %v2450, 7
        %v2452 = vsub.s32 %v2449, %v2451
        %v2453 = vrot.slane %v2439, %v2452
        %v2454 = vcombine.low %v2446, %v2453
        %v2455 = vcombine.low %v2393, %v2397
        %v2456 = vcombine.low %v2401, %v2405
        %v2458 = vunpack.c.l.s4 1983009808
        %v2459 = vunpack.c.0.s8 %v2458
        %v2460 = vlaneseq
        %v2461 = vshrl.u32 %v2460, 7
        %v2462 = vsub.s32 %v2459, %v2461
        %v2463 = vrot.slane %v2455, %v2462
        %v2465 = vunpack.c.l.s4 1983009808
        %v2466 = vunpack.c.0.s8 %v2465
        %v2467 = vlaneseq
        %v2468 = vshrl.u32 %v2467, 7
        %v2469 = vsub.s32 %v2466, %v2468
        %v2470 = vrot.slane %v2456, %v2469
        %v2471 = vcombine.low %v2463, %v2470
        %v2472 = vcombine.low %v2409, %v2413
        %v2473 = vcombine.low %v2417, %v2421
        %v2475 = vunpack.c.l.s4 1983009808
        %v2476 = vunpack.c.0.s8 %v2475
        %v2477 = vlaneseq
        %v2478 = vshrl.u32 %v2477, 7
        %v2479 = vsub.s32 %v2476, %v2478
        %v2480 = vrot.slane %v2472, %v2479
        %v2482 = vunpack.c.l.s4 1983009808
        %v2483 = vunpack.c.0.s8 %v2482
        %v2484 = vlaneseq
        %v2485 = vshrl.u32 %v2484, 7
        %v2486 = vsub.s32 %v2483, %v2485
        %v2487 = vrot.slane %v2473, %v2486
        %v2488 = vcombine.low %v2480, %v2487
        %v2489 = vcombine.low %v2425, %v2429
        %v2490 = vcombine.low %v2433, %v2437
        %v2492 = vunpack.c.l.s4 1983009808
        %v2493 = vunpack.c.0.s8 %v2492
        %v2494 = vlaneseq
        %v2495 = vshrl.u32 %v2494, 7
        %v2496 = vsub.s32 %v2493, %v2495
        %v2497 = vrot.slane %v2489, %v2496
        %v2499 = vunpack.c.l.s4 1983009808
        %v2500 = vunpack.c.0.s8 %v2499
        %v2501 = vlaneseq
        %v2502 = vshrl.u32 %v2501, 7
        %v2503 = vsub.s32 %v2500, %v2502
        %v2504 = vrot.slane %v2490, %v2503
        %v2505 = vcombine.low %v2497, %v2504
        %v2506 = vrot.slane %v2454, 1
        %v2507 = vrot.slane %v2454, 2
        %v2508 = vrot.slane %v2454, 3
        %v2509 = vrot.slane %v2454, 4
        %v2510 = vrot.slane %v2454, 5
        %v2511 = vrot.slane %v2454, 6
        %v2512 = vrot.slane %v2454, 7
        %v2513 = vrot.slane %v2471, 1
        %v2514 = vrot.slane %v2471, 2
        %v2515 = vrot.slane %v2471, 3
        %v2516 = vrot.slane %v2471, 4
        %v2517 = vrot.slane %v2471, 5
        %v2518 = vrot.slane %v2471, 6
        %v2519 = vrot.slane %v2471, 7
        %v2520 = vrot.slane %v2488, 1
        %v2521 = vrot.slane %v2488, 2
        %v2522 = vrot.slane %v2488, 3
        %v2523 = vrot.slane %v2488, 4
        %v2524 = vrot.slane %v2488, 5
        %v2525 = vrot.slane %v2488, 6
        %v2526 = vrot.slane %v2488, 7
        %v2527 = vrot.slane %v2505, 1
        %v2528 = vrot.slane %v2505, 2
        %v2529 = vrot.slane %v2505, 3
        %v2530 = vrot.slane %v2505, 4
        %v2531 = vrot.slane %v2505, 5
        %v2532 = vrot.slane %v2505, 6
        %v2533 = vrot.slane %v2505, 7
        %v2566 = vadd.f32 %v2206, %v2454
        %v2567 = vadd.f32 %v2207, %v2506
        %v2568 = vadd.f32 %v2208, %v2507
        %v2569 = vadd.f32 %v2209, %v2508
        %v2570 = vadd.f32 %v2210, %v2509
        %v2571 = vadd.f32 %v2211, %v2510
        %v2572 = vadd.f32 %v2212, %v2511
        %v2573 = vadd.f32 %v2213, %v2512
        %v2574 = vadd.f32 %v2214, %v2454
        %v2575 = vadd.f32 %v2215, %v2506
        %v2576 = vadd.f32 %v2216, %v2507
        %v2577 = vadd.f32 %v2217, %v2508
        %v2578 = vadd.f32 %v2218, %v2509
        %v2579 = vadd.f32 %v2219, %v2510
        %v2580 = vadd.f32 %v2220, %v2511
        %v2581 = vadd.f32 %v2221, %v2512
        %v2582 = vadd.f32 %v2222, %v2471
        %v2583 = vadd.f32 %v2223, %v2513
        %v2584 = vadd.f32 %v2224, %v2514
        %v2585 = vadd.f32 %v2225, %v2515
        %v2586 = vadd.f32 %v2226, %v2516
        %v2587 = vadd.f32 %v2227, %v2517
        %v2588 = vadd.f32 %v2228, %v2518
        %v2589 = vadd.f32 %v2229, %v2519
        %v2590 = vadd.f32 %v2230, %v2471
        %v2591 = vadd.f32 %v2231, %v2513
        %v2592 = vadd.f32 %v2232, %v2514
        %v2593 = vadd.f32 %v2233, %v2515
        %v2594 = vadd.f32 %v2234, %v2516
        %v2595 = vadd.f32 %v2235, %v2517
        %v2596 = vadd.f32 %v2236, %v2518
        %v2597 = vadd.f32 %v2237, %v2519
        %v2598 = vadd.f32 %v2238, %v2488
        %v2599 = vadd.f32 %v2239, %v2520
        %v2600 = vadd.f32 %v2240, %v2521
        %v2601 = vadd.f32 %v2241, %v2522
        %v2602 = vadd.f32 %v2242, %v2523
        %v2603 = vadd.f32 %v2243, %v2524
        %v2604 = vadd.f32 %v2244, %v2525
        %v2605 = vadd.f32 %v2245, %v2526
        %v2606 = vadd.f32 %v2246, %v2488
        %v2607 = vadd.f32 %v2247, %v2520
        %v2608 = vadd.f32 %v2248, %v2521
        %v2609 = vadd.f32 %v2249, %v2522
        %v2610 = vadd.f32 %v2250, %v2523
        %v2611 = vadd.f32 %v2251, %v2524
        %v2612 = vadd.f32 %v2252, %v2525
        %v2613 = vadd.f32 %v2253, %v2526
        %v2614 = vadd.f32 %v2254, %v2505
        %v2615 = vadd.f32 %v2255, %v2527
        %v2616 = vadd.f32 %v2256, %v2528
        %v2617 = vadd.f32 %v2257, %v2529
        %v2618 = vadd.f32 %v2258, %v2530
        %v2619 = vadd.f32 %v2259, %v2531
        %v2620 = vadd.f32 %v2260, %v2532
        %v2621 = vadd.f32 %v2261, %v2533
        %v2622 = vadd.f32 %v2262, %v2505
        %v2623 = vadd.f32 %v2263, %v2527
        %v2624 = vadd.f32 %v2264, %v2528
        %v2625 = vadd.f32 %v2265, %v2529
        %v2626 = vadd.f32 %v2266, %v2530
        %v2627 = vadd.f32 %v2267, %v2531
        %v2628 = vadd.f32 %v2268, %v2532
        %v2629 = vadd.f32 %v2269, %v2533
        %v2630 = vld [vmem:[%s581] sm:$0x3]
        %v2631 = vld [vmem:[%s581 + $0x2] sm:$0x3]
        %v2635 = vunpack.c.l.s4 1966171168
        %v2636 = vunpack.c.0.s8 %v2635
        %v2637 = vlaneseq
        %v2638 = vshrl.u32 %v2637, 7
        %v2639 = vsub.s32 %v2636, %v2638
        %v2640 = vrot.slane %v2630, %v2639
        %v2641 = vcombine.high %v2640, %v2640
        %v2643 = vunpack.c.l.s4 1966171168
        %v2644 = vunpack.c.0.s8 %v2643
        %v2645 = vlaneseq
        %v2646 = vshrl.u32 %v2645, 7
        %v2647 = vsub.s32 %v2644, %v2646
        %v2648 = vrot.slane %v2640, %v2647
        %v2650 = vunpack.c.l.s4 1966171168
        %v2651 = vunpack.c.0.s8 %v2650
        %v2652 = vlaneseq
        %v2653 = vshrl.u32 %v2652, 7
        %v2654 = vsub.s32 %v2651, %v2653
        %v2655 = vrot.slane %v2641, %v2654
        %v2657 = vunpack.c.l.s4 1966171168
        %v2658 = vunpack.c.0.s8 %v2657
        %v2659 = vlaneseq
        %v2660 = vshrl.u32 %v2659, 7
        %v2661 = vsub.s32 %v2658, %v2660
        %v2662 = vrot.slane %v2631, %v2661
        %v2663 = vcombine.high %v2662, %v2662
        %v2665 = vunpack.c.l.s4 1966171168
        %v2666 = vunpack.c.0.s8 %v2665
        %v2667 = vlaneseq
        %v2668 = vshrl.u32 %v2667, 7
        %v2669 = vsub.s32 %v2666, %v2668
        %v2670 = vrot.slane %v2662, %v2669
        %v2672 = vunpack.c.l.s4 1966171168
        %v2673 = vunpack.c.0.s8 %v2672
        %v2674 = vlaneseq
        %v2675 = vshrl.u32 %v2674, 7
        %v2676 = vsub.s32 %v2673, %v2675
        %v2677 = vrot.slane %v2663, %v2676
        %v2678 = vlaneseq
        %v2679 = vshrl.u32 %v2678, 7
        %v2680 = vsub.s32 0, %v2679
        %v2681 = vrot.slane %v2648, %v2680
        %v2682 = vlaneseq
        %v2683 = vshrl.u32 %v2682, 7
        %v2684 = vsub.s32 0, %v2683
        %v2685 = vrot.slane %v2655, %v2684
        %v2686 = vlaneseq
        %v2687 = vshrl.u32 %v2686, 7
        %v2688 = vsub.s32 0, %v2687
        %v2689 = vrot.slane %v2670, %v2688
        %v2690 = vlaneseq
        %v2691 = vshrl.u32 %v2690, 7
        %v2692 = vsub.s32 0, %v2691
        %v2693 = vrot.slane %v2677, %v2692
        %v2694 = vcombine.low %v2681, %v2685
        %v2695 = vcombine.low %v2689, %v2693
        %v2696 = vrot.slane %v2694, 1
        %v2697 = vrot.slane %v2694, 2
        %v2698 = vrot.slane %v2694, 3
        %v2699 = vrot.slane %v2694, 4
        %v2700 = vrot.slane %v2694, 5
        %v2701 = vrot.slane %v2694, 6
        %v2702 = vrot.slane %v2694, 7
        %v2703 = vrot.slane %v2695, 1
        %v2704 = vrot.slane %v2695, 2
        %v2705 = vrot.slane %v2695, 3
        %v2706 = vrot.slane %v2695, 4
        %v2707 = vrot.slane %v2695, 5
        %v2708 = vrot.slane %v2695, 6
        %v2709 = vrot.slane %v2695, 7
        %v2726 = vadd.f32 %v2566, %v2694
        %v2727 = vadd.f32 %v2567, %v2696
        %v2728 = vadd.f32 %v2568, %v2697
        %v2729 = vadd.f32 %v2569, %v2698
        %v2730 = vadd.f32 %v2570, %v2699
        %v2731 = vadd.f32 %v2571, %v2700
        %v2732 = vadd.f32 %v2572, %v2701
        %v2733 = vadd.f32 %v2573, %v2702
        %v2734 = vadd.f32 %v2574, %v2694
        %v2735 = vadd.f32 %v2575, %v2696
        %v2736 = vadd.f32 %v2576, %v2697
        %v2737 = vadd.f32 %v2577, %v2698
        %v2738 = vadd.f32 %v2578, %v2699
        %v2739 = vadd.f32 %v2579, %v2700
        %v2740 = vadd.f32 %v2580, %v2701
        %v2741 = vadd.f32 %v2581, %v2702
        %v2742 = vadd.f32 %v2582, %v2694
        %v2743 = vadd.f32 %v2583, %v2696
        %v2744 = vadd.f32 %v2584, %v2697
        %v2745 = vadd.f32 %v2585, %v2698
        %v2746 = vadd.f32 %v2586, %v2699
        %v2747 = vadd.f32 %v2587, %v2700
        %v2748 = vadd.f32 %v2588, %v2701
        %v2749 = vadd.f32 %v2589, %v2702
        %v2750 = vadd.f32 %v2590, %v2694
        %v2751 = vadd.f32 %v2591, %v2696
        %v2752 = vadd.f32 %v2592, %v2697
        %v2753 = vadd.f32 %v2593, %v2698
        %v2754 = vadd.f32 %v2594, %v2699
        %v2755 = vadd.f32 %v2595, %v2700
        %v2756 = vadd.f32 %v2596, %v2701
        %v2757 = vadd.f32 %v2597, %v2702
        %v2758 = vadd.f32 %v2598, %v2695
        %v2759 = vadd.f32 %v2599, %v2703
        %v2760 = vadd.f32 %v2600, %v2704
        %v2761 = vadd.f32 %v2601, %v2705
        %v2762 = vadd.f32 %v2602, %v2706
        %v2763 = vadd.f32 %v2603, %v2707
        %v2764 = vadd.f32 %v2604, %v2708
        %v2765 = vadd.f32 %v2605, %v2709
        %v2766 = vadd.f32 %v2606, %v2695
        %v2767 = vadd.f32 %v2607, %v2703
        %v2768 = vadd.f32 %v2608, %v2704
        %v2769 = vadd.f32 %v2609, %v2705
        %v2770 = vadd.f32 %v2610, %v2706
        %v2771 = vadd.f32 %v2611, %v2707
        %v2772 = vadd.f32 %v2612, %v2708
        %v2773 = vadd.f32 %v2613, %v2709
        %v2774 = vadd.f32 %v2614, %v2695
        %v2775 = vadd.f32 %v2615, %v2703
        %v2776 = vadd.f32 %v2616, %v2704
        %v2777 = vadd.f32 %v2617, %v2705
        %v2778 = vadd.f32 %v2618, %v2706
        %v2779 = vadd.f32 %v2619, %v2707
        %v2780 = vadd.f32 %v2620, %v2708
        %v2781 = vadd.f32 %v2621, %v2709
        %v2782 = vadd.f32 %v2622, %v2695
        %v2783 = vadd.f32 %v2623, %v2703
        %v2784 = vadd.f32 %v2624, %v2704
        %v2785 = vadd.f32 %v2625, %v2705
        %v2786 = vadd.f32 %v2626, %v2706
        %v2787 = vadd.f32 %v2627, %v2707
        %v2788 = vadd.f32 %v2628, %v2708
        %v2789 = vadd.f32 %v2629, %v2709
        %v2790 = vmul.f32 %v2726, 0.25
        %v2791 = vmul.f32 %v2727, 0.25
        %v2792 = vmul.f32 %v2728, 0.25
        %v2793 = vmul.f32 %v2729, 0.25
        %v2794 = vmul.f32 %v2730, 0.25
        %v2795 = vmul.f32 %v2731, 0.25
        %v2796 = vmul.f32 %v2732, 0.25
        %v2797 = vmul.f32 %v2733, 0.25
        %v2798 = vmul.f32 %v2734, 0.25
        %v2799 = vmul.f32 %v2735, 0.25
        %v2800 = vmul.f32 %v2736, 0.25
        %v2801 = vmul.f32 %v2737, 0.25
        %v2802 = vmul.f32 %v2738, 0.25
        %v2803 = vmul.f32 %v2739, 0.25
        %v2804 = vmul.f32 %v2740, 0.25
        %v2805 = vmul.f32 %v2741, 0.25
        %v2806 = vmul.f32 %v2742, 0.25
        %v2807 = vmul.f32 %v2743, 0.25
        %v2808 = vmul.f32 %v2744, 0.25
        %v2809 = vmul.f32 %v2745, 0.25
        %v2810 = vmul.f32 %v2746, 0.25
        %v2811 = vmul.f32 %v2747, 0.25
        %v2812 = vmul.f32 %v2748, 0.25
        %v2813 = vmul.f32 %v2749, 0.25
        %v2814 = vmul.f32 %v2750, 0.25
        %v2815 = vmul.f32 %v2751, 0.25
        %v2816 = vmul.f32 %v2752, 0.25
        %v2817 = vmul.f32 %v2753, 0.25
        %v2818 = vmul.f32 %v2754, 0.25
        %v2819 = vmul.f32 %v2755, 0.25
        %v2820 = vmul.f32 %v2756, 0.25
        %v2821 = vmul.f32 %v2757, 0.25
        %v2822 = vmul.f32 %v2758, 0.25
        %v2823 = vmul.f32 %v2759, 0.25
        %v2824 = vmul.f32 %v2760, 0.25
        %v2825 = vmul.f32 %v2761, 0.25
        %v2826 = vmul.f32 %v2762, 0.25
        %v2827 = vmul.f32 %v2763, 0.25
        %v2828 = vmul.f32 %v2764, 0.25
        %v2829 = vmul.f32 %v2765, 0.25
        %v2830 = vmul.f32 %v2766, 0.25
        %v2831 = vmul.f32 %v2767, 0.25
        %v2832 = vmul.f32 %v2768, 0.25
        %v2833 = vmul.f32 %v2769, 0.25
        %v2834 = vmul.f32 %v2770, 0.25
        %v2835 = vmul.f32 %v2771, 0.25
        %v2836 = vmul.f32 %v2772, 0.25
        %v2837 = vmul.f32 %v2773, 0.25
        %v2838 = vmul.f32 %v2774, 0.25
        %v2839 = vmul.f32 %v2775, 0.25
        %v2840 = vmul.f32 %v2776, 0.25
        %v2841 = vmul.f32 %v2777, 0.25
        %v2842 = vmul.f32 %v2778, 0.25
        %v2843 = vmul.f32 %v2779, 0.25
        %v2844 = vmul.f32 %v2780, 0.25
        %v2845 = vmul.f32 %v2781, 0.25
        %v2846 = vmul.f32 %v2782, 0.25
        %v2847 = vmul.f32 %v2783, 0.25
        %v2848 = vmul.f32 %v2784, 0.25
        %v2849 = vmul.f32 %v2785, 0.25
        %v2850 = vmul.f32 %v2786, 0.25
        %v2851 = vmul.f32 %v2787, 0.25
        %v2852 = vmul.f32 %v2788, 0.25
        %v2853 = vmul.f32 %v2789, 0.25
        %v2854 = vlaneseq
        %v2855 = vshrl.u32 %v2854, 7
        %v2856 = vsub.s32 0, %v2855
        %v2857 = vrot.slane %v2790, %v2856
        %v2858 = vlaneseq
        %v2859 = vshrl.u32 %v2858, 7
        %v2860 = vsub.s32 0, %v2859
        %v2861 = vrot.slane %v2791, %v2860
        %v2862 = vlaneseq
        %v2863 = vshrl.u32 %v2862, 7
        %v2864 = vsub.s32 0, %v2863
        %v2865 = vrot.slane %v2792, %v2864
        %v2866 = vlaneseq
        %v2867 = vshrl.u32 %v2866, 7
        %v2868 = vsub.s32 0, %v2867
        %v2869 = vrot.slane %v2793, %v2868
        %v2870 = vlaneseq
        %v2871 = vshrl.u32 %v2870, 7
        %v2872 = vsub.s32 0, %v2871
        %v2873 = vrot.slane %v2794, %v2872
        %v2874 = vlaneseq
        %v2875 = vshrl.u32 %v2874, 7
        %v2876 = vsub.s32 0, %v2875
        %v2877 = vrot.slane %v2795, %v2876
        %v2878 = vlaneseq
        %v2879 = vshrl.u32 %v2878, 7
        %v2880 = vsub.s32 0, %v2879
        %v2881 = vrot.slane %v2796, %v2880
        %v2882 = vlaneseq
        %v2883 = vshrl.u32 %v2882, 7
        %v2884 = vsub.s32 0, %v2883
        %v2885 = vrot.slane %v2797, %v2884
        %v2886 = vlaneseq
        %v2887 = vshrl.u32 %v2886, 7
        %v2888 = vsub.s32 0, %v2887
        %v2889 = vrot.slane %v2798, %v2888
        %v2890 = vlaneseq
        %v2891 = vshrl.u32 %v2890, 7
        %v2892 = vsub.s32 0, %v2891
        %v2893 = vrot.slane %v2799, %v2892
        %v2894 = vlaneseq
        %v2895 = vshrl.u32 %v2894, 7
        %v2896 = vsub.s32 0, %v2895
        %v2897 = vrot.slane %v2800, %v2896
        %v2898 = vlaneseq
        %v2899 = vshrl.u32 %v2898, 7
        %v2900 = vsub.s32 0, %v2899
        %v2901 = vrot.slane %v2801, %v2900
        %v2902 = vlaneseq
        %v2903 = vshrl.u32 %v2902, 7
        %v2904 = vsub.s32 0, %v2903
        %v2905 = vrot.slane %v2802, %v2904
        %v2906 = vlaneseq
        %v2907 = vshrl.u32 %v2906, 7
        %v2908 = vsub.s32 0, %v2907
        %v2909 = vrot.slane %v2803, %v2908
        %v2910 = vlaneseq
        %v2911 = vshrl.u32 %v2910, 7
        %v2912 = vsub.s32 0, %v2911
        %v2913 = vrot.slane %v2804, %v2912
        %v2914 = vlaneseq
        %v2915 = vshrl.u32 %v2914, 7
        %v2916 = vsub.s32 0, %v2915
        %v2917 = vrot.slane %v2805, %v2916
        %v2918 = vlaneseq
        %v2919 = vshrl.u32 %v2918, 7
        %v2920 = vsub.s32 0, %v2919
        %v2921 = vrot.slane %v2806, %v2920
        %v2922 = vlaneseq
        %v2923 = vshrl.u32 %v2922, 7
        %v2924 = vsub.s32 0, %v2923
        %v2925 = vrot.slane %v2807, %v2924
        %v2926 = vlaneseq
        %v2927 = vshrl.u32 %v2926, 7
        %v2928 = vsub.s32 0, %v2927
        %v2929 = vrot.slane %v2808, %v2928
        %v2930 = vlaneseq
        %v2931 = vshrl.u32 %v2930, 7
        %v2932 = vsub.s32 0, %v2931
        %v2933 = vrot.slane %v2809, %v2932
        %v2934 = vlaneseq
        %v2935 = vshrl.u32 %v2934, 7
        %v2936 = vsub.s32 0, %v2935
        %v2937 = vrot.slane %v2810, %v2936
        %v2938 = vlaneseq
        %v2939 = vshrl.u32 %v2938, 7
        %v2940 = vsub.s32 0, %v2939
        %v2941 = vrot.slane %v2811, %v2940
        %v2942 = vlaneseq
        %v2943 = vshrl.u32 %v2942, 7
        %v2944 = vsub.s32 0, %v2943
        %v2945 = vrot.slane %v2812, %v2944
        %v2946 = vlaneseq
        %v2947 = vshrl.u32 %v2946, 7
        %v2948 = vsub.s32 0, %v2947
        %v2949 = vrot.slane %v2813, %v2948
        %v2950 = vlaneseq
        %v2951 = vshrl.u32 %v2950, 7
        %v2952 = vsub.s32 0, %v2951
        %v2953 = vrot.slane %v2814, %v2952
        %v2954 = vlaneseq
        %v2955 = vshrl.u32 %v2954, 7
        %v2956 = vsub.s32 0, %v2955
        %v2957 = vrot.slane %v2815, %v2956
        %v2958 = vlaneseq
        %v2959 = vshrl.u32 %v2958, 7
        %v2960 = vsub.s32 0, %v2959
        %v2961 = vrot.slane %v2816, %v2960
        %v2962 = vlaneseq
        %v2963 = vshrl.u32 %v2962, 7
        %v2964 = vsub.s32 0, %v2963
        %v2965 = vrot.slane %v2817, %v2964
        %v2966 = vlaneseq
        %v2967 = vshrl.u32 %v2966, 7
        %v2968 = vsub.s32 0, %v2967
        %v2969 = vrot.slane %v2818, %v2968
        %v2970 = vlaneseq
        %v2971 = vshrl.u32 %v2970, 7
        %v2972 = vsub.s32 0, %v2971
        %v2973 = vrot.slane %v2819, %v2972
        %v2974 = vlaneseq
        %v2975 = vshrl.u32 %v2974, 7
        %v2976 = vsub.s32 0, %v2975
        %v2977 = vrot.slane %v2820, %v2976
        %v2978 = vlaneseq
        %v2979 = vshrl.u32 %v2978, 7
        %v2980 = vsub.s32 0, %v2979
        %v2981 = vrot.slane %v2821, %v2980
        %v2982 = vlaneseq
        %v2983 = vshrl.u32 %v2982, 7
        %v2984 = vsub.s32 0, %v2983
        %v2985 = vrot.slane %v2822, %v2984
        %v2986 = vlaneseq
        %v2987 = vshrl.u32 %v2986, 7
        %v2988 = vsub.s32 0, %v2987
        %v2989 = vrot.slane %v2823, %v2988
        %v2990 = vlaneseq
        %v2991 = vshrl.u32 %v2990, 7
        %v2992 = vsub.s32 0, %v2991
        %v2993 = vrot.slane %v2824, %v2992
        %v2994 = vlaneseq
        %v2995 = vshrl.u32 %v2994, 7
        %v2996 = vsub.s32 0, %v2995
        %v2997 = vrot.slane %v2825, %v2996
        %v2998 = vlaneseq
        %v2999 = vshrl.u32 %v2998, 7
        %v3000 = vsub.s32 0, %v2999
        %v3001 = vrot.slane %v2826, %v3000
        %v3002 = vlaneseq
        %v3003 = vshrl.u32 %v3002, 7
        %v3004 = vsub.s32 0, %v3003
        %v3005 = vrot.slane %v2827, %v3004
        %v3006 = vlaneseq
        %v3007 = vshrl.u32 %v3006, 7
        %v3008 = vsub.s32 0, %v3007
        %v3009 = vrot.slane %v2828, %v3008
        %v3010 = vlaneseq
        %v3011 = vshrl.u32 %v3010, 7
        %v3012 = vsub.s32 0, %v3011
        %v3013 = vrot.slane %v2829, %v3012
        %v3014 = vlaneseq
        %v3015 = vshrl.u32 %v3014, 7
        %v3016 = vsub.s32 0, %v3015
        %v3017 = vrot.slane %v2830, %v3016
        %v3018 = vlaneseq
        %v3019 = vshrl.u32 %v3018, 7
        %v3020 = vsub.s32 0, %v3019
        %v3021 = vrot.slane %v2831, %v3020
        %v3022 = vlaneseq
        %v3023 = vshrl.u32 %v3022, 7
        %v3024 = vsub.s32 0, %v3023
        %v3025 = vrot.slane %v2832, %v3024
        %v3026 = vlaneseq
        %v3027 = vshrl.u32 %v3026, 7
        %v3028 = vsub.s32 0, %v3027
        %v3029 = vrot.slane %v2833, %v3028
        %v3030 = vlaneseq
        %v3031 = vshrl.u32 %v3030, 7
        %v3032 = vsub.s32 0, %v3031
        %v3033 = vrot.slane %v2834, %v3032
        %v3034 = vlaneseq
        %v3035 = vshrl.u32 %v3034, 7
        %v3036 = vsub.s32 0, %v3035
        %v3037 = vrot.slane %v2835, %v3036
        %v3038 = vlaneseq
        %v3039 = vshrl.u32 %v3038, 7
        %v3040 = vsub.s32 0, %v3039
        %v3041 = vrot.slane %v2836, %v3040
        %v3042 = vlaneseq
        %v3043 = vshrl.u32 %v3042, 7
        %v3044 = vsub.s32 0, %v3043
        %v3045 = vrot.slane %v2837, %v3044
        %v3046 = vlaneseq
        %v3047 = vshrl.u32 %v3046, 7
        %v3048 = vsub.s32 0, %v3047
        %v3049 = vrot.slane %v2838, %v3048
        %v3050 = vlaneseq
        %v3051 = vshrl.u32 %v3050, 7
        %v3052 = vsub.s32 0, %v3051
        %v3053 = vrot.slane %v2839, %v3052
        %v3054 = vlaneseq
        %v3055 = vshrl.u32 %v3054, 7
        %v3056 = vsub.s32 0, %v3055
        %v3057 = vrot.slane %v2840, %v3056
        %v3058 = vlaneseq
        %v3059 = vshrl.u32 %v3058, 7
        %v3060 = vsub.s32 0, %v3059
        %v3061 = vrot.slane %v2841, %v3060
        %v3062 = vlaneseq
        %v3063 = vshrl.u32 %v3062, 7
        %v3064 = vsub.s32 0, %v3063
        %v3065 = vrot.slane %v2842, %v3064
        %v3066 = vlaneseq
        %v3067 = vshrl.u32 %v3066, 7
        %v3068 = vsub.s32 0, %v3067
        %v3069 = vrot.slane %v2843, %v3068
        %v3070 = vlaneseq
        %v3071 = vshrl.u32 %v3070, 7
        %v3072 = vsub.s32 0, %v3071
        %v3073 = vrot.slane %v2844, %v3072
        %v3074 = vlaneseq
        %v3075 = vshrl.u32 %v3074, 7
        %v3076 = vsub.s32 0, %v3075
        %v3077 = vrot.slane %v2845, %v3076
        %v3078 = vlaneseq
        %v3079 = vshrl.u32 %v3078, 7
        %v3080 = vsub.s32 0, %v3079
        %v3081 = vrot.slane %v2846, %v3080
        %v3082 = vlaneseq
        %v3083 = vshrl.u32 %v3082, 7
        %v3084 = vsub.s32 0, %v3083
        %v3085 = vrot.slane %v2847, %v3084
        %v3086 = vlaneseq
        %v3087 = vshrl.u32 %v3086, 7
        %v3088 = vsub.s32 0, %v3087
        %v3089 = vrot.slane %v2848, %v3088
        %v3090 = vlaneseq
        %v3091 = vshrl.u32 %v3090, 7
        %v3092 = vsub.s32 0, %v3091
        %v3093 = vrot.slane %v2849, %v3092
        %v3094 = vlaneseq
        %v3095 = vshrl.u32 %v3094, 7
        %v3096 = vsub.s32 0, %v3095
        %v3097 = vrot.slane %v2850, %v3096
        %v3098 = vlaneseq
        %v3099 = vshrl.u32 %v3098, 7
        %v3100 = vsub.s32 0, %v3099
        %v3101 = vrot.slane %v2851, %v3100
        %v3102 = vlaneseq
        %v3103 = vshrl.u32 %v3102, 7
        %v3104 = vsub.s32 0, %v3103
        %v3105 = vrot.slane %v2852, %v3104
        %v3106 = vlaneseq
        %v3107 = vshrl.u32 %v3106, 7
        %v3108 = vsub.s32 0, %v3107
        %v3109 = vrot.slane %v2853, %v3108
        %v3174 = vcombine.low %v2857, %v2861
        %v3175 = vcombine.low %v2865, %v2869
        %v3176 = vcombine.low %v2873, %v2877
        %v3177 = vcombine.low %v2881, %v2885
        %v3178 = vcombine.low %v2889, %v2893
        %v3179 = vcombine.low %v2897, %v2901
        %v3180 = vcombine.low %v2905, %v2909
        %v3181 = vcombine.low %v2913, %v2917
        %v3182 = vcombine.low %v2921, %v2925
        %v3183 = vcombine.low %v2929, %v2933
        %v3184 = vcombine.low %v2937, %v2941
        %v3185 = vcombine.low %v2945, %v2949
        %v3186 = vcombine.low %v2953, %v2957
        %v3187 = vcombine.low %v2961, %v2965
        %v3188 = vcombine.low %v2969, %v2973
        %v3189 = vcombine.low %v2977, %v2981
        %v3190 = vcombine.low %v2985, %v2989
        %v3191 = vcombine.low %v2993, %v2997
        %v3192 = vcombine.low %v3001, %v3005
        %v3193 = vcombine.low %v3009, %v3013
        %v3194 = vcombine.low %v3017, %v3021
        %v3195 = vcombine.low %v3025, %v3029
        %v3196 = vcombine.low %v3033, %v3037
        %v3197 = vcombine.low %v3041, %v3045
        %v3198 = vcombine.low %v3049, %v3053
        %v3199 = vcombine.low %v3057, %v3061
        %v3200 = vcombine.low %v3065, %v3069
        %v3201 = vcombine.low %v3073, %v3077
        %v3202 = vcombine.low %v3081, %v3085
        %v3203 = vcombine.low %v3089, %v3093
        %v3204 = vcombine.low %v3097, %v3101
        %v3205 = vcombine.low %v3105, %v3109
        %v3238 = vadd.f32 %v588, %v3174
        %v3239 = vadd.f32 %v589, %v3175
        %v3240 = vadd.f32 %v590, %v3176
        %v3241 = vadd.f32 %v591, %v3177
        %v3242 = vadd.f32 %v592, %v3174
        %v3243 = vadd.f32 %v593, %v3175
        %v3244 = vadd.f32 %v594, %v3176
        %v3245 = vadd.f32 %v595, %v3177
        %v3246 = vadd.f32 %v596, %v3174
        %v3247 = vadd.f32 %v597, %v3175
        %v3248 = vadd.f32 %v598, %v3176
        %v3249 = vadd.f32 %v599, %v3177
        %v3250 = vadd.f32 %v600, %v3174
        %v3251 = vadd.f32 %v601, %v3175
        %v3252 = vadd.f32 %v602, %v3176
        %v3253 = vadd.f32 %v603, %v3177
        %v3254 = vadd.f32 %v604, %v3178
        %v3255 = vadd.f32 %v605, %v3179
        %v3256 = vadd.f32 %v606, %v3180
        %v3257 = vadd.f32 %v607, %v3181
        %v3258 = vadd.f32 %v608, %v3178
        %v3259 = vadd.f32 %v609, %v3179
        %v3260 = vadd.f32 %v610, %v3180
        %v3261 = vadd.f32 %v611, %v3181
        %v3262 = vadd.f32 %v612, %v3178
        %v3263 = vadd.f32 %v613, %v3179
        %v3264 = vadd.f32 %v614, %v3180
        %v3265 = vadd.f32 %v615, %v3181
        %v3266 = vadd.f32 %v616, %v3178
        %v3267 = vadd.f32 %v617, %v3179
        %v3268 = vadd.f32 %v618, %v3180
        %v3269 = vadd.f32 %v619, %v3181
        %v3270 = vadd.f32 %v620, %v3182
        %v3271 = vadd.f32 %v621, %v3183
        %v3272 = vadd.f32 %v622, %v3184
        %v3273 = vadd.f32 %v623, %v3185
        %v3274 = vadd.f32 %v624, %v3182
        %v3275 = vadd.f32 %v625, %v3183
        %v3276 = vadd.f32 %v626, %v3184
        %v3277 = vadd.f32 %v627, %v3185
        %v3278 = vadd.f32 %v628, %v3182
        %v3279 = vadd.f32 %v629, %v3183
        %v3280 = vadd.f32 %v630, %v3184
        %v3281 = vadd.f32 %v631, %v3185
        %v3282 = vadd.f32 %v632, %v3182
        %v3283 = vadd.f32 %v633, %v3183
        %v3284 = vadd.f32 %v634, %v3184
        %v3285 = vadd.f32 %v635, %v3185
        %v3286 = vadd.f32 %v636, %v3186
        %v3287 = vadd.f32 %v637, %v3187
        %v3288 = vadd.f32 %v638, %v3188
        %v3289 = vadd.f32 %v639, %v3189
        %v3290 = vadd.f32 %v640, %v3186
        %v3291 = vadd.f32 %v641, %v3187
        %v3292 = vadd.f32 %v642, %v3188
        %v3293 = vadd.f32 %v643, %v3189
        %v3294 = vadd.f32 %v644, %v3186
        %v3295 = vadd.f32 %v645, %v3187
        %v3296 = vadd.f32 %v646, %v3188
        %v3297 = vadd.f32 %v647, %v3189
        %v3298 = vadd.f32 %v648, %v3186
        %v3299 = vadd.f32 %v649, %v3187
        %v3300 = vadd.f32 %v650, %v3188
        %v3301 = vadd.f32 %v651, %v3189
        %v3302 = vadd.f32 %v652, %v3190
        %v3303 = vadd.f32 %v653, %v3191
        %v3304 = vadd.f32 %v654, %v3192
        %v3305 = vadd.f32 %v655, %v3193
        %v3306 = vadd.f32 %v656, %v3190
        %v3307 = vadd.f32 %v657, %v3191
        %v3308 = vadd.f32 %v658, %v3192
        %v3309 = vadd.f32 %v659, %v3193
        %v3310 = vadd.f32 %v660, %v3190
        %v3311 = vadd.f32 %v661, %v3191
        %v3312 = vadd.f32 %v662, %v3192
        %v3313 = vadd.f32 %v663, %v3193
        %v3314 = vadd.f32 %v664, %v3190
        %v3315 = vadd.f32 %v665, %v3191
        %v3316 = vadd.f32 %v666, %v3192
        %v3317 = vadd.f32 %v667, %v3193
        %v3318 = vadd.f32 %v668, %v3194
        %v3319 = vadd.f32 %v669, %v3195
        %v3320 = vadd.f32 %v670, %v3196
        %v3321 = vadd.f32 %v671, %v3197
        %v3322 = vadd.f32 %v672, %v3194
        %v3323 = vadd.f32 %v673, %v3195
        %v3324 = vadd.f32 %v674, %v3196
        %v3325 = vadd.f32 %v675, %v3197
        %v3326 = vadd.f32 %v676, %v3194
        %v3327 = vadd.f32 %v677, %v3195
        %v3328 = vadd.f32 %v678, %v3196
        %v3329 = vadd.f32 %v679, %v3197
        %v3330 = vadd.f32 %v680, %v3194
        %v3331 = vadd.f32 %v681, %v3195
        %v3332 = vadd.f32 %v682, %v3196
        %v3333 = vadd.f32 %v683, %v3197
        %v3334 = vadd.f32 %v684, %v3198
        %v3335 = vadd.f32 %v685, %v3199
        %v3336 = vadd.f32 %v686, %v3200
        %v3337 = vadd.f32 %v687, %v3201
        %v3338 = vadd.f32 %v688, %v3198
        %v3339 = vadd.f32 %v689, %v3199
        %v3340 = vadd.f32 %v690, %v3200
        %v3341 = vadd.f32 %v691, %v3201
        %v3342 = vadd.f32 %v692, %v3198
        %v3343 = vadd.f32 %v693, %v3199
        %v3344 = vadd.f32 %v694, %v3200
        %v3345 = vadd.f32 %v695, %v3201
        %v3346 = vadd.f32 %v696, %v3198
        %v3347 = vadd.f32 %v697, %v3199
        %v3348 = vadd.f32 %v698, %v3200
        %v3349 = vadd.f32 %v699, %v3201
        %v3350 = vadd.f32 %v700, %v3202
        %v3351 = vadd.f32 %v701, %v3203
        %v3352 = vadd.f32 %v702, %v3204
        %v3353 = vadd.f32 %v703, %v3205
        %v3354 = vadd.f32 %v704, %v3202
        %v3355 = vadd.f32 %v705, %v3203
        %v3356 = vadd.f32 %v706, %v3204
        %v3357 = vadd.f32 %v707, %v3205
        %v3358 = vadd.f32 %v708, %v3202
        %v3359 = vadd.f32 %v709, %v3203
        %v3360 = vadd.f32 %v710, %v3204
        %v3361 = vadd.f32 %v711, %v3205
        %v3362 = vadd.f32 %v712, %v3202
        %v3363 = vadd.f32 %v713, %v3203
        %v3364 = vadd.f32 %v714, %v3204
        %v3365 = vadd.f32 %v715, %v3205
        %3366 = vst [vmem:[%s540] sm:$0xff] %v3238
        %3367 = vst [vmem:[%s540 + $0x8] sm:$0xff] %v3239
        %3368 = vst [vmem:[%s540 + $0x10] sm:$0xff] %v3240
        %3369 = vst [vmem:[%s540 + $0x18] sm:$0xff] %v3241
        %3370 = vst [vmem:[%s540 + $0x20] sm:$0xff] %v3242
        %3371 = vst [vmem:[%s540 + $0x28] sm:$0xff] %v3243
        %3372 = vst [vmem:[%s540 + $0x30] sm:$0xff] %v3244
        %3373 = vst [vmem:[%s540 + $0x38] sm:$0xff] %v3245
        %3374 = vst [vmem:[%s540 + $0x40] sm:$0xff] %v3246
        %3375 = vst [vmem:[%s540 + $0x48] sm:$0xff] %v3247
        %3376 = vst [vmem:[%s540 + $0x50] sm:$0xff] %v3248
        %3377 = vst [vmem:[%s540 + $0x58] sm:$0xff] %v3249
        %3378 = vst [vmem:[%s540 + $0x60] sm:$0xff] %v3250
        %3379 = vst [vmem:[%s540 + $0x68] sm:$0xff] %v3251
        %3380 = vst [vmem:[%s540 + $0x70] sm:$0xff] %v3252
        %3381 = vst [vmem:[%s540 + $0x78] sm:$0xff] %v3253
        %3382 = vst [vmem:[%s540 + $0x80] sm:$0xff] %v3254
        %3383 = vst [vmem:[%s540 + $0x88] sm:$0xff] %v3255
        %3384 = vst [vmem:[%s540 + $0x90] sm:$0xff] %v3256
        %3385 = vst [vmem:[%s540 + $0x98] sm:$0xff] %v3257
        %3386 = vst [vmem:[%s540 + $0xa0] sm:$0xff] %v3258
        %3387 = vst [vmem:[%s540 + $0xa8] sm:$0xff] %v3259
        %3388 = vst [vmem:[%s540 + $0xb0] sm:$0xff] %v3260
        %3389 = vst [vmem:[%s540 + $0xb8] sm:$0xff] %v3261
        %3390 = vst [vmem:[%s540 + $0xc0] sm:$0xff] %v3262
        %3391 = vst [vmem:[%s540 + $0xc8] sm:$0xff] %v3263
        %3392 = vst [vmem:[%s540 + $0xd0] sm:$0xff] %v3264
        %3393 = vst [vmem:[%s540 + $0xd8] sm:$0xff] %v3265
        %3394 = vst [vmem:[%s540 + $0xe0] sm:$0xff] %v3266
        %3395 = vst [vmem:[%s540 + $0xe8] sm:$0xff] %v3267
        %3396 = vst [vmem:[%s540 + $0xf0] sm:$0xff] %v3268
        %3397 = vst [vmem:[%s540 + $0xf8] sm:$0xff] %v3269
        %3398 = vst [vmem:[%s540 + $0x100] sm:$0xff] %v3270
        %3399 = vst [vmem:[%s540 + $0x108] sm:$0xff] %v3271
        %3400 = vst [vmem:[%s540 + $0x110] sm:$0xff] %v3272
        %3401 = vst [vmem:[%s540 + $0x118] sm:$0xff] %v3273
        %3402 = vst [vmem:[%s540 + $0x120] sm:$0xff] %v3274
        %3403 = vst [vmem:[%s540 + $0x128] sm:$0xff] %v3275
        %3404 = vst [vmem:[%s540 + $0x130] sm:$0xff] %v3276
        %3405 = vst [vmem:[%s540 + $0x138] sm:$0xff] %v3277
        %3406 = vst [vmem:[%s540 + $0x140] sm:$0xff] %v3278
        %3407 = vst [vmem:[%s540 + $0x148] sm:$0xff] %v3279
        %3408 = vst [vmem:[%s540 + $0x150] sm:$0xff] %v3280
        %3409 = vst [vmem:[%s540 + $0x158] sm:$0xff] %v3281
        %3410 = vst [vmem:[%s540 + $0x160] sm:$0xff] %v3282
        %3411 = vst [vmem:[%s540 + $0x168] sm:$0xff] %v3283
        %3412 = vst [vmem:[%s540 + $0x170] sm:$0xff] %v3284
        %3413 = vst [vmem:[%s540 + $0x178] sm:$0xff] %v3285
        %3414 = vst [vmem:[%s540 + $0x180] sm:$0xff] %v3286
        %3415 = vst [vmem:[%s540 + $0x188] sm:$0xff] %v3287
        %3416 = vst [vmem:[%s540 + $0x190] sm:$0xff] %v3288
        %3417 = vst [vmem:[%s540 + $0x198] sm:$0xff] %v3289
        %3418 = vst [vmem:[%s540 + $0x1a0] sm:$0xff] %v3290
        %3419 = vst [vmem:[%s540 + $0x1a8] sm:$0xff] %v3291
        %3420 = vst [vmem:[%s540 + $0x1b0] sm:$0xff] %v3292
        %3421 = vst [vmem:[%s540 + $0x1b8] sm:$0xff] %v3293
        %3422 = vst [vmem:[%s540 + $0x1c0] sm:$0xff] %v3294
        %3423 = vst [vmem:[%s540 + $0x1c8] sm:$0xff] %v3295
        %3424 = vst [vmem:[%s540 + $0x1d0] sm:$0xff] %v3296
        %3425 = vst [vmem:[%s540 + $0x1d8] sm:$0xff] %v3297
        %3426 = vst [vmem:[%s540 + $0x1e0] sm:$0xff] %v3298
        %3427 = vst [vmem:[%s540 + $0x1e8] sm:$0xff] %v3299
        %3428 = vst [vmem:[%s540 + $0x1f0] sm:$0xff] %v3300
        %3429 = vst [vmem:[%s540 + $0x1f8] sm:$0xff] %v3301
        %3430 = vst [vmem:[%s540 + $0x200] sm:$0xff] %v3302
        %3431 = vst [vmem:[%s540 + $0x208] sm:$0xff] %v3303
        %3432 = vst [vmem:[%s540 + $0x210] sm:$0xff] %v3304
        %3433 = vst [vmem:[%s540 + $0x218] sm:$0xff] %v3305
        %3434 = vst [vmem:[%s540 + $0x220] sm:$0xff] %v3306
        %3435 = vst [vmem:[%s540 + $0x228] sm:$0xff] %v3307
        %3436 = vst [vmem:[%s540 + $0x230] sm:$0xff] %v3308
        %3437 = vst [vmem:[%s540 + $0x238] sm:$0xff] %v3309
        %3438 = vst [vmem:[%s540 + $0x240] sm:$0xff] %v3310
        %3439 = vst [vmem:[%s540 + $0x248] sm:$0xff] %v3311
        %3440 = vst [vmem:[%s540 + $0x250] sm:$0xff] %v3312
        %3441 = vst [vmem:[%s540 + $0x258] sm:$0xff] %v3313
        %3442 = vst [vmem:[%s540 + $0x260] sm:$0xff] %v3314
        %3443 = vst [vmem:[%s540 + $0x268] sm:$0xff] %v3315
        %3444 = vst [vmem:[%s540 + $0x270] sm:$0xff] %v3316
        %3445 = vst [vmem:[%s540 + $0x278] sm:$0xff] %v3317
        %3446 = vst [vmem:[%s540 + $0x280] sm:$0xff] %v3318
        %3447 = vst [vmem:[%s540 + $0x288] sm:$0xff] %v3319
        %3448 = vst [vmem:[%s540 + $0x290] sm:$0xff] %v3320
        %3449 = vst [vmem:[%s540 + $0x298] sm:$0xff] %v3321
        %3450 = vst [vmem:[%s540 + $0x2a0] sm:$0xff] %v3322
        %3451 = vst [vmem:[%s540 + $0x2a8] sm:$0xff] %v3323
        %3452 = vst [vmem:[%s540 + $0x2b0] sm:$0xff] %v3324
        %3453 = vst [vmem:[%s540 + $0x2b8] sm:$0xff] %v3325
        %3454 = vst [vmem:[%s540 + $0x2c0] sm:$0xff] %v3326
        %3455 = vst [vmem:[%s540 + $0x2c8] sm:$0xff] %v3327
        %3456 = vst [vmem:[%s540 + $0x2d0] sm:$0xff] %v3328
        %3457 = vst [vmem:[%s540 + $0x2d8] sm:$0xff] %v3329
        %3458 = vst [vmem:[%s540 + $0x2e0] sm:$0xff] %v3330
        %3459 = vst [vmem:[%s540 + $0x2e8] sm:$0xff] %v3331
        %3460 = vst [vmem:[%s540 + $0x2f0] sm:$0xff] %v3332
        %3461 = vst [vmem:[%s540 + $0x2f8] sm:$0xff] %v3333
        %3462 = vst [vmem:[%s540 + $0x300] sm:$0xff] %v3334
        %3463 = vst [vmem:[%s540 + $0x308] sm:$0xff] %v3335
        %3464 = vst [vmem:[%s540 + $0x310] sm:$0xff] %v3336
        %3465 = vst [vmem:[%s540 + $0x318] sm:$0xff] %v3337
        %3466 = vst [vmem:[%s540 + $0x320] sm:$0xff] %v3338
        %3467 = vst [vmem:[%s540 + $0x328] sm:$0xff] %v3339
        %3468 = vst [vmem:[%s540 + $0x330] sm:$0xff] %v3340
        %3469 = vst [vmem:[%s540 + $0x338] sm:$0xff] %v3341
        %3470 = vst [vmem:[%s540 + $0x340] sm:$0xff] %v3342
        %3471 = vst [vmem:[%s540 + $0x348] sm:$0xff] %v3343
        %3472 = vst [vmem:[%s540 + $0x350] sm:$0xff] %v3344
        %3473 = vst [vmem:[%s540 + $0x358] sm:$0xff] %v3345
        %3474 = vst [vmem:[%s540 + $0x360] sm:$0xff] %v3346
        %3475 = vst [vmem:[%s540 + $0x368] sm:$0xff] %v3347
        %3476 = vst [vmem:[%s540 + $0x370] sm:$0xff] %v3348
        %3477 = vst [vmem:[%s540 + $0x378] sm:$0xff] %v3349
        %3478 = vst [vmem:[%s540 + $0x380] sm:$0xff] %v3350
        %3479 = vst [vmem:[%s540 + $0x388] sm:$0xff] %v3351
        %3480 = vst [vmem:[%s540 + $0x390] sm:$0xff] %v3352
        %3481 = vst [vmem:[%s540 + $0x398] sm:$0xff] %v3353
        %3482 = vst [vmem:[%s540 + $0x3a0] sm:$0xff] %v3354
        %3483 = vst [vmem:[%s540 + $0x3a8] sm:$0xff] %v3355
        %3484 = vst [vmem:[%s540 + $0x3b0] sm:$0xff] %v3356
        %3485 = vst [vmem:[%s540 + $0x3b8] sm:$0xff] %v3357
        %3486 = vst [vmem:[%s540 + $0x3c0] sm:$0xff] %v3358
        %3487 = vst [vmem:[%s540 + $0x3c8] sm:$0xff] %v3359
        %3488 = vst [vmem:[%s540 + $0x3d0] sm:$0xff] %v3360
        %3489 = vst [vmem:[%s540 + $0x3d8] sm:$0xff] %v3361
        %3490 = vst [vmem:[%s540 + $0x3e0] sm:$0xff] %v3362
        %3491 = vst [vmem:[%s540 + $0x3e8] sm:$0xff] %v3363
        %3492 = vst [vmem:[%s540 + $0x3f0] sm:$0xff] %v3364
        %3493 = vst [vmem:[%s540 + $0x3f8] sm:$0xff] %v3365
        %v3494 = vld [vmem:[%s472] sm:$0xff]
        %v3495 = vld [vmem:[%s472 + $0x8] sm:$0xff]
        %v3496 = vld [vmem:[%s472 + $0x10] sm:$0xff]
        %v3497 = vld [vmem:[%s472 + $0x18] sm:$0xff]
        %v3498 = vld [vmem:[%s472 + $0x20] sm:$0xff]
        %v3499 = vld [vmem:[%s472 + $0x28] sm:$0xff]
        %v3500 = vld [vmem:[%s472 + $0x30] sm:$0xff]
        %v3501 = vld [vmem:[%s472 + $0x38] sm:$0xff]
        %v3502 = vld [vmem:[%s472 + $0x40] sm:$0xff]
        %v3503 = vld [vmem:[%s472 + $0x48] sm:$0xff]
        %v3504 = vld [vmem:[%s472 + $0x50] sm:$0xff]
        %v3505 = vld [vmem:[%s472 + $0x58] sm:$0xff]
        %v3506 = vld [vmem:[%s472 + $0x60] sm:$0xff]
        %v3507 = vld [vmem:[%s472 + $0x68] sm:$0xff]
        %v3508 = vld [vmem:[%s472 + $0x70] sm:$0xff]
        %v3509 = vld [vmem:[%s472 + $0x78] sm:$0xff]
        %v3510 = vld [vmem:[%s472 + $0x80] sm:$0xff]
        %v3511 = vld [vmem:[%s472 + $0x88] sm:$0xff]
        %v3512 = vld [vmem:[%s472 + $0x90] sm:$0xff]
        %v3513 = vld [vmem:[%s472 + $0x98] sm:$0xff]
        %v3514 = vld [vmem:[%s472 + $0xa0] sm:$0xff]
        %v3515 = vld [vmem:[%s472 + $0xa8] sm:$0xff]
        %v3516 = vld [vmem:[%s472 + $0xb0] sm:$0xff]
        %v3517 = vld [vmem:[%s472 + $0xb8] sm:$0xff]
        %v3518 = vld [vmem:[%s472 + $0xc0] sm:$0xff]
        %v3519 = vld [vmem:[%s472 + $0xc8] sm:$0xff]
        %v3520 = vld [vmem:[%s472 + $0xd0] sm:$0xff]
        %v3521 = vld [vmem:[%s472 + $0xd8] sm:$0xff]
        %v3522 = vld [vmem:[%s472 + $0xe0] sm:$0xff]
        %v3523 = vld [vmem:[%s472 + $0xe8] sm:$0xff]
        %v3524 = vld [vmem:[%s472 + $0xf0] sm:$0xff]
        %v3525 = vld [vmem:[%s472 + $0xf8] sm:$0xff]
        %v3527 = vunpack.c.l.s4 1983009808
        %v3528 = vunpack.c.0.s8 %v3527
        %v3529 = vlaneseq
        %v3530 = vshrl.u32 %v3529, 7
        %v3531 = vsub.s32 %v3528, %v3530
        %v3532 = vrot.slane %v3174, %v3531
        %v3534 = vunpack.c.l.s4 1983009808
        %v3535 = vunpack.c.0.s8 %v3534
        %v3536 = vlaneseq
        %v3537 = vshrl.u32 %v3536, 7
        %v3538 = vsub.s32 %v3535, %v3537
        %v3539 = vrot.slane %v3175, %v3538
        %v3540 = vcombine.low %v3532, %v3539
        %v3542 = vunpack.c.l.s4 1983009808
        %v3543 = vunpack.c.0.s8 %v3542
        %v3544 = vlaneseq
        %v3545 = vshrl.u32 %v3544, 7
        %v3546 = vsub.s32 %v3543, %v3545
        %v3547 = vrot.slane %v3176, %v3546
        %v3549 = vunpack.c.l.s4 1983009808
        %v3550 = vunpack.c.0.s8 %v3549
        %v3551 = vlaneseq
        %v3552 = vshrl.u32 %v3551, 7
        %v3553 = vsub.s32 %v3550, %v3552
        %v3554 = vrot.slane %v3177, %v3553
        %v3555 = vcombine.low %v3547, %v3554
        %v3557 = vunpack.c.l.s4 1983009808
        %v3558 = vunpack.c.0.s8 %v3557
        %v3559 = vlaneseq
        %v3560 = vshrl.u32 %v3559, 7
        %v3561 = vsub.s32 %v3558, %v3560
        %v3562 = vrot.slane %v3178, %v3561
        %v3564 = vunpack.c.l.s4 1983009808
        %v3565 = vunpack.c.0.s8 %v3564
        %v3566 = vlaneseq
        %v3567 = vshrl.u32 %v3566, 7
        %v3568 = vsub.s32 %v3565, %v3567
        %v3569 = vrot.slane %v3179, %v3568
        %v3570 = vcombine.low %v3562, %v3569
        %v3572 = vunpack.c.l.s4 1983009808
        %v3573 = vunpack.c.0.s8 %v3572
        %v3574 = vlaneseq
        %v3575 = vshrl.u32 %v3574, 7
        %v3576 = vsub.s32 %v3573, %v3575
        %v3577 = vrot.slane %v3180, %v3576
        %v3579 = vunpack.c.l.s4 1983009808
        %v3580 = vunpack.c.0.s8 %v3579
        %v3581 = vlaneseq
        %v3582 = vshrl.u32 %v3581, 7
        %v3583 = vsub.s32 %v3580, %v3582
        %v3584 = vrot.slane %v3181, %v3583
        %v3585 = vcombine.low %v3577, %v3584
        %v3587 = vunpack.c.l.s4 1983009808
        %v3588 = vunpack.c.0.s8 %v3587
        %v3589 = vlaneseq
        %v3590 = vshrl.u32 %v3589, 7
        %v3591 = vsub.s32 %v3588, %v3590
        %v3592 = vrot.slane %v3182, %v3591
        %v3594 = vunpack.c.l.s4 1983009808
        %v3595 = vunpack.c.0.s8 %v3594
        %v3596 = vlaneseq
        %v3597 = vshrl.u32 %v3596, 7
        %v3598 = vsub.s32 %v3595, %v3597
        %v3599 = vrot.slane %v3183, %v3598
        %v3600 = vcombine.low %v3592, %v3599
        %v3602 = vunpack.c.l.s4 1983009808
        %v3603 = vunpack.c.0.s8 %v3602
        %v3604 = vlaneseq
        %v3605 = vshrl.u32 %v3604, 7
        %v3606 = vsub.s32 %v3603, %v3605
        %v3607 = vrot.slane %v3184, %v3606
        %v3609 = vunpack.c.l.s4 1983009808
        %v3610 = vunpack.c.0.s8 %v3609
        %v3611 = vlaneseq
        %v3612 = vshrl.u32 %v3611, 7
        %v3613 = vsub.s32 %v3610, %v3612
        %v3614 = vrot.slane %v3185, %v3613
        %v3615 = vcombine.low %v3607, %v3614
        %v3617 = vunpack.c.l.s4 1983009808
        %v3618 = vunpack.c.0.s8 %v3617
        %v3619 = vlaneseq
        %v3620 = vshrl.u32 %v3619, 7
        %v3621 = vsub.s32 %v3618, %v3620
        %v3622 = vrot.slane %v3186, %v3621
        %v3624 = vunpack.c.l.s4 1983009808
        %v3625 = vunpack.c.0.s8 %v3624
        %v3626 = vlaneseq
        %v3627 = vshrl.u32 %v3626, 7
        %v3628 = vsub.s32 %v3625, %v3627
        %v3629 = vrot.slane %v3187, %v3628
        %v3630 = vcombine.low %v3622, %v3629
        %v3632 = vunpack.c.l.s4 1983009808
        %v3633 = vunpack.c.0.s8 %v3632
        %v3634 = vlaneseq
        %v3635 = vshrl.u32 %v3634, 7
        %v3636 = vsub.s32 %v3633, %v3635
        %v3637 = vrot.slane %v3188, %v3636
        %v3639 = vunpack.c.l.s4 1983009808
        %v3640 = vunpack.c.0.s8 %v3639
        %v3641 = vlaneseq
        %v3642 = vshrl.u32 %v3641, 7
        %v3643 = vsub.s32 %v3640, %v3642
        %v3644 = vrot.slane %v3189, %v3643
        %v3645 = vcombine.low %v3637, %v3644
        %v3647 = vunpack.c.l.s4 1983009808
        %v3648 = vunpack.c.0.s8 %v3647
        %v3649 = vlaneseq
        %v3650 = vshrl.u32 %v3649, 7
        %v3651 = vsub.s32 %v3648, %v3650
        %v3652 = vrot.slane %v3190, %v3651
        %v3654 = vunpack.c.l.s4 1983009808
        %v3655 = vunpack.c.0.s8 %v3654
        %v3656 = vlaneseq
        %v3657 = vshrl.u32 %v3656, 7
        %v3658 = vsub.s32 %v3655, %v3657
        %v3659 = vrot.slane %v3191, %v3658
        %v3660 = vcombine.low %v3652, %v3659
        %v3662 = vunpack.c.l.s4 1983009808
        %v3663 = vunpack.c.0.s8 %v3662
        %v3664 = vlaneseq
        %v3665 = vshrl.u32 %v3664, 7
        %v3666 = vsub.s32 %v3663, %v3665
        %v3667 = vrot.slane %v3192, %v3666
        %v3669 = vunpack.c.l.s4 1983009808
        %v3670 = vunpack.c.0.s8 %v3669
        %v3671 = vlaneseq
        %v3672 = vshrl.u32 %v3671, 7
        %v3673 = vsub.s32 %v3670, %v3672
        %v3674 = vrot.slane %v3193, %v3673
        %v3675 = vcombine.low %v3667, %v3674
        %v3677 = vunpack.c.l.s4 1983009808
        %v3678 = vunpack.c.0.s8 %v3677
        %v3679 = vlaneseq
        %v3680 = vshrl.u32 %v3679, 7
        %v3681 = vsub.s32 %v3678, %v3680
        %v3682 = vrot.slane %v3194, %v3681
        %v3684 = vunpack.c.l.s4 1983009808
        %v3685 = vunpack.c.0.s8 %v3684
        %v3686 = vlaneseq
        %v3687 = vshrl.u32 %v3686, 7
        %v3688 = vsub.s32 %v3685, %v3687
        %v3689 = vrot.slane %v3195, %v3688
        %v3690 = vcombine.low %v3682, %v3689
        %v3692 = vunpack.c.l.s4 1983009808
        %v3693 = vunpack.c.0.s8 %v3692
        %v3694 = vlaneseq
        %v3695 = vshrl.u32 %v3694, 7
        %v3696 = vsub.s32 %v3693, %v3695
        %v3697 = vrot.slane %v3196, %v3696
        %v3699 = vunpack.c.l.s4 1983009808
        %v3700 = vunpack.c.0.s8 %v3699
        %v3701 = vlaneseq
        %v3702 = vshrl.u32 %v3701, 7
        %v3703 = vsub.s32 %v3700, %v3702
        %v3704 = vrot.slane %v3197, %v3703
        %v3705 = vcombine.low %v3697, %v3704
        %v3707 = vunpack.c.l.s4 1983009808
        %v3708 = vunpack.c.0.s8 %v3707
        %v3709 = vlaneseq
        %v3710 = vshrl.u32 %v3709, 7
        %v3711 = vsub.s32 %v3708, %v3710
        %v3712 = vrot.slane %v3198, %v3711
        %v3714 = vunpack.c.l.s4 1983009808
        %v3715 = vunpack.c.0.s8 %v3714
        %v3716 = vlaneseq
        %v3717 = vshrl.u32 %v3716, 7
        %v3718 = vsub.s32 %v3715, %v3717
        %v3719 = vrot.slane %v3199, %v3718
        %v3720 = vcombine.low %v3712, %v3719
        %v3722 = vunpack.c.l.s4 1983009808
        %v3723 = vunpack.c.0.s8 %v3722
        %v3724 = vlaneseq
        %v3725 = vshrl.u32 %v3724, 7
        %v3726 = vsub.s32 %v3723, %v3725
        %v3727 = vrot.slane %v3200, %v3726
        %v3729 = vunpack.c.l.s4 1983009808
        %v3730 = vunpack.c.0.s8 %v3729
        %v3731 = vlaneseq
        %v3732 = vshrl.u32 %v3731, 7
        %v3733 = vsub.s32 %v3730, %v3732
        %v3734 = vrot.slane %v3201, %v3733
        %v3735 = vcombine.low %v3727, %v3734
        %v3737 = vunpack.c.l.s4 1983009808
        %v3738 = vunpack.c.0.s8 %v3737
        %v3739 = vlaneseq
        %v3740 = vshrl.u32 %v3739, 7
        %v3741 = vsub.s32 %v3738, %v3740
        %v3742 = vrot.slane %v3202, %v3741
        %v3744 = vunpack.c.l.s4 1983009808
        %v3745 = vunpack.c.0.s8 %v3744
        %v3746 = vlaneseq
        %v3747 = vshrl.u32 %v3746, 7
        %v3748 = vsub.s32 %v3745, %v3747
        %v3749 = vrot.slane %v3203, %v3748
        %v3750 = vcombine.low %v3742, %v3749
        %v3752 = vunpack.c.l.s4 1983009808
        %v3753 = vunpack.c.0.s8 %v3752
        %v3754 = vlaneseq
        %v3755 = vshrl.u32 %v3754, 7
        %v3756 = vsub.s32 %v3753, %v3755
        %v3757 = vrot.slane %v3204, %v3756
        %v3759 = vunpack.c.l.s4 1983009808
        %v3760 = vunpack.c.0.s8 %v3759
        %v3761 = vlaneseq
        %v3762 = vshrl.u32 %v3761, 7
        %v3763 = vsub.s32 %v3760, %v3762
        %v3764 = vrot.slane %v3205, %v3763
        %v3765 = vcombine.low %v3757, %v3764
        %v3782 = vadd.f32 %v3494, %v3540
        %v3783 = vadd.f32 %v3495, %v3555
        %v3784 = vadd.f32 %v3496, %v3540
        %v3785 = vadd.f32 %v3497, %v3555
        %v3786 = vadd.f32 %v3498, %v3570
        %v3787 = vadd.f32 %v3499, %v3585
        %v3788 = vadd.f32 %v3500, %v3570
        %v3789 = vadd.f32 %v3501, %v3585
        %v3790 = vadd.f32 %v3502, %v3600
        %v3791 = vadd.f32 %v3503, %v3615
        %v3792 = vadd.f32 %v3504, %v3600
        %v3793 = vadd.f32 %v3505, %v3615
        %v3794 = vadd.f32 %v3506, %v3630
        %v3795 = vadd.f32 %v3507, %v3645
        %v3796 = vadd.f32 %v3508, %v3630
        %v3797 = vadd.f32 %v3509, %v3645
        %v3798 = vadd.f32 %v3510, %v3660
        %v3799 = vadd.f32 %v3511, %v3675
        %v3800 = vadd.f32 %v3512, %v3660
        %v3801 = vadd.f32 %v3513, %v3675
        %v3802 = vadd.f32 %v3514, %v3690
        %v3803 = vadd.f32 %v3515, %v3705
        %v3804 = vadd.f32 %v3516, %v3690
        %v3805 = vadd.f32 %v3517, %v3705
        %v3806 = vadd.f32 %v3518, %v3720
        %v3807 = vadd.f32 %v3519, %v3735
        %v3808 = vadd.f32 %v3520, %v3720
        %v3809 = vadd.f32 %v3521, %v3735
        %v3810 = vadd.f32 %v3522, %v3750
        %v3811 = vadd.f32 %v3523, %v3765
        %v3812 = vadd.f32 %v3524, %v3750
        %v3813 = vadd.f32 %v3525, %v3765
        %3814 = vst [vmem:[%s547] sm:$0xff] %v3782
        %3815 = vst [vmem:[%s547 + $0x8] sm:$0xff] %v3783
        %3816 = vst [vmem:[%s547 + $0x10] sm:$0xff] %v3784
        %3817 = vst [vmem:[%s547 + $0x18] sm:$0xff] %v3785
        %3818 = vst [vmem:[%s547 + $0x20] sm:$0xff] %v3786
        %3819 = vst [vmem:[%s547 + $0x28] sm:$0xff] %v3787
        %3820 = vst [vmem:[%s547 + $0x30] sm:$0xff] %v3788
        %3821 = vst [vmem:[%s547 + $0x38] sm:$0xff] %v3789
        %3822 = vst [vmem:[%s547 + $0x40] sm:$0xff] %v3790
        %3823 = vst [vmem:[%s547 + $0x48] sm:$0xff] %v3791
        %3824 = vst [vmem:[%s547 + $0x50] sm:$0xff] %v3792
        %3825 = vst [vmem:[%s547 + $0x58] sm:$0xff] %v3793
        %3826 = vst [vmem:[%s547 + $0x60] sm:$0xff] %v3794
        %3827 = vst [vmem:[%s547 + $0x68] sm:$0xff] %v3795
        %3828 = vst [vmem:[%s547 + $0x70] sm:$0xff] %v3796
        %3829 = vst [vmem:[%s547 + $0x78] sm:$0xff] %v3797
        %3830 = vst [vmem:[%s547 + $0x80] sm:$0xff] %v3798
        %3831 = vst [vmem:[%s547 + $0x88] sm:$0xff] %v3799
        %3832 = vst [vmem:[%s547 + $0x90] sm:$0xff] %v3800
        %3833 = vst [vmem:[%s547 + $0x98] sm:$0xff] %v3801
        %3834 = vst [vmem:[%s547 + $0xa0] sm:$0xff] %v3802
        %3835 = vst [vmem:[%s547 + $0xa8] sm:$0xff] %v3803
        %3836 = vst [vmem:[%s547 + $0xb0] sm:$0xff] %v3804
        %3837 = vst [vmem:[%s547 + $0xb8] sm:$0xff] %v3805
        %3838 = vst [vmem:[%s547 + $0xc0] sm:$0xff] %v3806
        %3839 = vst [vmem:[%s547 + $0xc8] sm:$0xff] %v3807
        %3840 = vst [vmem:[%s547 + $0xd0] sm:$0xff] %v3808
        %3841 = vst [vmem:[%s547 + $0xd8] sm:$0xff] %v3809
        %3842 = vst [vmem:[%s547 + $0xe0] sm:$0xff] %v3810
        %3843 = vst [vmem:[%s547 + $0xe8] sm:$0xff] %v3811
        %3844 = vst [vmem:[%s547 + $0xf0] sm:$0xff] %v3812
        %3845 = vst [vmem:[%s547 + $0xf8] sm:$0xff] %v3813
        %v3846 = vld [vmem:[%s481] sm:$0xff]
        %v3847 = vld [vmem:[%s481 + $0x8] sm:$0xff]
        %v3848 = vld [vmem:[%s481 + $0x10] sm:$0xff]
        %v3849 = vld [vmem:[%s481 + $0x18] sm:$0xff]
        %v3850 = vld [vmem:[%s481 + $0x20] sm:$0xff]
        %v3851 = vld [vmem:[%s481 + $0x28] sm:$0xff]
        %v3852 = vld [vmem:[%s481 + $0x30] sm:$0xff]
        %v3853 = vld [vmem:[%s481 + $0x38] sm:$0xff]
        %v3918 = vrot.slane %v2791, 7
        %vm3919 = vcmask 1041409
        %v3920 = vsel %vm3919, %v3918, %v2790
        %v3921 = vrot.slane %v2792, 6
        %vm3922 = vcmask 1042434
        %v3923 = vsel %vm3922, %v3921, %v3920
        %v3924 = vrot.slane %v2793, 5
        %vm3925 = vcmask 1043459
        %v3926 = vsel %vm3925, %v3924, %v3923
        %v3927 = vrot.slane %v2794, 4
        %vm3928 = vcmask 1044484
        %v3929 = vsel %vm3928, %v3927, %v3926
        %v3930 = vrot.slane %v2795, 3
        %vm3931 = vcmask 1045509
        %v3932 = vsel %vm3931, %v3930, %v3929
        %v3933 = vrot.slane %v2796, 2
        %vm3934 = vcmask 1046534
        %v3935 = vsel %vm3934, %v3933, %v3932
        %v3936 = vrot.slane %v2797, 1
        %vm3937 = vcmask 1047559
        %v3938 = vsel %vm3937, %v3936, %v3935
        %v3939 = vrot.slane %v2799, 7
        %v3940 = vsel %vm3919, %v3939, %v2798
        %v3941 = vrot.slane %v2800, 6
        %v3942 = vsel %vm3922, %v3941, %v3940
        %v3943 = vrot.slane %v2801, 5
        %v3944 = vsel %vm3925, %v3943, %v3942
        %v3945 = vrot.slane %v2802, 4
        %v3946 = vsel %vm3928, %v3945, %v3944
        %v3947 = vrot.slane %v2803, 3
        %v3948 = vsel %vm3931, %v3947, %v3946
        %v3949 = vrot.slane %v2804, 2
        %v3950 = vsel %vm3934, %v3949, %v3948
        %v3951 = vrot.slane %v2805, 1
        %v3952 = vsel %vm3937, %v3951, %v3950
        %v3953 = vrot.slane %v2807, 7
        %v3954 = vsel %vm3919, %v3953, %v2806
        %v3955 = vrot.slane %v2808, 6
        %v3956 = vsel %vm3922, %v3955, %v3954
        %v3957 = vrot.slane %v2809, 5
        %v3958 = vsel %vm3925, %v3957, %v3956
        %v3959 = vrot.slane %v2810, 4
        %v3960 = vsel %vm3928, %v3959, %v3958
        %v3961 = vrot.slane %v2811, 3
        %v3962 = vsel %vm3931, %v3961, %v3960
        %v3963 = vrot.slane %v2812, 2
        %v3964 = vsel %vm3934, %v3963, %v3962
        %v3965 = vrot.slane %v2813, 1
        %v3966 = vsel %vm3937, %v3965, %v3964
        %v3967 = vrot.slane %v2815, 7
        %v3968 = vsel %vm3919, %v3967, %v2814
        %v3969 = vrot.slane %v2816, 6
        %v3970 = vsel %vm3922, %v3969, %v3968
        %v3971 = vrot.slane %v2817, 5
        %v3972 = vsel %vm3925, %v3971, %v3970
        %v3973 = vrot.slane %v2818, 4
        %v3974 = vsel %vm3928, %v3973, %v3972
        %v3975 = vrot.slane %v2819, 3
        %v3976 = vsel %vm3931, %v3975, %v3974
        %v3977 = vrot.slane %v2820, 2
        %v3978 = vsel %vm3934, %v3977, %v3976
        %v3979 = vrot.slane %v2821, 1
        %v3980 = vsel %vm3937, %v3979, %v3978
        %v3981 = vrot.slane %v2823, 7
        %v3982 = vsel %vm3919, %v3981, %v2822
        %v3983 = vrot.slane %v2824, 6
        %v3984 = vsel %vm3922, %v3983, %v3982
        %v3985 = vrot.slane %v2825, 5
        %v3986 = vsel %vm3925, %v3985, %v3984
        %v3987 = vrot.slane %v2826, 4
        %v3988 = vsel %vm3928, %v3987, %v3986
        %v3989 = vrot.slane %v2827, 3
        %v3990 = vsel %vm3931, %v3989, %v3988
        %v3991 = vrot.slane %v2828, 2
        %v3992 = vsel %vm3934, %v3991, %v3990
        %v3993 = vrot.slane %v2829, 1
        %v3994 = vsel %vm3937, %v3993, %v3992
        %v3995 = vrot.slane %v2831, 7
        %v3996 = vsel %vm3919, %v3995, %v2830
        %v3997 = vrot.slane %v2832, 6
        %v3998 = vsel %vm3922, %v3997, %v3996
        %v3999 = vrot.slane %v2833, 5
        %v4000 = vsel %vm3925, %v3999, %v3998
        %v4001 = vrot.slane %v2834, 4
        %v4002 = vsel %vm3928, %v4001, %v4000
        %v4003 = vrot.slane %v2835, 3
        %v4004 = vsel %vm3931, %v4003, %v4002
        %v4005 = vrot.slane %v2836, 2
        %v4006 = vsel %vm3934, %v4005, %v4004
        %v4007 = vrot.slane %v2837, 1
        %v4008 = vsel %vm3937, %v4007, %v4006
        %v4009 = vrot.slane %v2839, 7
        %v4010 = vsel %vm3919, %v4009, %v2838
        %v4011 = vrot.slane %v2840, 6
        %v4012 = vsel %vm3922, %v4011, %v4010
        %v4013 = vrot.slane %v2841, 5
        %v4014 = vsel %vm3925, %v4013, %v4012
        %v4015 = vrot.slane %v2842, 4
        %v4016 = vsel %vm3928, %v4015, %v4014
        %v4017 = vrot.slane %v2843, 3
        %v4018 = vsel %vm3931, %v4017, %v4016
        %v4019 = vrot.slane %v2844, 2
        %v4020 = vsel %vm3934, %v4019, %v4018
        %v4021 = vrot.slane %v2845, 1
        %v4022 = vsel %vm3937, %v4021, %v4020
        %v4023 = vrot.slane %v2847, 7
        %v4024 = vsel %vm3919, %v4023, %v2846
        %v4025 = vrot.slane %v2848, 6
        %v4026 = vsel %vm3922, %v4025, %v4024
        %v4027 = vrot.slane %v2849, 5
        %v4028 = vsel %vm3925, %v4027, %v4026
        %v4029 = vrot.slane %v2850, 4
        %v4030 = vsel %vm3928, %v4029, %v4028
        %v4031 = vrot.slane %v2851, 3
        %v4032 = vsel %vm3931, %v4031, %v4030
        %v4033 = vrot.slane %v2852, 2
        %v4034 = vsel %vm3934, %v4033, %v4032
        %v4035 = vrot.slane %v2853, 1
        %v4036 = vsel %vm3937, %v4035, %v4034
        %v4045 = vadd.f32 %v3846, %v3938
        %v4046 = vadd.f32 %v3847, %v3952
        %v4047 = vadd.f32 %v3848, %v3966
        %v4048 = vadd.f32 %v3849, %v3980
        %v4049 = vadd.f32 %v3850, %v3994
        %v4050 = vadd.f32 %v3851, %v4008
        %v4051 = vadd.f32 %v3852, %v4022
        %v4052 = vadd.f32 %v3853, %v4036
        %4053 = vst [vmem:[%s554] sm:$0xff] %v4045
        %4054 = vst [vmem:[%s554 + $0x8] sm:$0xff] %v4046
        %4055 = vst [vmem:[%s554 + $0x10] sm:$0xff] %v4047
        %4056 = vst [vmem:[%s554 + $0x18] sm:$0xff] %v4048
        %4057 = vst [vmem:[%s554 + $0x20] sm:$0xff] %v4049
        %4058 = vst [vmem:[%s554 + $0x28] sm:$0xff] %v4050
        %4059 = vst [vmem:[%s554 + $0x30] sm:$0xff] %v4051
        %4060 = vst [vmem:[%s554 + $0x38] sm:$0xff] %v4052
        %vm4061 = vcmask 1040384
        %v4062 = vsel %vm4061, %v2790, -inf
        %v4063 = vsel %vm4061, %v2798, -inf
        %v4064 = vmax.f32 %v4062, %v4063
        %v4065 = vsel %vm4061, %v2791, -inf
        %v4066 = vsel %vm4061, %v2799, -inf
        %v4067 = vmax.f32 %v4065, %v4066
        %v4068 = vsel %vm4061, %v2792, -inf
        %v4069 = vsel %vm4061, %v2800, -inf
        %v4070 = vmax.f32 %v4068, %v4069
        %v4071 = vsel %vm4061, %v2793, -inf
        %v4072 = vsel %vm4061, %v2801, -inf
        %v4073 = vmax.f32 %v4071, %v4072
        %v4074 = vsel %vm4061, %v2794, -inf
        %v4075 = vsel %vm4061, %v2802, -inf
        %v4076 = vmax.f32 %v4074, %v4075
        %v4077 = vsel %vm4061, %v2795, -inf
        %v4078 = vsel %vm4061, %v2803, -inf
        %v4079 = vmax.f32 %v4077, %v4078
        %v4080 = vsel %vm4061, %v2796, -inf
        %v4081 = vsel %vm4061, %v2804, -inf
        %v4082 = vmax.f32 %v4080, %v4081
        %v4083 = vsel %vm4061, %v2797, -inf
        %v4084 = vsel %vm4061, %v2805, -inf
        %v4085 = vmax.f32 %v4083, %v4084
        %v4086 = vsel %vm4061, %v2806, -inf
        %v4087 = vsel %vm4061, %v2814, -inf
        %v4088 = vmax.f32 %v4086, %v4087
        %v4089 = vsel %vm4061, %v2807, -inf
        %v4090 = vsel %vm4061, %v2815, -inf
        %v4091 = vmax.f32 %v4089, %v4090
        %v4092 = vsel %vm4061, %v2808, -inf
        %v4093 = vsel %vm4061, %v2816, -inf
        %v4094 = vmax.f32 %v4092, %v4093
        %v4095 = vsel %vm4061, %v2809, -inf
        %v4096 = vsel %vm4061, %v2817, -inf
        %v4097 = vmax.f32 %v4095, %v4096
        %v4098 = vsel %vm4061, %v2810, -inf
        %v4099 = vsel %vm4061, %v2818, -inf
        %v4100 = vmax.f32 %v4098, %v4099
        %v4101 = vsel %vm4061, %v2811, -inf
        %v4102 = vsel %vm4061, %v2819, -inf
        %v4103 = vmax.f32 %v4101, %v4102
        %v4104 = vsel %vm4061, %v2812, -inf
        %v4105 = vsel %vm4061, %v2820, -inf
        %v4106 = vmax.f32 %v4104, %v4105
        %v4107 = vsel %vm4061, %v2813, -inf
        %v4108 = vsel %vm4061, %v2821, -inf
        %v4109 = vmax.f32 %v4107, %v4108
        %v4110 = vsel %vm4061, %v2822, -inf
        %v4111 = vsel %vm4061, %v2830, -inf
        %v4112 = vmax.f32 %v4110, %v4111
        %v4113 = vsel %vm4061, %v2823, -inf
        %v4114 = vsel %vm4061, %v2831, -inf
        %v4115 = vmax.f32 %v4113, %v4114
        %v4116 = vsel %vm4061, %v2824, -inf
        %v4117 = vsel %vm4061, %v2832, -inf
        %v4118 = vmax.f32 %v4116, %v4117
        %v4119 = vsel %vm4061, %v2825, -inf
        %v4120 = vsel %vm4061, %v2833, -inf
        %v4121 = vmax.f32 %v4119, %v4120
        %v4122 = vsel %vm4061, %v2826, -inf
        %v4123 = vsel %vm4061, %v2834, -inf
        %v4124 = vmax.f32 %v4122, %v4123
        %v4125 = vsel %vm4061, %v2827, -inf
        %v4126 = vsel %vm4061, %v2835, -inf
        %v4127 = vmax.f32 %v4125, %v4126
        %v4128 = vsel %vm4061, %v2828, -inf
        %v4129 = vsel %vm4061, %v2836, -inf
        %v4130 = vmax.f32 %v4128, %v4129
        %v4131 = vsel %vm4061, %v2829, -inf
        %v4132 = vsel %vm4061, %v2837, -inf
        %v4133 = vmax.f32 %v4131, %v4132
        %v4134 = vsel %vm4061, %v2838, -inf
        %v4135 = vsel %vm4061, %v2846, -inf
        %v4136 = vmax.f32 %v4134, %v4135
        %v4137 = vsel %vm4061, %v2839, -inf
        %v4138 = vsel %vm4061, %v2847, -inf
        %v4139 = vmax.f32 %v4137, %v4138
        %v4140 = vsel %vm4061, %v2840, -inf
        %v4141 = vsel %vm4061, %v2848, -inf
        %v4142 = vmax.f32 %v4140, %v4141
        %v4143 = vsel %vm4061, %v2841, -inf
        %v4144 = vsel %vm4061, %v2849, -inf
        %v4145 = vmax.f32 %v4143, %v4144
        %v4146 = vsel %vm4061, %v2842, -inf
        %v4147 = vsel %vm4061, %v2850, -inf
        %v4148 = vmax.f32 %v4146, %v4147
        %v4149 = vsel %vm4061, %v2843, -inf
        %v4150 = vsel %vm4061, %v2851, -inf
        %v4151 = vmax.f32 %v4149, %v4150
        %v4152 = vsel %vm4061, %v2844, -inf
        %v4153 = vsel %vm4061, %v2852, -inf
        %v4154 = vmax.f32 %v4152, %v4153
        %v4155 = vsel %vm4061, %v2845, -inf
        %v4156 = vsel %vm4061, %v2853, -inf
        %v4157 = vmax.f32 %v4155, %v4156
        %v4158 = vsel %vm4061, %v4064, -inf
        %v4159 = vsel %vm4061, %v4067, -inf
        %v4160 = vmax.f32 %v4158, %v4159
        %v4161 = vsel %vm4061, %v4070, -inf
        %v4162 = vsel %vm4061, %v4073, -inf
        %v4163 = vmax.f32 %v4161, %v4162
        %v4164 = vsel %vm4061, %v4076, -inf
        %v4165 = vsel %vm4061, %v4079, -inf
        %v4166 = vmax.f32 %v4164, %v4165
        %v4167 = vsel %vm4061, %v4082, -inf
        %v4168 = vsel %vm4061, %v4085, -inf
        %v4169 = vmax.f32 %v4167, %v4168
        %v4170 = vsel %vm4061, %v4088, -inf
        %v4171 = vsel %vm4061, %v4091, -inf
        %v4172 = vmax.f32 %v4170, %v4171
        %v4173 = vsel %vm4061, %v4094, -inf
        %v4174 = vsel %vm4061, %v4097, -inf
        %v4175 = vmax.f32 %v4173, %v4174
        %v4176 = vsel %vm4061, %v4100, -inf
        %v4177 = vsel %vm4061, %v4103, -inf
        %v4178 = vmax.f32 %v4176, %v4177
        %v4179 = vsel %vm4061, %v4106, -inf
        %v4180 = vsel %vm4061, %v4109, -inf
        %v4181 = vmax.f32 %v4179, %v4180
        %v4182 = vsel %vm4061, %v4112, -inf
        %v4183 = vsel %vm4061, %v4115, -inf
        %v4184 = vmax.f32 %v4182, %v4183
        %v4185 = vsel %vm4061, %v4118, -inf
        %v4186 = vsel %vm4061, %v4121, -inf
        %v4187 = vmax.f32 %v4185, %v4186
        %v4188 = vsel %vm4061, %v4124, -inf
        %v4189 = vsel %vm4061, %v4127, -inf
        %v4190 = vmax.f32 %v4188, %v4189
        %v4191 = vsel %vm4061, %v4130, -inf
        %v4192 = vsel %vm4061, %v4133, -inf
        %v4193 = vmax.f32 %v4191, %v4192
        %v4194 = vsel %vm4061, %v4136, -inf
        %v4195 = vsel %vm4061, %v4139, -inf
        %v4196 = vmax.f32 %v4194, %v4195
        %v4197 = vsel %vm4061, %v4142, -inf
        %v4198 = vsel %vm4061, %v4145, -inf
        %v4199 = vmax.f32 %v4197, %v4198
        %v4200 = vsel %vm4061, %v4148, -inf
        %v4201 = vsel %vm4061, %v4151, -inf
        %v4202 = vmax.f32 %v4200, %v4201
        %v4203 = vsel %vm4061, %v4154, -inf
        %v4204 = vsel %vm4061, %v4157, -inf
        %v4205 = vmax.f32 %v4203, %v4204
        %v4206 = vld [vmem:[%s490] sm:$0xf]
        %v4207 = vld [vmem:[%s490 + $0x4] sm:$0xf]
        %v4208 = vld [vmem:[%s490 + $0x8] sm:$0xf]
        %v4209 = vld [vmem:[%s490 + $0xc] sm:$0xf]
        %v4226 = vrot.slane %v4163, 7
        %v4227 = vsel %vm3919, %v4226, %v4160
        %v4228 = vrot.slane %v4166, 6
        %v4229 = vsel %vm3922, %v4228, %v4227
        %v4230 = vrot.slane %v4169, 5
        %v4231 = vsel %vm3925, %v4230, %v4229
        %v4232 = vrot.slane %v4175, 7
        %v4233 = vsel %vm3919, %v4232, %v4172
        %v4234 = vrot.slane %v4178, 6
        %v4235 = vsel %vm3922, %v4234, %v4233
        %v4236 = vrot.slane %v4181, 5
        %v4237 = vsel %vm3925, %v4236, %v4235
        %v4238 = vrot.slane %v4187, 7
        %v4239 = vsel %vm3919, %v4238, %v4184
        %v4240 = vrot.slane %v4190, 6
        %v4241 = vsel %vm3922, %v4240, %v4239
        %v4242 = vrot.slane %v4193, 5
        %v4243 = vsel %vm3925, %v4242, %v4241
        %v4244 = vrot.slane %v4199, 7
        %v4245 = vsel %vm3919, %v4244, %v4196
        %v4246 = vrot.slane %v4202, 6
        %v4247 = vsel %vm3922, %v4246, %v4245
        %v4248 = vrot.slane %v4205, 5
        %v4249 = vsel %vm3925, %v4248, %v4247
        %v4254 = vadd.f32 %v4206, %v4231
        %v4255 = vadd.f32 %v4207, %v4237
        %v4256 = vadd.f32 %v4208, %v4243
        %v4257 = vadd.f32 %v4209, %v4249
        %4258 = vst [vmem:[%s561] sm:$0xf] %v4254
        %4259 = vst [vmem:[%s561 + $0x4] sm:$0xf] %v4255
        %4260 = vst [vmem:[%s561 + $0x8] sm:$0xf] %v4256
        %4261 = vst [vmem:[%s561 + $0xc] sm:$0xf] %v4257
        %v4262 = vmax.f32 %v4064, %v4086
        %v4263 = vmax.f32 %v4262, %v4087
        %v4264 = vmax.f32 %v4067, %v4089
        %v4265 = vmax.f32 %v4264, %v4090
        %v4266 = vmax.f32 %v4070, %v4092
        %v4267 = vmax.f32 %v4266, %v4093
        %v4268 = vmax.f32 %v4073, %v4095
        %v4269 = vmax.f32 %v4268, %v4096
        %v4270 = vmax.f32 %v4076, %v4098
        %v4271 = vmax.f32 %v4270, %v4099
        %v4272 = vmax.f32 %v4079, %v4101
        %v4273 = vmax.f32 %v4272, %v4102
        %v4274 = vmax.f32 %v4082, %v4104
        %v4275 = vmax.f32 %v4274, %v4105
        %v4276 = vmax.f32 %v4085, %v4107
        %v4277 = vmax.f32 %v4276, %v4108
        %v4278 = vmax.f32 %v4112, %v4134
        %v4279 = vmax.f32 %v4278, %v4135
        %v4280 = vmax.f32 %v4115, %v4137
        %v4281 = vmax.f32 %v4280, %v4138
        %v4282 = vmax.f32 %v4118, %v4140
        %v4283 = vmax.f32 %v4282, %v4141
        %v4284 = vmax.f32 %v4121, %v4143
        %v4285 = vmax.f32 %v4284, %v4144
        %v4286 = vmax.f32 %v4124, %v4146
        %v4287 = vmax.f32 %v4286, %v4147
        %v4288 = vmax.f32 %v4127, %v4149
        %v4289 = vmax.f32 %v4288, %v4150
        %v4290 = vmax.f32 %v4130, %v4152
        %v4291 = vmax.f32 %v4290, %v4153
        %v4292 = vmax.f32 %v4133, %v4155
        %v4293 = vmax.f32 %v4292, %v4156
        %v4294 = vsel %vm4061, %v4263, -inf
        %v4295 = vsel %vm4061, %v4265, -inf
        %v4296 = vmax.f32 %v4294, %v4295
        %v4297 = vsel %vm4061, %v4267, -inf
        %v4298 = vmax.f32 %v4296, %v4297
        %v4299 = vsel %vm4061, %v4269, -inf
        %v4300 = vmax.f32 %v4298, %v4299
        %v4301 = vsel %vm4061, %v4271, -inf
        %v4302 = vsel %vm4061, %v4273, -inf
        %v4303 = vmax.f32 %v4301, %v4302
        %v4304 = vsel %vm4061, %v4275, -inf
        %v4305 = vmax.f32 %v4303, %v4304
        %v4306 = vsel %vm4061, %v4277, -inf
        %v4307 = vmax.f32 %v4305, %v4306
        %v4308 = vsel %vm4061, %v4279, -inf
        %v4309 = vsel %vm4061, %v4281, -inf
        %v4310 = vmax.f32 %v4308, %v4309
        %v4311 = vsel %vm4061, %v4283, -inf
        %v4312 = vmax.f32 %v4310, %v4311
        %v4313 = vsel %vm4061, %v4285, -inf
        %v4314 = vmax.f32 %v4312, %v4313
        %v4315 = vsel %vm4061, %v4287, -inf
        %v4316 = vsel %vm4061, %v4289, -inf
        %v4317 = vmax.f32 %v4315, %v4316
        %v4318 = vsel %vm4061, %v4291, -inf
        %v4319 = vmax.f32 %v4317, %v4318
        %v4320 = vsel %vm4061, %v4293, -inf
        %v4321 = vmax.f32 %v4319, %v4320
        %v4322 = vld [vmem:[%s581] sm:$0x3]
        %v4323 = vld [vmem:[%s581 + $0x2] sm:$0x3]
        %v4328 = vrot.slane %v4307, 7
        %v4329 = vsel %vm3919, %v4328, %v4300
        %v4330 = vrot.slane %v4321, 7
        %v4331 = vsel %vm3919, %v4330, %v4314
        %v4334 = vadd.f32 %v4322, %v4329
        %v4335 = vadd.f32 %v4323, %v4331
        %4336 = vst [vmem:[%s568] sm:$0x3] %v4334
        %4337 = vst [vmem:[%s568 + $0x2] sm:$0x3] %v4335
        %s4338 = sand.u32 %s201, 1
        %s4339 = scalar_lea.sflag [#allocation4], %s4338
        %s4340 = sand.u32 %s201, 1
        %s4341 = smul.addr %s4340, 1024
        %s4342 = scalar_lea.vmem [#allocation10], %s4341
        %s4343 = sand.u32 %s39, 1
        %s4344 = scalar_lea.sflag [#allocation12], %s4343
        %s4345 = sand.u32 %s229, 1
        %s4346 = smul.addr %s4345, 256
        %s4347 = scalar_lea.vmem [#allocation11], %s4346
        %s4348 = sand.u32 %s39, 1
        %s4349 = scalar_lea.sflag [#allocation12], %s4348
        %s4350 = sand.u32 %s257, 1
        %s4351 = smul.addr %s4350, 64
        %s4352 = scalar_lea.vmem [#allocation13], %s4351
        %s4353 = sand.u32 %s39, 1
        %s4354 = scalar_lea.sflag [#allocation15], %s4353
        %s4355 = sand.u32 %s285, 1
        %s4356 = smul.addr %s4355, 16
        %s4357 = scalar_lea.vmem [#allocation14], %s4356
        %s4358 = sand.u32 %s39, 1
        %s4359 = scalar_lea.sflag [#allocation15], %s4358
        %s4360 = sand.u32 %s313, 1
        %s4361 = smul.addr %s4360, 4
        %s4362 = scalar_lea.vmem [#allocation16], %s4361
        // Predicated region
        $region57: #{tpu_custom_call.1} parent=39 // pred_check
          %p4363 = pneg %p211
        $region58: #{tpu_custom_call.1} parent=39 // pred_check_branch
          %4365 = sbr.rel (%p4363) target = $region60
        $region59: #{tpu_custom_call.1} parent=39 // pred_region
          %s4366 = smul.u32 32, %s44
          %s4368 = ssub.s32 16384, 16384
          %4369 = vsyncadd %s4339, %s4368
          %s4370 = smul.addr %s4366, 4
          %s4371 = smul.addr %s43, 128
          %s4372 = sadd.s32 %s4370, %s4371
          %s4373 = smul.addr %s4372, 128
          %s4374 = scalar_lea.hbm %s5, %s4373
          %s4375 = sshll.u32 %s4342, 4
          %s4376 = int_to_ptr.vmem [resolvable:$true] %s4375
          %4381 = dma.vmem_to_hbm [thread:$0]  %s4376, 16384, %s4374, %s4339, 128, 128, 8
        $region60: #{tpu_custom_call.1} parent=39 // pred_fallthru
          _
        // Predicated region
        $region61: #{tpu_custom_call.1} parent=39 // pred_check
          %p4382 = pneg %p239
        $region62: #{tpu_custom_call.1} parent=39 // pred_check_branch
          %4384 = sbr.rel (%p4382) target = $region64
        $region63: #{tpu_custom_call.1} parent=39 // pred_region
          %s4385 = smul.u32 16, %s44
          %s4387 = ssub.s32 4096, 4096
          %4388 = vsyncadd %s4344, %s4387
          %s4389 = smul.addr %s4385, 2
          %s4390 = smul.addr %s43, 32
          %s4391 = sadd.s32 %s4389, %s4390
          %s4392 = smul.addr %s4391, 128
          %s4393 = scalar_lea.hbm %s6, %s4392
          %s4394 = sshll.u32 %s4347, 4
          %s4395 = int_to_ptr.vmem [resolvable:$true] %s4394
          %4400 = dma.vmem_to_hbm [thread:$0]  %s4395, 4096, %s4393, %s4344, 128, 128, 8
        $region64: #{tpu_custom_call.1} parent=39 // pred_fallthru
          _
        // Predicated region
        $region65: #{tpu_custom_call.1} parent=39 // pred_check
          %p4401 = pneg %p267
        $region66: #{tpu_custom_call.1} parent=39 // pred_check_branch
          %4403 = sbr.rel (%p4401) target = $region68
        $region67: #{tpu_custom_call.1} parent=39 // pred_region
          %s4404 = smul.u32 8, %s44
          %s4406 = ssub.s32 1024, 1024
          %4407 = vsyncadd %s4349, %s4406
          %s4408 = smul.addr %s43, 8
          %s4409 = sadd.s32 %s4404, %s4408
          %s4410 = smul.addr %s4409, 128
          %s4411 = scalar_lea.hbm %s7, %s4410
          %s4412 = sshll.u32 %s4352, 4
          %s4413 = int_to_ptr.vmem [resolvable:$true] %s4412
          %4418 = dma.vmem_to_hbm [thread:$0]  %s4413, 1024, %s4411, %s4349, 128, 128, 8
        $region68: #{tpu_custom_call.1} parent=39 // pred_fallthru
          _
        // Predicated region
        $region69: #{tpu_custom_call.1} parent=39 // pred_check
          %p4419 = pneg %p295
        $region70: #{tpu_custom_call.1} parent=39 // pred_check_branch
          %4421 = sbr.rel (%p4419) target = $region72
        $region71: #{tpu_custom_call.1} parent=39 // pred_region
          %s4422 = smul.u32 4, %s44
          %s4424 = ssub.s32 256, 256
          %4425 = vsyncadd %s4354, %s4424
          %s4426 = smul.addr %s43, 4
          %s4427 = sadd.s32 %s4422, %s4426
          %s4428 = smul.addr %s4427, 64
          %s4429 = scalar_lea.hbm %s8, %s4428
          %s4430 = sshll.u32 %s4357, 4
          %s4431 = int_to_ptr.vmem [resolvable:$true] %s4430
          %4436 = dma.vmem_to_hbm [thread:$0]  %s4431, 256, %s4429, %s4354, 64, 64, 4
        $region72: #{tpu_custom_call.1} parent=39 // pred_fallthru
          _
        // Predicated region
        $region73: #{tpu_custom_call.1} parent=39 // pred_check
          %p4437 = pneg %p323
        $region74: #{tpu_custom_call.1} parent=39 // pred_check_branch
          %4439 = sbr.rel (%p4437) target = $region76
        $region75: #{tpu_custom_call.1} parent=39 // pred_region
          %s4440 = smul.u32 2, %s44
          %s4442 = ssub.s32 64, 64
          %4443 = vsyncadd %s4359, %s4442
          %s4444 = smul.addr %s43, 2
          %s4445 = sadd.s32 %s4440, %s4444
          %s4446 = smul.addr %s4445, 32
          %s4447 = scalar_lea.hbm %s9, %s4446
          %s4448 = sshll.u32 %s4362, 4
          %s4449 = int_to_ptr.vmem [resolvable:$true] %s4448
          %4454 = dma.vmem_to_hbm [thread:$0]  %s4449, 64, %s4447, %s4359, 32, 32, 2
        $region76: #{tpu_custom_call.1} parent=39 // pred_fallthru
          _
      $region40: #{tpu_custom_call.1} parent=5 // pred_fallthru
        _
      %p4455 = scmp.le.s32.totalorder 2, %s34
      // Predicated region
      $region77: #{tpu_custom_call.1} parent=5 // pred_check
        %p4456 = pneg %p4455
      $region78: #{tpu_custom_call.1} parent=5 // pred_check_branch
        %4458 = sbr.rel (%p4456) target = $region80
      $region79: #{tpu_custom_call.1} parent=5 // pred_region
        %s4459 = ssub.s32 %s34, 2
        // Predicated region
        $region81: #{tpu_custom_call.1} parent=79 // pred_check
          %p4460 = pneg %p217
        $region82: #{tpu_custom_call.1} parent=79 // pred_check_branch
          %4462 = sbr.rel (%p4460) target = $region84
        $region83: #{tpu_custom_call.1} parent=79 // pred_region
          %s4463 = sand.u32 %s202, 1
          %s4464 = scalar_lea.sflag [#allocation4], %s4463
          %s4465 = sand.u32 %s202, 1
          %s4466 = smul.addr %s4465, 1024
          %s4467 = scalar_lea.vmem [#allocation10], %s4466
          %4468 = dma.done %s4464, 16384
        $region84: #{tpu_custom_call.1} parent=79 // pred_fallthru
          _
        // Predicated region
        $region85: #{tpu_custom_call.1} parent=79 // pred_check
          %p4469 = pneg %p245
        $region86: #{tpu_custom_call.1} parent=79 // pred_check_branch
          %4471 = sbr.rel (%p4469) target = $region88
        $region87: #{tpu_custom_call.1} parent=79 // pred_region
          %s4472 = sand.u32 %s40, 1
          %s4473 = scalar_lea.sflag [#allocation12], %s4472
          %s4474 = sand.u32 %s230, 1
          %s4475 = smul.addr %s4474, 256
          %s4476 = scalar_lea.vmem [#allocation11], %s4475
          %4477 = dma.done %s4473, 4096
        $region88: #{tpu_custom_call.1} parent=79 // pred_fallthru
          _
        // Predicated region
        $region89: #{tpu_custom_call.1} parent=79 // pred_check
          %p4478 = pneg %p273
        $region90: #{tpu_custom_call.1} parent=79 // pred_check_branch
          %4480 = sbr.rel (%p4478) target = $region92
        $region91: #{tpu_custom_call.1} parent=79 // pred_region
          %s4481 = sand.u32 %s40, 1
          %s4482 = scalar_lea.sflag [#allocation12], %s4481
          %s4483 = sand.u32 %s258, 1
          %s4484 = smul.addr %s4483, 64
          %s4485 = scalar_lea.vmem [#allocation13], %s4484
          %4486 = dma.done %s4482, 1024
        $region92: #{tpu_custom_call.1} parent=79 // pred_fallthru
          _
        // Predicated region
        $region93: #{tpu_custom_call.1} parent=79 // pred_check
          %p4487 = pneg %p301
        $region94: #{tpu_custom_call.1} parent=79 // pred_check_branch
          %4489 = sbr.rel (%p4487) target = $region96
        $region95: #{tpu_custom_call.1} parent=79 // pred_region
          %s4490 = sand.u32 %s40, 1
          %s4491 = scalar_lea.sflag [#allocation15], %s4490
          %s4492 = sand.u32 %s286, 1
          %s4493 = smul.addr %s4492, 16
          %s4494 = scalar_lea.vmem [#allocation14], %s4493
          %4495 = dma.done %s4491, 256
        $region96: #{tpu_custom_call.1} parent=79 // pred_fallthru
          _
        // Predicated region
        $region97: #{tpu_custom_call.1} parent=79 // pred_check
          %p4496 = pneg %p329
        $region98: #{tpu_custom_call.1} parent=79 // pred_check_branch
          %4498 = sbr.rel (%p4496) target = $region100
        $region99: #{tpu_custom_call.1} parent=79 // pred_region
          %s4499 = sand.u32 %s40, 1
          %s4500 = scalar_lea.sflag [#allocation15], %s4499
          %s4501 = sand.u32 %s314, 1
          %s4502 = smul.addr %s4501, 4
          %s4503 = scalar_lea.vmem [#allocation16], %s4502
          %4504 = dma.done %s4500, 64
        $region100: #{tpu_custom_call.1} parent=79 // pred_fallthru
          _
      $region80: #{tpu_custom_call.1} parent=5 // pred_fallthru
        _
    $region6: #{tpu_custom_call.1} parent=1 // loop_footer
      %s38 = sadd.s32 1, %s34
    $region7: #{tpu_custom_call.1} parent=1 // loop_footer_branch
      %33 = sbr.rel target = $region3
    $region8: #{tpu_custom_call.1} parent=1 // loop_exit
      _
    %4505 = vsyncpa [#allocation3], 1
    %s4506 = scalar_lea.sflag [#allocation3], 1
    %4507 = vsyncpa %s4506, 1
    %4508 = vsyncpa [#allocation6], 1
    %s4509 = scalar_lea.sflag [#allocation6], 1
    %4510 = vsyncpa %s4509, 1
    %4511 = vsyncpa [#allocation9], 1
    %s4512 = scalar_lea.sflag [#allocation9], 1
    %4513 = vsyncpa %s4512, 1
    %4514 = vsyncpa [#allocation4], 1
    %s4515 = scalar_lea.sflag [#allocation4], 1
    %4516 = vsyncpa %s4515, 1
    %4517 = vsyncpa [#allocation12], 1
    %s4518 = scalar_lea.sflag [#allocation12], 1
    %4519 = vsyncpa %s4518, 1
    %4520 = vsyncpa [#allocation15], 1
    %s4521 = scalar_lea.sflag [#allocation15], 1
    %4522 = vsyncpa %s4521, 1

</llo_original>
